<compile_context>
chip_gen: v5e
topology: v5e:2x2
jax: 0.10.0
libtpu: 0.0.40
codegen_flags: <defaults>
</compile_context>

<pallas_src>
import functools

import jax
import jax.numpy as jnp
from jax.experimental import pallas as pl
from jax.experimental.pallas import tpu as pltpu

EPS = 1e-5
# bf16 operands feed the MXU at native rate on v5e/v6e/v7x; accumulation is f32.
MATMUL_DTYPE = jnp.bfloat16


def _round_up(n, m):
    return ((n + m - 1) // m) * m


def _vmem_limit_bytes():
    # ~3/4 of physical VMEM, capped at 96 MiB (v5e/v6e: 128 MiB -> 96 MiB,
    # v7x: 64 MiB -> 48 MiB).  Fallback covers interpret / unknown backends.
    try:
        phys = pltpu.get_tpu_info().vmem_capacity_bytes
        return int(min(96 * 1024 * 1024, (phys * 3) // 4))
    except Exception:
        return 48 * 1024 * 1024


_VMEM_LIMIT = _vmem_limit_bytes()


# ---------------------------------------------------------------------------
# Pass 1: h2 = relu(bn1(x)) @ w1  (1x1 conv), plus per-channel bn2 statistics.
# ---------------------------------------------------------------------------
def _stage2_kernel(x_ref, s1_ref, b1_ref, w1_ref, h2_ref, sum_ref, sq_ref,
                   *, rows_total, tile_rows, needs_mask):
    i = pl.program_id(0)

    @pl.when(i == 0)
    def _():
        sum_ref[...] = jnp.zeros_like(sum_ref)
        sq_ref[...] = jnp.zeros_like(sq_ref)

    # Folded bn1 + ReLU in f32, bf16 operands for the 1x1-conv matmul.
    x = x_ref[...].astype(jnp.float32)                         # (TR, C)
    h1 = jnp.maximum(x * s1_ref[...] + b1_ref[...], 0.0)
    h2 = jnp.dot(h1.astype(MATMUL_DTYPE), w1_ref[...],
                 preferred_element_type=jnp.float32)           # (TR, I) f32
    h2_ref[...] = h2.astype(h2_ref.dtype)

    # bn2 statistics (f32 sum / sumsq); zero-padded tail rows are masked out.
    # TODO(synk): switch to a shifted/centered accumulation if E[x^2]-E[x]^2
    # cancellation ever matters at very large N*H*W.
    if needs_mask:
        row = (jax.lax.broadcasted_iota(jnp.int32, (tile_rows, 1), 0)
               + i * tile_rows)
        h2 = jnp.where(row < rows_total, h2, 0.0)
    sum_ref[...] += jnp.sum(h2, axis=0, keepdims=True)
    sq_ref[...] += jnp.sum(h2 * h2, axis=0, keepdims=True)


# ---------------------------------------------------------------------------
# Pass 2: y = conv2_3x3_pad1( relu( bn2(h2) ) ) as 9 accumulated matmuls.
# ---------------------------------------------------------------------------
def _conv3x3_kernel(h2_ref, s2_ref, b2_ref, w2_ref, out_ref, *, H, W):
    HW = H * W
    P = h2_ref.shape[-1]
    G = out_ref.shape[-1]

    # Folded bn2 + ReLU in f32, cast to bf16 for the MXU taps.
    a = jnp.maximum(h2_ref[0].astype(jnp.float32) * s2_ref[...] + b2_ref[...],
                    0.0)
    a = a.astype(MATMUL_DTYPE)                                 # (HW, P)

    col = jax.lax.broadcasted_iota(jnp.int32, (HW, 1), 0) % W  # x coordinate

    # Each tap (dy, dx) is a zero-filled row shift of the flattened plane;
    # row overflow (dy) is covered by the zero fill, column wrap (dx) by masks.
    acc = jnp.zeros((HW, G), jnp.float32)
    k = 0
    for dy in (-1, 0, 1):
        for dx in (-1, 0, 1):
            s = dy * W + dx
            if s == 0:
                tap = a
            elif s > 0:
                tap = jnp.concatenate(
                    [a[s:], jnp.zeros((s, P), a.dtype)], axis=0)
            else:
                tap = jnp.concatenate(
                    [jnp.zeros((-s, P), a.dtype), a[:HW + s]], axis=0)
            if dx == 1:                                        # right edge wrap
                tap = jnp.where(col < W - 1, tap, jnp.zeros_like(tap))
            elif dx == -1:                                     # left edge wrap
                tap = jnp.where(col >= 1, tap, jnp.zeros_like(tap))
            acc = acc + jnp.dot(tap, w2_ref[k],
                                preferred_element_type=jnp.float32)
            k += 1
    out_ref[...] = acc[None].astype(out_ref.dtype)


# ---------------------------------------------------------------------------
# Wrapper
# ---------------------------------------------------------------------------
def _fold_bn(sum_, sq_, count, gamma, beta):
    mean = sum_ / count
    var = jnp.maximum(sq_ / count - mean * mean, 0.0)          # biased variance
    scale = gamma * jax.lax.rsqrt(var + EPS)
    return scale, beta - mean * scale


@functools.partial(jax.jit, static_argnames=("tile_rows",))
def densenet_bottleneck_forward(x_nchw, params, *, tile_rows=512):
    """x_nchw: (N, C, H, W) f32.  Returns (N, C + growthRate, H, W) f32."""
    N, C, H, W = x_nchw.shape
    w1, w2 = params["w1"], params["w2"]            # (I, C, 1, 1), (G, I, 3, 3)
    I = w1.shape[0]
    G = w2.shape[0]
    NHW = N * H * W

    # Row tiling for the streaming pass (multiple of 8, default 512).
    tile_rows = _round_up(max(8, min(int(tile_rows), 1024)), 8)
    tile_rows = min(tile_rows, _round_up(NHW, 8))
    R = _round_up(NHW, tile_rows)
    num_tiles = R // tile_rows

    x_f32 = x_nchw.astype(jnp.float32)

    # bn1 statistics on the wrapper side (XLA fuses these reductions with the
    # NCHW->NHWC relayout); centered variance avoids cancellation.
    mean1 = jnp.mean(x_f32, axis=(0, 2, 3)).reshape(1, C)
    var1 = jnp.var(x_f32, axis=(0, 2, 3)).reshape(1, C)        # biased
    s1 = (params["g1"].reshape(1, C).astype(jnp.float32)
          * jax.lax.rsqrt(var1 + EPS))
    b1 = params["b1"].reshape(1, C).astype(jnp.float32) - mean1 * s1

    # NCHW -> (rows, C) once at the boundary; channels ride the lane axis at
    # their true width (no 128-lane HBM padding) and in bf16.
    x_nhwc = jnp.transpose(x_f32, (0, 2, 3, 1))                # (N, H, W, C)
    x_flat = jnp.pad(x_nhwc.reshape(NHW, C).astype(MATMUL_DTYPE),
                     ((0, R - NHW), (0, 0)))

    w1m = jnp.transpose(w1[:, :, 0, 0], (1, 0)).astype(MATMUL_DTYPE)   # (C, I)
    w2m = jnp.transpose(w2, (2, 3, 1, 0)).reshape(9, I, G).astype(MATMUL_DTYPE)

    cp_arb = pltpu.CompilerParams(dimension_semantics=("arbitrary",),
                                  vmem_limit_bytes=_VMEM_LIMIT)
    cp_par = pltpu.CompilerParams(dimension_semantics=("parallel",),
                                  vmem_limit_bytes=_VMEM_LIMIT)

    # ---- pass 1: relu(bn1(x)) @ w1  + bn2 statistics -----------------------
    # TODO(synk): on v7x, add a leading size-2 "parallel" grid axis with
    # per-core partial sums so both TensorCores share this HBM-bound pass.
    h2, sum2, sq2 = pl.pallas_call(
        functools.partial(_stage2_kernel, rows_total=NHW, tile_rows=tile_rows,
                          needs_mask=(R != NHW)),
        out_shape=(jax.ShapeDtypeStruct((R, I), MATMUL_DTYPE),
                   jax.ShapeDtypeStruct((1, I), jnp.float32),
                   jax.ShapeDtypeStruct((1, I), jnp.float32)),
        grid=(num_tiles,),
        in_specs=[pl.BlockSpec((tile_rows, C), lambda i: (i, 0)),
                  pl.BlockSpec((1, C), lambda i: (0, 0)),
                  pl.BlockSpec((1, C), lambda i: (0, 0)),
                  pl.BlockSpec((C, I), lambda i: (0, 0))],
        out_specs=(pl.BlockSpec((tile_rows, I), lambda i: (i, 0)),
                   pl.BlockSpec((1, I), lambda i: (0, 0)),
                   pl.BlockSpec((1, I), lambda i: (0, 0))),
        compiler_params=cp_arb,
    )(x_flat, s1, b1, w1m)

    g2 = params["g2"].reshape(1, I).astype(jnp.float32)
    be2 = params["b2"].reshape(1, I).astype(jnp.float32)
    s2, b2 = _fold_bn(sum2, sq2, NHW, g2, be2)

    # ---- pass 2: conv2_3x3( relu(bn2(h2)) ) ---------------------------------
    # Pre-flattened (N, H*W, I) input / (N, H*W, G) output keeps the kernel
    # free of sublane reshapes.
    # TODO(synk): tile H with a 1-row halo for very large spatial planes (v7x).
    h2_3d = h2[:NHW].reshape(N, H * W, I)
    y = pl.pallas_call(
        functools.partial(_conv3x3_kernel, H=H, W=W),
        out_shape=jax.ShapeDtypeStruct((N, H * W, G), jnp.float32),
        grid=(N,),
        in_specs=[pl.BlockSpec((1, H * W, I), lambda n: (n, 0, 0)),
                  pl.BlockSpec((1, I), lambda n: (0, 0)),
                  pl.BlockSpec((1, I), lambda n: (0, 0)),
                  pl.BlockSpec((9, I, G), lambda n: (0, 0, 0))],
        out_specs=pl.BlockSpec((1, H * W, G), lambda n: (n, 0, 0)),
        compiler_params=cp_par,
    )(h2_3d, s2, b2, w2m)

    # ---- DenseNet concatenation + back to NCHW ------------------------------
    out = jnp.concatenate([x_nhwc, y.reshape(N, H, W, G)], axis=-1)
    return jnp.transpose(out, (0, 3, 1, 2))


# ----------------------------- pure-JAX reference ---------------------------
def reference_forward(x, params):
    def conv(x, w, pad=0):
        return jax.lax.conv_general_dilated(
            x, w, (1, 1), [(pad, pad), (pad, pad)],
            dimension_numbers=("NCHW", "OIHW", "NCHW"))

    def bn(x, g, b):
        mean = x.mean(axis=(0, 2, 3), keepdims=True)
        var = ((x - mean) ** 2).mean(axis=(0, 2, 3), keepdims=True)
        return ((x - mean) * jax.lax.rsqrt(var + EPS)
                * g.reshape(1, -1, 1, 1) + b.reshape(1, -1, 1, 1))

    out = conv(jax.nn.relu(bn(x, params["g1"], params["b1"])), params["w1"])
    out = conv(jax.nn.relu(bn(out, params["g2"], params["b2"])), params["w2"],
               pad=1)
    return jnp.concatenate([x, out], axis=1)


if __name__ == "__main__":
    nChannels, growthRate = 8, 4
    interChannels = 4 * growthRate
    N, H, W = 2, 16, 16

    key = jax.random.PRNGKey(0)
    ks = jax.random.split(key, 7)
    params = dict(
        g1=1.0 + 0.1 * jax.random.normal(ks[0], (nChannels,), jnp.float32),
        b1=0.1 * jax.random.normal(ks[1], (nChannels,), jnp.float32),
        w1=0.3 * jax.random.normal(ks[2], (interChannels, nChannels, 1, 1),
                                   jnp.float32),
        g2=1.0 + 0.1 * jax.random.normal(ks[3], (interChannels,), jnp.float32),
        b2=0.1 * jax.random.normal(ks[4], (interChannels,), jnp.float32),
        w2=0.3 * jax.random.normal(ks[5], (growthRate, interChannels, 3, 3),
                                   jnp.float32),
    )
    x = jax.random.normal(ks[6], (N, nChannels, H, W), jnp.float32)

    out = jax.block_until_ready(densenet_bottleneck_forward(x, params))
    ref = reference_forward(x, params)

    assert out.shape == ref.shape == (N, nChannels + growthRate, H, W), out.shape
    # Passthrough (concatenated x) channels must be bit-exact.
    assert jnp.allclose(out[:, :nChannels], x), "passthrough channels differ"
    # Conv channels use bf16 MXU operands (per perf review), so the tolerance
    # is sized for bf16 rounding accumulated through two matmuls.
    max_err = float(jnp.max(jnp.abs(out - ref)))
    assert jnp.allclose(out, ref, atol=0.15, rtol=0.05), f"max_err={max_err}"

    print("KERNEL_OK")
</pallas_src>

<mosaic_0001>
module attributes {stable_mosaic.version = 11 : i64} {
  func.func @_stage2_kernel(%arg0: i32, %arg1: memref<512x8xbf16, #tpu.memory_space<vmem>>, %arg2: memref<1x8xf32, #tpu.memory_space<vmem>>, %arg3: memref<1x8xf32, #tpu.memory_space<vmem>>, %arg4: memref<8x16xbf16, #tpu.memory_space<vmem>>, %arg5: memref<512x16xbf16, #tpu.memory_space<vmem>>, %arg6: memref<1x16xf32, #tpu.memory_space<vmem>>, %arg7: memref<1x16xf32, #tpu.memory_space<vmem>>) attributes {dimension_semantics = [#tpu.dimension_semantics<arbitrary>], iteration_bounds = array<i64: 1>, scalar_prefetch = 0 : i64, scratch_operands = 0 : i64, tpu.core_type = #tpu.core_type<tc>, window_params = [{transform_indices = @transform_0, window_bounds = array<i64: 512, 8>}, {pipeline_mode = #tpu.pipeline_mode<synchronous>, transform_indices = @transform_1, window_bounds = array<i64: 1, 8>}, {pipeline_mode = #tpu.pipeline_mode<synchronous>, transform_indices = @transform_2, window_bounds = array<i64: 1, 8>}, {pipeline_mode = #tpu.pipeline_mode<synchronous>, transform_indices = @transform_3, window_bounds = array<i64: 8, 16>}, {transform_indices = @transform_4, window_bounds = array<i64: 512, 16>}, {pipeline_mode = #tpu.pipeline_mode<synchronous>, transform_indices = @transform_5, window_bounds = array<i64: 1, 16>}, {pipeline_mode = #tpu.pipeline_mode<synchronous>, transform_indices = @transform_6, window_bounds = array<i64: 1, 16>}]} {
    %c0_i32 = arith.constant 0 : i32
    %0 = arith.cmpi eq, %arg0, %c0_i32 : i32
    %1 = arith.extui %0 : i1 to i32
    %c0_i32_0 = arith.constant 0 : i32
    %2 = arith.cmpi ne, %1, %c0_i32_0 : i32
    scf.if %2 {
      %cst_21 = arith.constant 0.000000e+00 : f32
      %29 = vector.broadcast %cst_21 : f32 to vector<1x16xf32>
      %c0_22 = arith.constant 0 : index
      %c0_23 = arith.constant 0 : index
      %30 = vector.load %arg6[%c0_22, %c0_23] : memref<1x16xf32, #tpu.memory_space<vmem>>, vector<1x16xf32>
      tpu.vector_store %arg6[%c0_22, %c0_23], %29 {strides = array<i32>} : memref<1x16xf32, #tpu.memory_space<vmem>>, vector<1x16xf32>,
      %cst_24 = arith.constant 0.000000e+00 : f32
      %31 = vector.broadcast %cst_24 : f32 to vector<1x16xf32>
      %c0_25 = arith.constant 0 : index
      %c0_26 = arith.constant 0 : index
      %32 = vector.load %arg7[%c0_25, %c0_26] : memref<1x16xf32, #tpu.memory_space<vmem>>, vector<1x16xf32>
      tpu.vector_store %arg7[%c0_25, %c0_26], %31 {strides = array<i32>} : memref<1x16xf32, #tpu.memory_space<vmem>>, vector<1x16xf32>,
    } else {
    }
    %c0 = arith.constant 0 : index
    %c0_1 = arith.constant 0 : index
    %3 = vector.load %arg1[%c0, %c0_1] : memref<512x8xbf16, #tpu.memory_space<vmem>>, vector<512x8xbf16>
    %4 = arith.extf %3 : vector<512x8xbf16> to vector<512x8xf32>
    %c0_2 = arith.constant 0 : index
    %c0_3 = arith.constant 0 : index
    %5 = vector.load %arg2[%c0_2, %c0_3] : memref<1x8xf32, #tpu.memory_space<vmem>>, vector<1x8xf32>
    %6 = vector.broadcast %5 : vector<1x8xf32> to vector<512x8xf32>
    %7 = arith.mulf %4, %6 : vector<512x8xf32>
    %c0_4 = arith.constant 0 : index
    %c0_5 = arith.constant 0 : index
    %8 = vector.load %arg3[%c0_4, %c0_5] : memref<1x8xf32, #tpu.memory_space<vmem>>, vector<1x8xf32>
    %9 = vector.broadcast %8 : vector<1x8xf32> to vector<512x8xf32>
    %10 = arith.addf %7, %9 : vector<512x8xf32>
    %cst = arith.constant 0.000000e+00 : f32
    %11 = vector.broadcast %cst : f32 to vector<512x8xf32>
    %12 = arith.maximumf %10, %11 : vector<512x8xf32>
    %13 = arith.truncf %12 : vector<512x8xf32> to vector<512x8xbf16>
    %c0_6 = arith.constant 0 : index
    %c0_7 = arith.constant 0 : index
    %14 = vector.load %arg4[%c0_6, %c0_7] : memref<8x16xbf16, #tpu.memory_space<vmem>>, vector<8x16xbf16>
    %cst_8 = arith.constant dense<0.000000e+00> : vector<512x16xf32>
    %15 = tpu.matmul %13, %14, %cst_8 {dimension_numbers = #tpu.dot_dimension_numbers<[1], [0], [0], [1], [0, 0, 1, 1], [], []>} : vector<512x8xbf16>, vector<8x16xbf16>, vector<512x16xf32> -> vector<512x16xf32>
    %16 = arith.truncf %15 : vector<512x16xf32> to vector<512x16xbf16>
    %c0_9 = arith.constant 0 : index
    %c0_10 = arith.constant 0 : index
    %17 = vector.load %arg5[%c0_9, %c0_10] : memref<512x16xbf16, #tpu.memory_space<vmem>>, vector<512x16xbf16>
    tpu.vector_store %arg5[%c0_9, %c0_10], %16 {strides = array<i32>} : memref<512x16xbf16, #tpu.memory_space<vmem>>, vector<512x16xbf16>,
    %c0_11 = arith.constant 0 : index
    %c0_12 = arith.constant 0 : index
    %18 = vector.load %arg6[%c0_11, %c0_12] : memref<1x16xf32, #tpu.memory_space<vmem>>, vector<1x16xf32>
    %cst_13 = arith.constant dense<0.000000e+00> : vector<16xf32>
    %19 = vector.multi_reduction <add>, %15, %cst_13 [0] : vector<512x16xf32> to vector<16xf32>
    %20 = vector.shape_cast %19 : vector<16xf32> to vector<1x16xf32>
    %21 = arith.addf %18, %20 : vector<1x16xf32>
    %c0_14 = arith.constant 0 : index
    %c0_15 = arith.constant 0 : index
    %22 = vector.load %arg6[%c0_14, %c0_15] : memref<1x16xf32, #tpu.memory_space<vmem>>, vector<1x16xf32>
    tpu.vector_store %arg6[%c0_14, %c0_15], %21 {strides = array<i32>} : memref<1x16xf32, #tpu.memory_space<vmem>>, vector<1x16xf32>,
    %c0_16 = arith.constant 0 : index
    %c0_17 = arith.constant 0 : index
    %23 = vector.load %arg7[%c0_16, %c0_17] : memref<1x16xf32, #tpu.memory_space<vmem>>, vector<1x16xf32>
    %24 = arith.mulf %15, %15 : vector<512x16xf32>
    %cst_18 = arith.constant dense<0.000000e+00> : vector<16xf32>
    %25 = vector.multi_reduction <add>, %24, %cst_18 [0] : vector<512x16xf32> to vector<16xf32>
    %26 = vector.shape_cast %25 : vector<16xf32> to vector<1x16xf32>
    %27 = arith.addf %23, %26 : vector<1x16xf32>
    %c0_19 = arith.constant 0 : index
    %c0_20 = arith.constant 0 : index
    %28 = vector.load %arg7[%c0_19, %c0_20] : memref<1x16xf32, #tpu.memory_space<vmem>>, vector<1x16xf32>
    tpu.vector_store %arg7[%c0_19, %c0_20], %27 {strides = array<i32>} : memref<1x16xf32, #tpu.memory_space<vmem>>, vector<1x16xf32>,
    return
  }
  func.func @transform_0(%arg0: i32) -> (i32, i32) {
    %c0_i32 = arith.constant 0 : i32
    %c0_i32_0 = arith.constant 0 : i32
    return %arg0, %c0_i32 : i32, i32
  }
  func.func @transform_1(%arg0: i32) -> (i32, i32) {
    %c0_i32 = arith.constant 0 : i32
    %c0_i32_0 = arith.constant 0 : i32
    %c0_i32_1 = arith.constant 0 : i32
    return %c0_i32, %c0_i32_0 : i32, i32
  }
  func.func @transform_2(%arg0: i32) -> (i32, i32) {
    %c0_i32 = arith.constant 0 : i32
    %c0_i32_0 = arith.constant 0 : i32
    %c0_i32_1 = arith.constant 0 : i32
    return %c0_i32, %c0_i32_0 : i32, i32
  }
  func.func @transform_3(%arg0: i32) -> (i32, i32) {
    %c0_i32 = arith.constant 0 : i32
    %c0_i32_0 = arith.constant 0 : i32
    %c0_i32_1 = arith.constant 0 : i32
    return %c0_i32, %c0_i32_0 : i32, i32
  }
  func.func @transform_4(%arg0: i32) -> (i32, i32) {
    %c0_i32 = arith.constant 0 : i32
    %c0_i32_0 = arith.constant 0 : i32
    return %arg0, %c0_i32 : i32, i32
  }
  func.func @transform_5(%arg0: i32) -> (i32, i32) {
    %c0_i32 = arith.constant 0 : i32
    %c0_i32_0 = arith.constant 0 : i32
    %c0_i32_1 = arith.constant 0 : i32
    return %c0_i32, %c0_i32_0 : i32, i32
  }
  func.func @transform_6(%arg0: i32) -> (i32, i32) {
    %c0_i32 = arith.constant 0 : i32
    %c0_i32_0 = arith.constant 0 : i32
    %c0_i32_1 = arith.constant 0 : i32
    return %c0_i32, %c0_i32_0 : i32, i32
  }
}

module attributes {stable_mosaic.version = 11 : i64} {
  func.func @_conv3x3_kernel(%arg0: i32, %arg1: memref<1x256x16xbf16, #tpu.memory_space<vmem>>, %arg2: memref<1x16xf32, #tpu.memory_space<vmem>>, %arg3: memref<1x16xf32, #tpu.memory_space<vmem>>, %arg4: memref<9x16x4xbf16, #tpu.memory_space<vmem>>, %arg5: memref<1x256x4xf32, #tpu.memory_space<vmem>>) attributes {dimension_semantics = [#tpu.dimension_semantics<parallel>], iteration_bounds = array<i64: 2>, scalar_prefetch = 0 : i64, scratch_operands = 0 : i64, tpu.core_type = #tpu.core_type<tc>, window_params = [{transform_indices = @transform_0, window_bounds = array<i64: 1, 256, 16>}, {pipeline_mode = #tpu.pipeline_mode<synchronous>, transform_indices = @transform_1, window_bounds = array<i64: 1, 16>}, {pipeline_mode = #tpu.pipeline_mode<synchronous>, transform_indices = @transform_2, window_bounds = array<i64: 1, 16>}, {pipeline_mode = #tpu.pipeline_mode<synchronous>, transform_indices = @transform_3, window_bounds = array<i64: 9, 16, 4>}, {transform_indices = @transform_4, window_bounds = array<i64: 1, 256, 4>}]} {
    %c0 = arith.constant 0 : index
    %c0_0 = arith.constant 0 : index
    %c0_1 = arith.constant 0 : index
    %0 = vector.load %arg1[%c0, %c0_0, %c0_1] : memref<1x256x16xbf16, #tpu.memory_space<vmem>>, vector<1x256x16xbf16>
    %1 = vector.shape_cast %0 : vector<1x256x16xbf16> to vector<256x16xbf16>
    %2 = arith.extf %1 : vector<256x16xbf16> to vector<256x16xf32>
    %c0_2 = arith.constant 0 : index
    %c0_3 = arith.constant 0 : index
    %3 = vector.load %arg2[%c0_2, %c0_3] : memref<1x16xf32, #tpu.memory_space<vmem>>, vector<1x16xf32>
    %4 = vector.broadcast %3 : vector<1x16xf32> to vector<256x16xf32>
    %5 = arith.mulf %2, %4 : vector<256x16xf32>
    %c0_4 = arith.constant 0 : index
    %c0_5 = arith.constant 0 : index
    %6 = vector.load %arg3[%c0_4, %c0_5] : memref<1x16xf32, #tpu.memory_space<vmem>>, vector<1x16xf32>
    %7 = vector.broadcast %6 : vector<1x16xf32> to vector<256x16xf32>
    %8 = arith.addf %5, %7 : vector<256x16xf32>
    %cst = arith.constant 0.000000e+00 : f32
    %9 = vector.broadcast %cst : f32 to vector<256x16xf32>
    %10 = arith.maximumf %8, %9 : vector<256x16xf32>
    %11 = arith.truncf %10 : vector<256x16xf32> to vector<256x16xbf16>
    %12 = tpu.iota {dimensions = array<i32: 0>} : vector<256x1xi32>
    %c16_i32 = arith.constant 16 : i32
    %c0_i32 = arith.constant 0 : i32
    %13 = arith.cmpi eq, %c16_i32, %c0_i32 : i32
    %c1_i32 = arith.constant 1 : i32
    %14 = arith.select %13, %c1_i32, %c16_i32 : i32
    %15 = vector.broadcast %14 : i32 to vector<256x1xi32>
    %16 = arith.remsi %12, %15 : vector<256x1xi32>
    %c0_i32_6 = arith.constant 0 : i32
    %17 = vector.broadcast %c0_i32_6 : i32 to vector<256x1xi32>
    %18 = arith.cmpi ne, %16, %17 : vector<256x1xi32>
    %c0_i32_7 = arith.constant 0 : i32
    %19 = vector.broadcast %c0_i32_7 : i32 to vector<256x1xi32>
    %20 = arith.cmpi slt, %16, %19 : vector<256x1xi32>
    %c0_i32_8 = arith.constant 0 : i32
    %21 = arith.cmpi slt, %14, %c0_i32_8 : i32
    %22 = vector.broadcast %21 : i1 to vector<256x1xi1>
    %23 = vector.broadcast %22 : vector<256x1xi1> to vector<256x1xi1>
    %24 = arith.xori %20, %23 : vector<256x1xi1>
    %25 = arith.andi %24, %18 : vector<256x1xi1>
    %26 = vector.broadcast %14 : i32 to vector<256x1xi32>
    %27 = arith.addi %16, %26 : vector<256x1xi32>
    %28 = arith.select %25, %27, %16 : vector<256x1xi1>, vector<256x1xi32>
    %cst_9 = arith.constant 0.000000e+00 : f32
    %29 = vector.broadcast %cst_9 : f32 to vector<256x4xf32>
    %cst_10 = arith.constant 0.000000e+00 : bf16
    %30 = vector.broadcast %cst_10 : bf16 to vector<17x16xbf16>
    %31 = vector.extract_strided_slice %11 {offsets = [0, 0], sizes = [239, 16], strides = [1, 1]} : vector<256x16xbf16> to vector<239x16xbf16>
    %32 = tpu.concatenate %30, %31 in 0 : vector<17x16xbf16>, vector<239x16xbf16> -> vector<256x16xbf16>
    %c1_i32_11 = arith.constant 1 : i32
    %33 = vector.broadcast %c1_i32_11 : i32 to vector<256x1xi32>
    %34 = arith.cmpi sge, %28, %33 : vector<256x1xi32>
    %cst_12 = arith.constant 0.000000e+00 : bf16
    %35 = vector.broadcast %cst_12 : bf16 to vector<256x16xbf16>
    %36 = vector.shape_cast %34 : vector<256x1xi1> to vector<256x1xi1>
    %37 = vector.broadcast %36 : vector<256x1xi1> to vector<256x16xi1>
    %38 = arith.select %37, %32, %35 : vector<256x16xi1>, vector<256x16xbf16>
    %c0_13 = arith.constant 0 : index
    %c0_14 = arith.constant 0 : index
    %c0_15 = arith.constant 0 : index
    %39 = vector.load %arg4[%c0_13, %c0_14, %c0_15] : memref<9x16x4xbf16, #tpu.memory_space<vmem>>, vector<1x16x4xbf16>
    %40 = vector.shape_cast %39 : vector<1x16x4xbf16> to vector<16x4xbf16>
    %cst_16 = arith.constant dense<0.000000e+00> : vector<256x4xf32>
    %41 = tpu.matmul %38, %40, %cst_16 {dimension_numbers = #tpu.dot_dimension_numbers<[1], [0], [0], [1], [0, 0, 1, 1], [], []>} : vector<256x16xbf16>, vector<16x4xbf16>, vector<256x4xf32> -> vector<256x4xf32>
    %42 = arith.addf %29, %41 : vector<256x4xf32>
    %cst_17 = arith.constant 0.000000e+00 : bf16
    %43 = vector.broadcast %cst_17 : bf16 to vector<16x16xbf16>
    %44 = vector.extract_strided_slice %11 {offsets = [0, 0], sizes = [240, 16], strides = [1, 1]} : vector<256x16xbf16> to vector<240x16xbf16>
    %45 = tpu.concatenate %43, %44 in 0 : vector<16x16xbf16>, vector<240x16xbf16> -> vector<256x16xbf16>
    %c1 = arith.constant 1 : index
    %c0_18 = arith.constant 0 : index
    %c0_19 = arith.constant 0 : index
    %46 = vector.load %arg4[%c1, %c0_18, %c0_19] : memref<9x16x4xbf16, #tpu.memory_space<vmem>>, vector<1x16x4xbf16>
    %47 = vector.shape_cast %46 : vector<1x16x4xbf16> to vector<16x4xbf16>
    %cst_20 = arith.constant dense<0.000000e+00> : vector<256x4xf32>
    %48 = tpu.matmul %45, %47, %cst_20 {dimension_numbers = #tpu.dot_dimension_numbers<[1], [0], [0], [1], [0, 0, 1, 1], [], []>} : vector<256x16xbf16>, vector<16x4xbf16>, vector<256x4xf32> -> vector<256x4xf32>
    %49 = arith.addf %42, %48 : vector<256x4xf32>
    %cst_21 = arith.constant 0.000000e+00 : bf16
    %50 = vector.broadcast %cst_21 : bf16 to vector<15x16xbf16>
    %51 = vector.extract_strided_slice %11 {offsets = [0, 0], sizes = [241, 16], strides = [1, 1]} : vector<256x16xbf16> to vector<241x16xbf16>
    %52 = tpu.concatenate %50, %51 in 0 : vector<15x16xbf16>, vector<241x16xbf16> -> vector<256x16xbf16>
    %c15_i32 = arith.constant 15 : i32
    %53 = vector.broadcast %c15_i32 : i32 to vector<256x1xi32>
    %54 = arith.cmpi slt, %28, %53 : vector<256x1xi32>
    %cst_22 = arith.constant 0.000000e+00 : bf16
    %55 = vector.broadcast %cst_22 : bf16 to vector<256x16xbf16>
    %56 = vector.shape_cast %54 : vector<256x1xi1> to vector<256x1xi1>
    %57 = vector.broadcast %56 : vector<256x1xi1> to vector<256x16xi1>
    %58 = arith.select %57, %52, %55 : vector<256x16xi1>, vector<256x16xbf16>
    %c2 = arith.constant 2 : index
    %c0_23 = arith.constant 0 : index
    %c0_24 = arith.constant 0 : index
    %59 = vector.load %arg4[%c2, %c0_23, %c0_24] : memref<9x16x4xbf16, #tpu.memory_space<vmem>>, vector<1x16x4xbf16>
    %60 = vector.shape_cast %59 : vector<1x16x4xbf16> to vector<16x4xbf16>
    %cst_25 = arith.constant dense<0.000000e+00> : vector<256x4xf32>
    %61 = tpu.matmul %58, %60, %cst_25 {dimension_numbers = #tpu.dot_dimension_numbers<[1], [0], [0], [1], [0, 0, 1, 1], [], []>} : vector<256x16xbf16>, vector<16x4xbf16>, vector<256x4xf32> -> vector<256x4xf32>
    %62 = arith.addf %49, %61 : vector<256x4xf32>
    %cst_26 = arith.constant 0.000000e+00 : bf16
    %63 = vector.broadcast %cst_26 : bf16 to vector<1x16xbf16>
    %64 = vector.extract_strided_slice %11 {offsets = [0, 0], sizes = [255, 16], strides = [1, 1]} : vector<256x16xbf16> to vector<255x16xbf16>
    %65 = tpu.concatenate %63, %64 in 0 : vector<1x16xbf16>, vector<255x16xbf16> -> vector<256x16xbf16>
    %c1_i32_27 = arith.constant 1 : i32
    %66 = vector.broadcast %c1_i32_27 : i32 to vector<256x1xi32>
    %67 = arith.cmpi sge, %28, %66 : vector<256x1xi32>
    %cst_28 = arith.constant 0.000000e+00 : bf16
    %68 = vector.broadcast %cst_28 : bf16 to vector<256x16xbf16>
    %69 = vector.shape_cast %67 : vector<256x1xi1> to vector<256x1xi1>
    %70 = vector.broadcast %69 : vector<256x1xi1> to vector<256x16xi1>
    %71 = arith.select %70, %65, %68 : vector<256x16xi1>, vector<256x16xbf16>
    %c3 = arith.constant 3 : index
    %c0_29 = arith.constant 0 : index
    %c0_30 = arith.constant 0 : index
    %72 = vector.load %arg4[%c3, %c0_29, %c0_30] : memref<9x16x4xbf16, #tpu.memory_space<vmem>>, vector<1x16x4xbf16>
    %73 = vector.shape_cast %72 : vector<1x16x4xbf16> to vector<16x4xbf16>
    %cst_31 = arith.constant dense<0.000000e+00> : vector<256x4xf32>
    %74 = tpu.matmul %71, %73, %cst_31 {dimension_numbers = #tpu.dot_dimension_numbers<[1], [0], [0], [1], [0, 0, 1, 1], [], []>} : vector<256x16xbf16>, vector<16x4xbf16>, vector<256x4xf32> -> vector<256x4xf32>
    %75 = arith.addf %62, %74 : vector<256x4xf32>
    %c4 = arith.constant 4 : index
    %c0_32 = arith.constant 0 : index
    %c0_33 = arith.constant 0 : index
    %76 = vector.load %arg4[%c4, %c0_32, %c0_33] : memref<9x16x4xbf16, #tpu.memory_space<vmem>>, vector<1x16x4xbf16>
    %77 = vector.shape_cast %76 : vector<1x16x4xbf16> to vector<16x4xbf16>
    %cst_34 = arith.constant dense<0.000000e+00> : vector<256x4xf32>
    %78 = tpu.matmul %11, %77, %cst_34 {dimension_numbers = #tpu.dot_dimension_numbers<[1], [0], [0], [1], [0, 0, 1, 1], [], []>} : vector<256x16xbf16>, vector<16x4xbf16>, vector<256x4xf32> -> vector<256x4xf32>
    %79 = arith.addf %75, %78 : vector<256x4xf32>
    %80 = vector.extract_strided_slice %11 {offsets = [1, 0], sizes = [255, 16], strides = [1, 1]} : vector<256x16xbf16> to vector<255x16xbf16>
    %cst_35 = arith.constant 0.000000e+00 : bf16
    %81 = vector.broadcast %cst_35 : bf16 to vector<1x16xbf16>
    %82 = tpu.concatenate %80, %81 in 0 : vector<255x16xbf16>, vector<1x16xbf16> -> vector<256x16xbf16>
    %c15_i32_36 = arith.constant 15 : i32
    %83 = vector.broadcast %c15_i32_36 : i32 to vector<256x1xi32>
    %84 = arith.cmpi slt, %28, %83 : vector<256x1xi32>
    %cst_37 = arith.constant 0.000000e+00 : bf16
    %85 = vector.broadcast %cst_37 : bf16 to vector<256x16xbf16>
    %86 = vector.shape_cast %84 : vector<256x1xi1> to vector<256x1xi1>
    %87 = vector.broadcast %86 : vector<256x1xi1> to vector<256x16xi1>
    %88 = arith.select %87, %82, %85 : vector<256x16xi1>, vector<256x16xbf16>
    %c5 = arith.constant 5 : index
    %c0_38 = arith.constant 0 : index
    %c0_39 = arith.constant 0 : index
    %89 = vector.load %arg4[%c5, %c0_38, %c0_39] : memref<9x16x4xbf16, #tpu.memory_space<vmem>>, vector<1x16x4xbf16>
    %90 = vector.shape_cast %89 : vector<1x16x4xbf16> to vector<16x4xbf16>
    %cst_40 = arith.constant dense<0.000000e+00> : vector<256x4xf32>
    %91 = tpu.matmul %88, %90, %cst_40 {dimension_numbers = #tpu.dot_dimension_numbers<[1], [0], [0], [1], [0, 0, 1, 1], [], []>} : vector<256x16xbf16>, vector<16x4xbf16>, vector<256x4xf32> -> vector<256x4xf32>
    %92 = arith.addf %79, %91 : vector<256x4xf32>
    %93 = vector.extract_strided_slice %11 {offsets = [15, 0], sizes = [241, 16], strides = [1, 1]} : vector<256x16xbf16> to vector<241x16xbf16>
    %cst_41 = arith.constant 0.000000e+00 : bf16
    %94 = vector.broadcast %cst_41 : bf16 to vector<15x16xbf16>
    %95 = tpu.concatenate %93, %94 in 0 : vector<241x16xbf16>, vector<15x16xbf16> -> vector<256x16xbf16>
    %c1_i32_42 = arith.constant 1 : i32
    %96 = vector.broadcast %c1_i32_42 : i32 to vector<256x1xi32>
    %97 = arith.cmpi sge, %28, %96 : vector<256x1xi32>
    %cst_43 = arith.constant 0.000000e+00 : bf16
    %98 = vector.broadcast %cst_43 : bf16 to vector<256x16xbf16>
    %99 = vector.shape_cast %97 : vector<256x1xi1> to vector<256x1xi1>
    %100 = vector.broadcast %99 : vector<256x1xi1> to vector<256x16xi1>
    %101 = arith.select %100, %95, %98 : vector<256x16xi1>, vector<256x16xbf16>
    %c6 = arith.constant 6 : index
    %c0_44 = arith.constant 0 : index
    %c0_45 = arith.constant 0 : index
    %102 = vector.load %arg4[%c6, %c0_44, %c0_45] : memref<9x16x4xbf16, #tpu.memory_space<vmem>>, vector<1x16x4xbf16>
    %103 = vector.shape_cast %102 : vector<1x16x4xbf16> to vector<16x4xbf16>
    %cst_46 = arith.constant dense<0.000000e+00> : vector<256x4xf32>
    %104 = tpu.matmul %101, %103, %cst_46 {dimension_numbers = #tpu.dot_dimension_numbers<[1], [0], [0], [1], [0, 0, 1, 1], [], []>} : vector<256x16xbf16>, vector<16x4xbf16>, vector<256x4xf32> -> vector<256x4xf32>
    %105 = arith.addf %92, %104 : vector<256x4xf32>
    %106 = vector.extract_strided_slice %11 {offsets = [16, 0], sizes = [240, 16], strides = [1, 1]} : vector<256x16xbf16> to vector<240x16xbf16>
    %cst_47 = arith.constant 0.000000e+00 : bf16
    %107 = vector.broadcast %cst_47 : bf16 to vector<16x16xbf16>
    %108 = tpu.concatenate %106, %107 in 0 : vector<240x16xbf16>, vector<16x16xbf16> -> vector<256x16xbf16>
    %c7 = arith.constant 7 : index
    %c0_48 = arith.constant 0 : index
    %c0_49 = arith.constant 0 : index
    %109 = vector.load %arg4[%c7, %c0_48, %c0_49] : memref<9x16x4xbf16, #tpu.memory_space<vmem>>, vector<1x16x4xbf16>
    %110 = vector.shape_cast %109 : vector<1x16x4xbf16> to vector<16x4xbf16>
    %cst_50 = arith.constant dense<0.000000e+00> : vector<256x4xf32>
    %111 = tpu.matmul %108, %110, %cst_50 {dimension_numbers = #tpu.dot_dimension_numbers<[1], [0], [0], [1], [0, 0, 1, 1], [], []>} : vector<256x16xbf16>, vector<16x4xbf16>, vector<256x4xf32> -> vector<256x4xf32>
    %112 = arith.addf %105, %111 : vector<256x4xf32>
    %113 = vector.extract_strided_slice %11 {offsets = [17, 0], sizes = [239, 16], strides = [1, 1]} : vector<256x16xbf16> to vector<239x16xbf16>
    %cst_51 = arith.constant 0.000000e+00 : bf16
    %114 = vector.broadcast %cst_51 : bf16 to vector<17x16xbf16>
    %115 = tpu.concatenate %113, %114 in 0 : vector<239x16xbf16>, vector<17x16xbf16> -> vector<256x16xbf16>
    %c15_i32_52 = arith.constant 15 : i32
    %116 = vector.broadcast %c15_i32_52 : i32 to vector<256x1xi32>
    %117 = arith.cmpi slt, %28, %116 : vector<256x1xi32>
    %cst_53 = arith.constant 0.000000e+00 : bf16
    %118 = vector.broadcast %cst_53 : bf16 to vector<256x16xbf16>
    %119 = vector.shape_cast %117 : vector<256x1xi1> to vector<256x1xi1>
    %120 = vector.broadcast %119 : vector<256x1xi1> to vector<256x16xi1>
    %121 = arith.select %120, %115, %118 : vector<256x16xi1>, vector<256x16xbf16>
    %c8 = arith.constant 8 : index
    %c0_54 = arith.constant 0 : index
    %c0_55 = arith.constant 0 : index
    %122 = vector.load %arg4[%c8, %c0_54, %c0_55] : memref<9x16x4xbf16, #tpu.memory_space<vmem>>, vector<1x16x4xbf16>
    %123 = vector.shape_cast %122 : vector<1x16x4xbf16> to vector<16x4xbf16>
    %cst_56 = arith.constant dense<0.000000e+00> : vector<256x4xf32>
    %124 = tpu.matmul %121, %123, %cst_56 {dimension_numbers = #tpu.dot_dimension_numbers<[1], [0], [0], [1], [0, 0, 1, 1], [], []>} : vector<256x16xbf16>, vector<16x4xbf16>, vector<256x4xf32> -> vector<256x4xf32>
    %125 = arith.addf %112, %124 : vector<256x4xf32>
    %126 = vector.shape_cast %125 : vector<256x4xf32> to vector<1x256x4xf32>
    %c0_57 = arith.constant 0 : index
    %c0_58 = arith.constant 0 : index
    %c0_59 = arith.constant 0 : index
    %127 = vector.load %arg5[%c0_57, %c0_58, %c0_59] : memref<1x256x4xf32, #tpu.memory_space<vmem>>, vector<1x256x4xf32>
    tpu.vector_store %arg5[%c0_57, %c0_58, %c0_59], %126 {strides = array<i32>} : memref<1x256x4xf32, #tpu.memory_space<vmem>>, vector<1x256x4xf32>,
    return
  }
  func.func @transform_0(%arg0: i32) -> (i32, i32, i32) {
    %c0_i32 = arith.constant 0 : i32
    %c0_i32_0 = arith.constant 0 : i32
    %c0_i32_1 = arith.constant 0 : i32
    return %arg0, %c0_i32, %c0_i32_0 : i32, i32, i32
  }
  func.func @transform_1(%arg0: i32) -> (i32, i32) {
    %c0_i32 = arith.constant 0 : i32
    %c0_i32_0 = arith.constant 0 : i32
    %c0_i32_1 = arith.constant 0 : i32
    return %c0_i32, %c0_i32_0 : i32, i32
  }
  func.func @transform_2(%arg0: i32) -> (i32, i32) {
    %c0_i32 = arith.constant 0 : i32
    %c0_i32_0 = arith.constant 0 : i32
    %c0_i32_1 = arith.constant 0 : i32
    return %c0_i32, %c0_i32_0 : i32, i32
  }
  func.func @transform_3(%arg0: i32) -> (i32, i32, i32) {
    %c0_i32 = arith.constant 0 : i32
    %c0_i32_0 = arith.constant 0 : i32
    %c0_i32_1 = arith.constant 0 : i32
    %c0_i32_2 = arith.constant 0 : i32
    return %c0_i32, %c0_i32_0, %c0_i32_1 : i32, i32, i32
  }
  func.func @transform_4(%arg0: i32) -> (i32, i32, i32) {
    %c0_i32 = arith.constant 0 : i32
    %c0_i32_0 = arith.constant 0 : i32
    %c0_i32_1 = arith.constant 0 : i32
    return %arg0, %c0_i32, %c0_i32_0 : i32, i32, i32
  }
}

</mosaic_0001>

<llo_original>
// kernel: densenet_bottleneck_forward.2
$region0: #{densenet_bottleneck_forward.2}
  #allocation0 [shape = 'u32[]', space=smem, size = 0x4, offset = 0x4, fixed_abs, tag = 'smem constant byte address 0x4 - core index']
  #allocation1 [shape = 'u32[72,128]{1,0:T(1,128)}', space=vmem, size = 0x9000, scoped, tag = 'internal scratch']
  %s0 = inlined_call_operand.vmem [shape: bf16[512,8], index: 0, kind: input, shape index: {}]
  %s1 = inlined_call_operand.vmem [shape: f32[1,8], index: 1, kind: input, shape index: {}]
  %s2 = inlined_call_operand.vmem [shape: f32[1,8], index: 2, kind: input, shape index: {}]
  %s3 = inlined_call_operand.vmem [shape: bf16[8,16], index: 3, kind: input, shape index: {}]
  %s4 = inlined_call_operand.vmem [shape: bf16[512,16], index: 4, kind: output, shape index: {0}]
  %s5 = inlined_call_operand.vmem [shape: f32[1,16], index: 5, kind: output, shape index: {1}]
  %s6 = inlined_call_operand.vmem [shape: f32[1,16], index: 6, kind: output, shape index: {2}]
  %7 = xla_tuple %s4, %s5, %s6
  %s8 = sld [smem:[#allocation0]]
  $region46: #{densenet_bottleneck_forward.2} parent=0
    _
  %s10 = ssub.s32 1, %s8
  %s11 = scalar_select 0, %s10, %s8
  // Predicated region
  $region2: #{densenet_bottleneck_forward.2} parent=0 // pred_check
    _
  $region3: #{densenet_bottleneck_forward.2} parent=0 // pred_check_branch
    %13 = sbr.rel (0) target = $region5
  $region4: #{densenet_bottleneck_forward.2} parent=0 // pred_region
    _
  $region5: #{densenet_bottleneck_forward.2} parent=0 // pred_fallthru
    _
  // Predicated region
  $region6: #{densenet_bottleneck_forward.2} parent=0 // pred_check
    _
  $region7: #{densenet_bottleneck_forward.2} parent=0 // pred_check_branch
    %15 = sbr.rel (0) target = $region9
  $region8: #{densenet_bottleneck_forward.2} parent=0 // pred_region
    _
  $region9: #{densenet_bottleneck_forward.2} parent=0 // pred_fallthru
    _
  // Predicated region
  $region10: #{densenet_bottleneck_forward.2} parent=0 // pred_check
    _
  $region11: #{densenet_bottleneck_forward.2} parent=0 // pred_check_branch
    %17 = sbr.rel (0) target = $region13
  $region12: #{densenet_bottleneck_forward.2} parent=0 // pred_region
    _
  $region13: #{densenet_bottleneck_forward.2} parent=0 // pred_fallthru
    _
  // Predicated region
  $region14: #{densenet_bottleneck_forward.2} parent=0 // pred_check
    _
  $region15: #{densenet_bottleneck_forward.2} parent=0 // pred_check_branch
    %19 = sbr.rel (0) target = $region17
  $region16: #{densenet_bottleneck_forward.2} parent=0 // pred_region
    _
  $region17: #{densenet_bottleneck_forward.2} parent=0 // pred_fallthru
    _
  %p21 = scmp.eq.s32.totalorder 0, 0
  // Predicated region
  $region18: #{densenet_bottleneck_forward.2} parent=0 // pred_check
    %p22 = pneg %p21
  $region19: #{densenet_bottleneck_forward.2} parent=0 // pred_check_branch
    %24 = sbr.rel (%p22) target = $region21
  $region20: #{densenet_bottleneck_forward.2} parent=0 // pred_region
    %vm25 = vcmask 122880
    %26 = vst.msk [vmem:[%s5] sm:$0x1] %vm25, 0.0
    %27 = vst.msk [vmem:[%s6] sm:$0x1] %vm25, 0.0
  $region21: #{densenet_bottleneck_forward.2} parent=0 // pred_fallthru
    _
  %v28 = vld [vmem:[%s0] sm:$0xf]
  %v29 = vld [vmem:[%s0 + $0x4] sm:$0xf]
  %v30 = vld [vmem:[%s0 + $0x8] sm:$0xf]
  %v31 = vld [vmem:[%s0 + $0xc] sm:$0xf]
  %v32 = vld [vmem:[%s0 + $0x10] sm:$0xf]
  %v33 = vld [vmem:[%s0 + $0x14] sm:$0xf]
  %v34 = vld [vmem:[%s0 + $0x18] sm:$0xf]
  %v35 = vld [vmem:[%s0 + $0x1c] sm:$0xf]
  %v36 = vld [vmem:[%s0 + $0x20] sm:$0xf]
  %v37 = vld [vmem:[%s0 + $0x24] sm:$0xf]
  %v38 = vld [vmem:[%s0 + $0x28] sm:$0xf]
  %v39 = vld [vmem:[%s0 + $0x2c] sm:$0xf]
  %v40 = vld [vmem:[%s0 + $0x30] sm:$0xf]
  %v41 = vld [vmem:[%s0 + $0x34] sm:$0xf]
  %v42 = vld [vmem:[%s0 + $0x38] sm:$0xf]
  %v43 = vld [vmem:[%s0 + $0x3c] sm:$0xf]
  %v44 = vld [vmem:[%s0 + $0x40] sm:$0xf]
  %v45 = vld [vmem:[%s0 + $0x44] sm:$0xf]
  %v46 = vld [vmem:[%s0 + $0x48] sm:$0xf]
  %v47 = vld [vmem:[%s0 + $0x4c] sm:$0xf]
  %v48 = vld [vmem:[%s0 + $0x50] sm:$0xf]
  %v49 = vld [vmem:[%s0 + $0x54] sm:$0xf]
  %v50 = vld [vmem:[%s0 + $0x58] sm:$0xf]
  %v51 = vld [vmem:[%s0 + $0x5c] sm:$0xf]
  %v52 = vld [vmem:[%s0 + $0x60] sm:$0xf]
  %v53 = vld [vmem:[%s0 + $0x64] sm:$0xf]
  %v54 = vld [vmem:[%s0 + $0x68] sm:$0xf]
  %v55 = vld [vmem:[%s0 + $0x6c] sm:$0xf]
  %v56 = vld [vmem:[%s0 + $0x70] sm:$0xf]
  %v57 = vld [vmem:[%s0 + $0x74] sm:$0xf]
  %v58 = vld [vmem:[%s0 + $0x78] sm:$0xf]
  %v59 = vld [vmem:[%s0 + $0x7c] sm:$0xf]
  %v60 = vld [vmem:[%s0 + $0x80] sm:$0xf]
  %v61 = vld [vmem:[%s0 + $0x84] sm:$0xf]
  %v62 = vld [vmem:[%s0 + $0x88] sm:$0xf]
  %v63 = vld [vmem:[%s0 + $0x8c] sm:$0xf]
  %v64 = vld [vmem:[%s0 + $0x90] sm:$0xf]
  %v65 = vld [vmem:[%s0 + $0x94] sm:$0xf]
  %v66 = vld [vmem:[%s0 + $0x98] sm:$0xf]
  %v67 = vld [vmem:[%s0 + $0x9c] sm:$0xf]
  %v68 = vld [vmem:[%s0 + $0xa0] sm:$0xf]
  %v69 = vld [vmem:[%s0 + $0xa4] sm:$0xf]
  %v70 = vld [vmem:[%s0 + $0xa8] sm:$0xf]
  %v71 = vld [vmem:[%s0 + $0xac] sm:$0xf]
  %v72 = vld [vmem:[%s0 + $0xb0] sm:$0xf]
  %v73 = vld [vmem:[%s0 + $0xb4] sm:$0xf]
  %v74 = vld [vmem:[%s0 + $0xb8] sm:$0xf]
  %v75 = vld [vmem:[%s0 + $0xbc] sm:$0xf]
  %v76 = vld [vmem:[%s0 + $0xc0] sm:$0xf]
  %v77 = vld [vmem:[%s0 + $0xc4] sm:$0xf]
  %v78 = vld [vmem:[%s0 + $0xc8] sm:$0xf]
  %v79 = vld [vmem:[%s0 + $0xcc] sm:$0xf]
  %v80 = vld [vmem:[%s0 + $0xd0] sm:$0xf]
  %v81 = vld [vmem:[%s0 + $0xd4] sm:$0xf]
  %v82 = vld [vmem:[%s0 + $0xd8] sm:$0xf]
  %v83 = vld [vmem:[%s0 + $0xdc] sm:$0xf]
  %v84 = vld [vmem:[%s0 + $0xe0] sm:$0xf]
  %v85 = vld [vmem:[%s0 + $0xe4] sm:$0xf]
  %v86 = vld [vmem:[%s0 + $0xe8] sm:$0xf]
  %v87 = vld [vmem:[%s0 + $0xec] sm:$0xf]
  %v88 = vld [vmem:[%s0 + $0xf0] sm:$0xf]
  %v89 = vld [vmem:[%s0 + $0xf4] sm:$0xf]
  %v90 = vld [vmem:[%s0 + $0xf8] sm:$0xf]
  %v91 = vld [vmem:[%s0 + $0xfc] sm:$0xf]
  %v92 = vunpack.c.l.bf16 %v28
  %v93 = vunpack.c.l.bf16 %v29
  %v94 = vunpack.c.l.bf16 %v30
  %v95 = vunpack.c.l.bf16 %v31
  %v96 = vunpack.c.l.bf16 %v32
  %v97 = vunpack.c.l.bf16 %v33
  %v98 = vunpack.c.l.bf16 %v34
  %v99 = vunpack.c.l.bf16 %v35
  %v100 = vunpack.c.l.bf16 %v36
  %v101 = vunpack.c.l.bf16 %v37
  %v102 = vunpack.c.l.bf16 %v38
  %v103 = vunpack.c.l.bf16 %v39
  %v104 = vunpack.c.l.bf16 %v40
  %v105 = vunpack.c.l.bf16 %v41
  %v106 = vunpack.c.l.bf16 %v42
  %v107 = vunpack.c.l.bf16 %v43
  %v108 = vunpack.c.l.bf16 %v44
  %v109 = vunpack.c.l.bf16 %v45
  %v110 = vunpack.c.l.bf16 %v46
  %v111 = vunpack.c.l.bf16 %v47
  %v112 = vunpack.c.l.bf16 %v48
  %v113 = vunpack.c.l.bf16 %v49
  %v114 = vunpack.c.l.bf16 %v50
  %v115 = vunpack.c.l.bf16 %v51
  %v116 = vunpack.c.l.bf16 %v52
  %v117 = vunpack.c.l.bf16 %v53
  %v118 = vunpack.c.l.bf16 %v54
  %v119 = vunpack.c.l.bf16 %v55
  %v120 = vunpack.c.l.bf16 %v56
  %v121 = vunpack.c.l.bf16 %v57
  %v122 = vunpack.c.l.bf16 %v58
  %v123 = vunpack.c.l.bf16 %v59
  %v124 = vunpack.c.l.bf16 %v60
  %v125 = vunpack.c.l.bf16 %v61
  %v126 = vunpack.c.l.bf16 %v62
  %v127 = vunpack.c.l.bf16 %v63
  %v128 = vunpack.c.l.bf16 %v64
  %v129 = vunpack.c.l.bf16 %v65
  %v130 = vunpack.c.l.bf16 %v66
  %v131 = vunpack.c.l.bf16 %v67
  %v132 = vunpack.c.l.bf16 %v68
  %v133 = vunpack.c.l.bf16 %v69
  %v134 = vunpack.c.l.bf16 %v70
  %v135 = vunpack.c.l.bf16 %v71
  %v136 = vunpack.c.l.bf16 %v72
  %v137 = vunpack.c.l.bf16 %v73
  %v138 = vunpack.c.l.bf16 %v74
  %v139 = vunpack.c.l.bf16 %v75
  %v140 = vunpack.c.l.bf16 %v76
  %v141 = vunpack.c.l.bf16 %v77
  %v142 = vunpack.c.l.bf16 %v78
  %v143 = vunpack.c.l.bf16 %v79
  %v144 = vunpack.c.l.bf16 %v80
  %v145 = vunpack.c.l.bf16 %v81
  %v146 = vunpack.c.l.bf16 %v82
  %v147 = vunpack.c.l.bf16 %v83
  %v148 = vunpack.c.l.bf16 %v84
  %v149 = vunpack.c.l.bf16 %v85
  %v150 = vunpack.c.l.bf16 %v86
  %v151 = vunpack.c.l.bf16 %v87
  %v152 = vunpack.c.l.bf16 %v88
  %v153 = vunpack.c.l.bf16 %v89
  %v154 = vunpack.c.l.bf16 %v90
  %v155 = vunpack.c.l.bf16 %v91
  %v156 = vld [vmem:[%s1] sm:$0x1]
  %v158 = vperm.slane %v156, 0
  %v160 = vmul.f32 %v92, %v158
  %v161 = vmul.f32 %v93, %v158
  %v162 = vmul.f32 %v94, %v158
  %v163 = vmul.f32 %v95, %v158
  %v164 = vmul.f32 %v96, %v158
  %v165 = vmul.f32 %v97, %v158
  %v166 = vmul.f32 %v98, %v158
  %v167 = vmul.f32 %v99, %v158
  %v168 = vmul.f32 %v100, %v158
  %v169 = vmul.f32 %v101, %v158
  %v170 = vmul.f32 %v102, %v158
  %v171 = vmul.f32 %v103, %v158
  %v172 = vmul.f32 %v104, %v158
  %v173 = vmul.f32 %v105, %v158
  %v174 = vmul.f32 %v106, %v158
  %v175 = vmul.f32 %v107, %v158
  %v176 = vmul.f32 %v108, %v158
  %v177 = vmul.f32 %v109, %v158
  %v178 = vmul.f32 %v110, %v158
  %v179 = vmul.f32 %v111, %v158
  %v180 = vmul.f32 %v112, %v158
  %v181 = vmul.f32 %v113, %v158
  %v182 = vmul.f32 %v114, %v158
  %v183 = vmul.f32 %v115, %v158
  %v184 = vmul.f32 %v116, %v158
  %v185 = vmul.f32 %v117, %v158
  %v186 = vmul.f32 %v118, %v158
  %v187 = vmul.f32 %v119, %v158
  %v188 = vmul.f32 %v120, %v158
  %v189 = vmul.f32 %v121, %v158
  %v190 = vmul.f32 %v122, %v158
  %v191 = vmul.f32 %v123, %v158
  %v192 = vmul.f32 %v124, %v158
  %v193 = vmul.f32 %v125, %v158
  %v194 = vmul.f32 %v126, %v158
  %v195 = vmul.f32 %v127, %v158
  %v196 = vmul.f32 %v128, %v158
  %v197 = vmul.f32 %v129, %v158
  %v198 = vmul.f32 %v130, %v158
  %v199 = vmul.f32 %v131, %v158
  %v200 = vmul.f32 %v132, %v158
  %v201 = vmul.f32 %v133, %v158
  %v202 = vmul.f32 %v134, %v158
  %v203 = vmul.f32 %v135, %v158
  %v204 = vmul.f32 %v136, %v158
  %v205 = vmul.f32 %v137, %v158
  %v206 = vmul.f32 %v138, %v158
  %v207 = vmul.f32 %v139, %v158
  %v208 = vmul.f32 %v140, %v158
  %v209 = vmul.f32 %v141, %v158
  %v210 = vmul.f32 %v142, %v158
  %v211 = vmul.f32 %v143, %v158
  %v212 = vmul.f32 %v144, %v158
  %v213 = vmul.f32 %v145, %v158
  %v214 = vmul.f32 %v146, %v158
  %v215 = vmul.f32 %v147, %v158
  %v216 = vmul.f32 %v148, %v158
  %v217 = vmul.f32 %v149, %v158
  %v218 = vmul.f32 %v150, %v158
  %v219 = vmul.f32 %v151, %v158
  %v220 = vmul.f32 %v152, %v158
  %v221 = vmul.f32 %v153, %v158
  %v222 = vmul.f32 %v154, %v158
  %v223 = vmul.f32 %v155, %v158
  %v224 = vld [vmem:[%s2] sm:$0x1]
  %v226 = vperm.slane %v224, 0
  %v228 = vadd.f32 %v160, %v226
  %v229 = vadd.f32 %v161, %v226
  %v230 = vadd.f32 %v162, %v226
  %v231 = vadd.f32 %v163, %v226
  %v232 = vadd.f32 %v164, %v226
  %v233 = vadd.f32 %v165, %v226
  %v234 = vadd.f32 %v166, %v226
  %v235 = vadd.f32 %v167, %v226
  %v236 = vadd.f32 %v168, %v226
  %v237 = vadd.f32 %v169, %v226
  %v238 = vadd.f32 %v170, %v226
  %v239 = vadd.f32 %v171, %v226
  %v240 = vadd.f32 %v172, %v226
  %v241 = vadd.f32 %v173, %v226
  %v242 = vadd.f32 %v174, %v226
  %v243 = vadd.f32 %v175, %v226
  %v244 = vadd.f32 %v176, %v226
  %v245 = vadd.f32 %v177, %v226
  %v246 = vadd.f32 %v178, %v226
  %v247 = vadd.f32 %v179, %v226
  %v248 = vadd.f32 %v180, %v226
  %v249 = vadd.f32 %v181, %v226
  %v250 = vadd.f32 %v182, %v226
  %v251 = vadd.f32 %v183, %v226
  %v252 = vadd.f32 %v184, %v226
  %v253 = vadd.f32 %v185, %v226
  %v254 = vadd.f32 %v186, %v226
  %v255 = vadd.f32 %v187, %v226
  %v256 = vadd.f32 %v188, %v226
  %v257 = vadd.f32 %v189, %v226
  %v258 = vadd.f32 %v190, %v226
  %v259 = vadd.f32 %v191, %v226
  %v260 = vadd.f32 %v192, %v226
  %v261 = vadd.f32 %v193, %v226
  %v262 = vadd.f32 %v194, %v226
  %v263 = vadd.f32 %v195, %v226
  %v264 = vadd.f32 %v196, %v226
  %v265 = vadd.f32 %v197, %v226
  %v266 = vadd.f32 %v198, %v226
  %v267 = vadd.f32 %v199, %v226
  %v268 = vadd.f32 %v200, %v226
  %v269 = vadd.f32 %v201, %v226
  %v270 = vadd.f32 %v202, %v226
  %v271 = vadd.f32 %v203, %v226
  %v272 = vadd.f32 %v204, %v226
  %v273 = vadd.f32 %v205, %v226
  %v274 = vadd.f32 %v206, %v226
  %v275 = vadd.f32 %v207, %v226
  %v276 = vadd.f32 %v208, %v226
  %v277 = vadd.f32 %v209, %v226
  %v278 = vadd.f32 %v210, %v226
  %v279 = vadd.f32 %v211, %v226
  %v280 = vadd.f32 %v212, %v226
  %v281 = vadd.f32 %v213, %v226
  %v282 = vadd.f32 %v214, %v226
  %v283 = vadd.f32 %v215, %v226
  %v284 = vadd.f32 %v216, %v226
  %v285 = vadd.f32 %v217, %v226
  %v286 = vadd.f32 %v218, %v226
  %v287 = vadd.f32 %v219, %v226
  %v288 = vadd.f32 %v220, %v226
  %v289 = vadd.f32 %v221, %v226
  %v290 = vadd.f32 %v222, %v226
  %v291 = vadd.f32 %v223, %v226
  %v292 = vmax.f32 %v228, 0.0
  %v293 = vmax.f32 %v229, 0.0
  %v294 = vmax.f32 %v230, 0.0
  %v295 = vmax.f32 %v231, 0.0
  %v296 = vmax.f32 %v232, 0.0
  %v297 = vmax.f32 %v233, 0.0
  %v298 = vmax.f32 %v234, 0.0
  %v299 = vmax.f32 %v235, 0.0
  %v300 = vmax.f32 %v236, 0.0
  %v301 = vmax.f32 %v237, 0.0
  %v302 = vmax.f32 %v238, 0.0
  %v303 = vmax.f32 %v239, 0.0
  %v304 = vmax.f32 %v240, 0.0
  %v305 = vmax.f32 %v241, 0.0
  %v306 = vmax.f32 %v242, 0.0
  %v307 = vmax.f32 %v243, 0.0
  %v308 = vmax.f32 %v244, 0.0
  %v309 = vmax.f32 %v245, 0.0
  %v310 = vmax.f32 %v246, 0.0
  %v311 = vmax.f32 %v247, 0.0
  %v312 = vmax.f32 %v248, 0.0
  %v313 = vmax.f32 %v249, 0.0
  %v314 = vmax.f32 %v250, 0.0
  %v315 = vmax.f32 %v251, 0.0
  %v316 = vmax.f32 %v252, 0.0
  %v317 = vmax.f32 %v253, 0.0
  %v318 = vmax.f32 %v254, 0.0
  %v319 = vmax.f32 %v255, 0.0
  %v320 = vmax.f32 %v256, 0.0
  %v321 = vmax.f32 %v257, 0.0
  %v322 = vmax.f32 %v258, 0.0
  %v323 = vmax.f32 %v259, 0.0
  %v324 = vmax.f32 %v260, 0.0
  %v325 = vmax.f32 %v261, 0.0
  %v326 = vmax.f32 %v262, 0.0
  %v327 = vmax.f32 %v263, 0.0
  %v328 = vmax.f32 %v264, 0.0
  %v329 = vmax.f32 %v265, 0.0
  %v330 = vmax.f32 %v266, 0.0
  %v331 = vmax.f32 %v267, 0.0
  %v332 = vmax.f32 %v268, 0.0
  %v333 = vmax.f32 %v269, 0.0
  %v334 = vmax.f32 %v270, 0.0
  %v335 = vmax.f32 %v271, 0.0
  %v336 = vmax.f32 %v272, 0.0
  %v337 = vmax.f32 %v273, 0.0
  %v338 = vmax.f32 %v274, 0.0
  %v339 = vmax.f32 %v275, 0.0
  %v340 = vmax.f32 %v276, 0.0
  %v341 = vmax.f32 %v277, 0.0
  %v342 = vmax.f32 %v278, 0.0
  %v343 = vmax.f32 %v279, 0.0
  %v344 = vmax.f32 %v280, 0.0
  %v345 = vmax.f32 %v281, 0.0
  %v346 = vmax.f32 %v282, 0.0
  %v347 = vmax.f32 %v283, 0.0
  %v348 = vmax.f32 %v284, 0.0
  %v349 = vmax.f32 %v285, 0.0
  %v350 = vmax.f32 %v286, 0.0
  %v351 = vmax.f32 %v287, 0.0
  %v352 = vmax.f32 %v288, 0.0
  %v353 = vmax.f32 %v289, 0.0
  %v354 = vmax.f32 %v290, 0.0
  %v355 = vmax.f32 %v291, 0.0
  %v356 = vpack.c.bf16 %v293, %v292
  %v357 = vpack.c.bf16 %v295, %v294
  %v358 = vpack.c.bf16 %v297, %v296
  %v359 = vpack.c.bf16 %v299, %v298
  %v360 = vpack.c.bf16 %v301, %v300
  %v361 = vpack.c.bf16 %v303, %v302
  %v362 = vpack.c.bf16 %v305, %v304
  %v363 = vpack.c.bf16 %v307, %v306
  %v364 = vpack.c.bf16 %v309, %v308
  %v365 = vpack.c.bf16 %v311, %v310
  %v366 = vpack.c.bf16 %v313, %v312
  %v367 = vpack.c.bf16 %v315, %v314
  %v368 = vpack.c.bf16 %v317, %v316
  %v369 = vpack.c.bf16 %v319, %v318
  %v370 = vpack.c.bf16 %v321, %v320
  %v371 = vpack.c.bf16 %v323, %v322
  %v372 = vpack.c.bf16 %v325, %v324
  %v373 = vpack.c.bf16 %v327, %v326
  %v374 = vpack.c.bf16 %v329, %v328
  %v375 = vpack.c.bf16 %v331, %v330
  %v376 = vpack.c.bf16 %v333, %v332
  %v377 = vpack.c.bf16 %v335, %v334
  %v378 = vpack.c.bf16 %v337, %v336
  %v379 = vpack.c.bf16 %v339, %v338
  %v380 = vpack.c.bf16 %v341, %v340
  %v381 = vpack.c.bf16 %v343, %v342
  %v382 = vpack.c.bf16 %v345, %v344
  %v383 = vpack.c.bf16 %v347, %v346
  %v384 = vpack.c.bf16 %v349, %v348
  %v385 = vpack.c.bf16 %v351, %v350
  %v386 = vpack.c.bf16 %v353, %v352
  %v387 = vpack.c.bf16 %v355, %v354
  %v388 = vld [vmem:[%s3] sm:$0xf]
  %vm389 = vcmask 64512
  %v391 = vsel %vm389, %v356, 0
  %v394 = vsel %vm389, %v357, 0
  %v397 = vsel %vm389, %v358, 0
  %v400 = vsel %vm389, %v359, 0
  %v403 = vsel %vm389, %v360, 0
  %v406 = vsel %vm389, %v361, 0
  %v409 = vsel %vm389, %v362, 0
  %v412 = vsel %vm389, %v363, 0
  %v415 = vsel %vm389, %v364, 0
  %v418 = vsel %vm389, %v365, 0
  %v421 = vsel %vm389, %v366, 0
  %v424 = vsel %vm389, %v367, 0
  %v427 = vsel %vm389, %v368, 0
  %v430 = vsel %vm389, %v369, 0
  %v433 = vsel %vm389, %v370, 0
  %v436 = vsel %vm389, %v371, 0
  %v439 = vsel %vm389, %v372, 0
  %v442 = vsel %vm389, %v373, 0
  %v445 = vsel %vm389, %v374, 0
  %v448 = vsel %vm389, %v375, 0
  %v451 = vsel %vm389, %v376, 0
  %v454 = vsel %vm389, %v377, 0
  %v457 = vsel %vm389, %v378, 0
  %v460 = vsel %vm389, %v379, 0
  %v463 = vsel %vm389, %v380, 0
  %v466 = vsel %vm389, %v381, 0
  %v469 = vsel %vm389, %v382, 0
  %v472 = vsel %vm389, %v383, 0
  %v475 = vsel %vm389, %v384, 0
  %v478 = vsel %vm389, %v385, 0
  %v481 = vsel %vm389, %v386, 0
  %v484 = vsel %vm389, %v387, 0
  %vm486 = vcmask 1043456
  %v488 = vsel %vm486, %v388, 0
  %490 = vmatpush.bf16.msra.mxu0 0
  %491 = vmatpush.bf16.msra.mxu0 0
  %492 = vmatpush.bf16.msra.mxu0 0
  %493 = vmatpush.bf16.msra.mxu0 0
  %494 = vmatpush.bf16.msra.mxu0 0
  %495 = vmatpush.bf16.msra.mxu0 0
  %496 = vmatpush.bf16.msra.mxu0 0
  %497 = vmatpush.bf16.msra.mxu0 %v488
  %498 = vmatmul.bf16.gmra.mxu0 %v391
  %v499 = vpop.f32.mrf.mxu0
  %v500 = vadd.f32 0.0, %v499
  %v501 = vpop.f32.mrf.mxu0
  %v502 = vadd.f32 0.0, %v501
  %503 = vmatmul.bf16.gmra.mxu0 %v394
  %v504 = vpop.f32.mrf.mxu0
  %v505 = vadd.f32 0.0, %v504
  %v506 = vpop.f32.mrf.mxu0
  %v507 = vadd.f32 0.0, %v506
  %508 = vmatmul.bf16.gmra.mxu0 %v397
  %v509 = vpop.f32.mrf.mxu0
  %v510 = vadd.f32 0.0, %v509
  %v511 = vpop.f32.mrf.mxu0
  %v512 = vadd.f32 0.0, %v511
  %513 = vmatmul.bf16.gmra.mxu0 %v400
  %v514 = vpop.f32.mrf.mxu0
  %v515 = vadd.f32 0.0, %v514
  %v516 = vpop.f32.mrf.mxu0
  %v517 = vadd.f32 0.0, %v516
  %518 = vmatmul.bf16.gmra.mxu0 %v403
  %v519 = vpop.f32.mrf.mxu0
  %v520 = vadd.f32 0.0, %v519
  %v521 = vpop.f32.mrf.mxu0
  %v522 = vadd.f32 0.0, %v521
  %523 = vmatmul.bf16.gmra.mxu0 %v406
  %v524 = vpop.f32.mrf.mxu0
  %v525 = vadd.f32 0.0, %v524
  %v526 = vpop.f32.mrf.mxu0
  %v527 = vadd.f32 0.0, %v526
  %528 = vmatmul.bf16.gmra.mxu0 %v409
  %v529 = vpop.f32.mrf.mxu0
  %v530 = vadd.f32 0.0, %v529
  %v531 = vpop.f32.mrf.mxu0
  %v532 = vadd.f32 0.0, %v531
  %533 = vmatmul.bf16.gmra.mxu0 %v412
  %v534 = vpop.f32.mrf.mxu0
  %v535 = vadd.f32 0.0, %v534
  %v536 = vpop.f32.mrf.mxu0
  %v537 = vadd.f32 0.0, %v536
  %538 = vmatmul.bf16.gmra.mxu0 %v415
  %v539 = vpop.f32.mrf.mxu0
  %v540 = vadd.f32 0.0, %v539
  %v541 = vpop.f32.mrf.mxu0
  %v542 = vadd.f32 0.0, %v541
  %543 = vmatmul.bf16.gmra.mxu0 %v418
  %v544 = vpop.f32.mrf.mxu0
  %v545 = vadd.f32 0.0, %v544
  %v546 = vpop.f32.mrf.mxu0
  %v547 = vadd.f32 0.0, %v546
  %548 = vmatmul.bf16.gmra.mxu0 %v421
  %v549 = vpop.f32.mrf.mxu0
  %v550 = vadd.f32 0.0, %v549
  %v551 = vpop.f32.mrf.mxu0
  %v552 = vadd.f32 0.0, %v551
  %553 = vmatmul.bf16.gmra.mxu0 %v424
  %v554 = vpop.f32.mrf.mxu0
  %v555 = vadd.f32 0.0, %v554
  %v556 = vpop.f32.mrf.mxu0
  %v557 = vadd.f32 0.0, %v556
  %558 = vmatmul.bf16.gmra.mxu0 %v427
  %v559 = vpop.f32.mrf.mxu0
  %v560 = vadd.f32 0.0, %v559
  %v561 = vpop.f32.mrf.mxu0
  %v562 = vadd.f32 0.0, %v561
  %563 = vmatmul.bf16.gmra.mxu0 %v430
  %v564 = vpop.f32.mrf.mxu0
  %v565 = vadd.f32 0.0, %v564
  %v566 = vpop.f32.mrf.mxu0
  %v567 = vadd.f32 0.0, %v566
  %568 = vmatmul.bf16.gmra.mxu0 %v433
  %v569 = vpop.f32.mrf.mxu0
  %v570 = vadd.f32 0.0, %v569
  %v571 = vpop.f32.mrf.mxu0
  %v572 = vadd.f32 0.0, %v571
  %573 = vmatmul.bf16.gmra.mxu0 %v436
  %v574 = vpop.f32.mrf.mxu0
  %v575 = vadd.f32 0.0, %v574
  %v576 = vpop.f32.mrf.mxu0
  %v577 = vadd.f32 0.0, %v576
  %578 = vmatmul.bf16.gmra.mxu0 %v439
  %v579 = vpop.f32.mrf.mxu0
  %v580 = vadd.f32 0.0, %v579
  %v581 = vpop.f32.mrf.mxu0
  %v582 = vadd.f32 0.0, %v581
  %583 = vmatmul.bf16.gmra.mxu0 %v442
  %v584 = vpop.f32.mrf.mxu0
  %v585 = vadd.f32 0.0, %v584
  %v586 = vpop.f32.mrf.mxu0
  %v587 = vadd.f32 0.0, %v586
  %588 = vmatmul.bf16.gmra.mxu0 %v445
  %v589 = vpop.f32.mrf.mxu0
  %v590 = vadd.f32 0.0, %v589
  %v591 = vpop.f32.mrf.mxu0
  %v592 = vadd.f32 0.0, %v591
  %593 = vmatmul.bf16.gmra.mxu0 %v448
  %v594 = vpop.f32.mrf.mxu0
  %v595 = vadd.f32 0.0, %v594
  %v596 = vpop.f32.mrf.mxu0
  %v597 = vadd.f32 0.0, %v596
  %598 = vmatmul.bf16.gmra.mxu0 %v451
  %v599 = vpop.f32.mrf.mxu0
  %v600 = vadd.f32 0.0, %v599
  %v601 = vpop.f32.mrf.mxu0
  %v602 = vadd.f32 0.0, %v601
  %603 = vmatmul.bf16.gmra.mxu0 %v454
  %v604 = vpop.f32.mrf.mxu0
  %v605 = vadd.f32 0.0, %v604
  %v606 = vpop.f32.mrf.mxu0
  %v607 = vadd.f32 0.0, %v606
  %608 = vmatmul.bf16.gmra.mxu0 %v457
  %v609 = vpop.f32.mrf.mxu0
  %v610 = vadd.f32 0.0, %v609
  %v611 = vpop.f32.mrf.mxu0
  %v612 = vadd.f32 0.0, %v611
  %613 = vmatmul.bf16.gmra.mxu0 %v460
  %v614 = vpop.f32.mrf.mxu0
  %v615 = vadd.f32 0.0, %v614
  %v616 = vpop.f32.mrf.mxu0
  %v617 = vadd.f32 0.0, %v616
  %618 = vmatmul.bf16.gmra.mxu0 %v463
  %v619 = vpop.f32.mrf.mxu0
  %v620 = vadd.f32 0.0, %v619
  %v621 = vpop.f32.mrf.mxu0
  %v622 = vadd.f32 0.0, %v621
  %623 = vmatmul.bf16.gmra.mxu0 %v466
  %v624 = vpop.f32.mrf.mxu0
  %v625 = vadd.f32 0.0, %v624
  %v626 = vpop.f32.mrf.mxu0
  %v627 = vadd.f32 0.0, %v626
  %628 = vmatmul.bf16.gmra.mxu0 %v469
  %v629 = vpop.f32.mrf.mxu0
  %v630 = vadd.f32 0.0, %v629
  %v631 = vpop.f32.mrf.mxu0
  %v632 = vadd.f32 0.0, %v631
  %633 = vmatmul.bf16.gmra.mxu0 %v472
  %v634 = vpop.f32.mrf.mxu0
  %v635 = vadd.f32 0.0, %v634
  %v636 = vpop.f32.mrf.mxu0
  %v637 = vadd.f32 0.0, %v636
  %638 = vmatmul.bf16.gmra.mxu0 %v475
  %v639 = vpop.f32.mrf.mxu0
  %v640 = vadd.f32 0.0, %v639
  %v641 = vpop.f32.mrf.mxu0
  %v642 = vadd.f32 0.0, %v641
  %643 = vmatmul.bf16.gmra.mxu0 %v478
  %v644 = vpop.f32.mrf.mxu0
  %v645 = vadd.f32 0.0, %v644
  %v646 = vpop.f32.mrf.mxu0
  %v647 = vadd.f32 0.0, %v646
  %648 = vmatmul.bf16.gmra.mxu0 %v481
  %v649 = vpop.f32.mrf.mxu0
  %v650 = vadd.f32 0.0, %v649
  %v651 = vpop.f32.mrf.mxu0
  %v652 = vadd.f32 0.0, %v651
  %653 = vmatmul.bf16.gmra.mxu0 %v484
  %v654 = vpop.f32.mrf.mxu0
  %v655 = vadd.f32 0.0, %v654
  %v656 = vpop.f32.mrf.mxu0
  %v657 = vadd.f32 0.0, %v656
  %658 = vdwg.mxu0
  %v659 = vpack.c.bf16 %v500, %v500
  %v660 = vpack.c.bf16 %v502, %v502
  %v661 = vpack.c.bf16 %v505, %v505
  %v662 = vpack.c.bf16 %v507, %v507
  %v663 = vpack.c.bf16 %v510, %v510
  %v664 = vpack.c.bf16 %v512, %v512
  %v665 = vpack.c.bf16 %v515, %v515
  %v666 = vpack.c.bf16 %v517, %v517
  %v667 = vpack.c.bf16 %v520, %v520
  %v668 = vpack.c.bf16 %v522, %v522
  %v669 = vpack.c.bf16 %v525, %v525
  %v670 = vpack.c.bf16 %v527, %v527
  %v671 = vpack.c.bf16 %v530, %v530
  %v672 = vpack.c.bf16 %v532, %v532
  %v673 = vpack.c.bf16 %v535, %v535
  %v674 = vpack.c.bf16 %v537, %v537
  %v675 = vpack.c.bf16 %v540, %v540
  %v676 = vpack.c.bf16 %v542, %v542
  %v677 = vpack.c.bf16 %v545, %v545
  %v678 = vpack.c.bf16 %v547, %v547
  %v679 = vpack.c.bf16 %v550, %v550
  %v680 = vpack.c.bf16 %v552, %v552
  %v681 = vpack.c.bf16 %v555, %v555
  %v682 = vpack.c.bf16 %v557, %v557
  %v683 = vpack.c.bf16 %v560, %v560
  %v684 = vpack.c.bf16 %v562, %v562
  %v685 = vpack.c.bf16 %v565, %v565
  %v686 = vpack.c.bf16 %v567, %v567
  %v687 = vpack.c.bf16 %v570, %v570
  %v688 = vpack.c.bf16 %v572, %v572
  %v689 = vpack.c.bf16 %v575, %v575
  %v690 = vpack.c.bf16 %v577, %v577
  %v691 = vpack.c.bf16 %v580, %v580
  %v692 = vpack.c.bf16 %v582, %v582
  %v693 = vpack.c.bf16 %v585, %v585
  %v694 = vpack.c.bf16 %v587, %v587
  %v695 = vpack.c.bf16 %v590, %v590
  %v696 = vpack.c.bf16 %v592, %v592
  %v697 = vpack.c.bf16 %v595, %v595
  %v698 = vpack.c.bf16 %v597, %v597
  %v699 = vpack.c.bf16 %v600, %v600
  %v700 = vpack.c.bf16 %v602, %v602
  %v701 = vpack.c.bf16 %v605, %v605
  %v702 = vpack.c.bf16 %v607, %v607
  %v703 = vpack.c.bf16 %v610, %v610
  %v704 = vpack.c.bf16 %v612, %v612
  %v705 = vpack.c.bf16 %v615, %v615
  %v706 = vpack.c.bf16 %v617, %v617
  %v707 = vpack.c.bf16 %v620, %v620
  %v708 = vpack.c.bf16 %v622, %v622
  %v709 = vpack.c.bf16 %v625, %v625
  %v710 = vpack.c.bf16 %v627, %v627
  %v711 = vpack.c.bf16 %v630, %v630
  %v712 = vpack.c.bf16 %v632, %v632
  %v713 = vpack.c.bf16 %v635, %v635
  %v714 = vpack.c.bf16 %v637, %v637
  %v715 = vpack.c.bf16 %v640, %v640
  %v716 = vpack.c.bf16 %v642, %v642
  %v717 = vpack.c.bf16 %v645, %v645
  %v718 = vpack.c.bf16 %v647, %v647
  %v719 = vpack.c.bf16 %v650, %v650
  %v720 = vpack.c.bf16 %v652, %v652
  %v721 = vpack.c.bf16 %v655, %v655
  %v722 = vpack.c.bf16 %v657, %v657
  %vm723 = vcmask 125952
  %724 = vst.msk [vmem:[%s4] sm:$0xf] %vm723, %v659
  %725 = vst.msk [vmem:[%s4 + $0x4] sm:$0xf] %vm723, %v660
  %726 = vst.msk [vmem:[%s4 + $0x8] sm:$0xf] %vm723, %v661
  %727 = vst.msk [vmem:[%s4 + $0xc] sm:$0xf] %vm723, %v662
  %728 = vst.msk [vmem:[%s4 + $0x10] sm:$0xf] %vm723, %v663
  %729 = vst.msk [vmem:[%s4 + $0x14] sm:$0xf] %vm723, %v664
  %730 = vst.msk [vmem:[%s4 + $0x18] sm:$0xf] %vm723, %v665
  %731 = vst.msk [vmem:[%s4 + $0x1c] sm:$0xf] %vm723, %v666
  %732 = vst.msk [vmem:[%s4 + $0x20] sm:$0xf] %vm723, %v667
  %733 = vst.msk [vmem:[%s4 + $0x24] sm:$0xf] %vm723, %v668
  %734 = vst.msk [vmem:[%s4 + $0x28] sm:$0xf] %vm723, %v669
  %735 = vst.msk [vmem:[%s4 + $0x2c] sm:$0xf] %vm723, %v670
  %736 = vst.msk [vmem:[%s4 + $0x30] sm:$0xf] %vm723, %v671
  %737 = vst.msk [vmem:[%s4 + $0x34] sm:$0xf] %vm723, %v672
  %738 = vst.msk [vmem:[%s4 + $0x38] sm:$0xf] %vm723, %v673
  %739 = vst.msk [vmem:[%s4 + $0x3c] sm:$0xf] %vm723, %v674
  %740 = vst.msk [vmem:[%s4 + $0x40] sm:$0xf] %vm723, %v675
  %741 = vst.msk [vmem:[%s4 + $0x44] sm:$0xf] %vm723, %v676
  %742 = vst.msk [vmem:[%s4 + $0x48] sm:$0xf] %vm723, %v677
  %743 = vst.msk [vmem:[%s4 + $0x4c] sm:$0xf] %vm723, %v678
  %744 = vst.msk [vmem:[%s4 + $0x50] sm:$0xf] %vm723, %v679
  %745 = vst.msk [vmem:[%s4 + $0x54] sm:$0xf] %vm723, %v680
  %746 = vst.msk [vmem:[%s4 + $0x58] sm:$0xf] %vm723, %v681
  %747 = vst.msk [vmem:[%s4 + $0x5c] sm:$0xf] %vm723, %v682
  %748 = vst.msk [vmem:[%s4 + $0x60] sm:$0xf] %vm723, %v683
  %749 = vst.msk [vmem:[%s4 + $0x64] sm:$0xf] %vm723, %v684
  %750 = vst.msk [vmem:[%s4 + $0x68] sm:$0xf] %vm723, %v685
  %751 = vst.msk [vmem:[%s4 + $0x6c] sm:$0xf] %vm723, %v686
  %752 = vst.msk [vmem:[%s4 + $0x70] sm:$0xf] %vm723, %v687
  %753 = vst.msk [vmem:[%s4 + $0x74] sm:$0xf] %vm723, %v688
  %754 = vst.msk [vmem:[%s4 + $0x78] sm:$0xf] %vm723, %v689
  %755 = vst.msk [vmem:[%s4 + $0x7c] sm:$0xf] %vm723, %v690
  %756 = vst.msk [vmem:[%s4 + $0x80] sm:$0xf] %vm723, %v691
  %757 = vst.msk [vmem:[%s4 + $0x84] sm:$0xf] %vm723, %v692
  %758 = vst.msk [vmem:[%s4 + $0x88] sm:$0xf] %vm723, %v693
  %759 = vst.msk [vmem:[%s4 + $0x8c] sm:$0xf] %vm723, %v694
  %760 = vst.msk [vmem:[%s4 + $0x90] sm:$0xf] %vm723, %v695
  %761 = vst.msk [vmem:[%s4 + $0x94] sm:$0xf] %vm723, %v696
  %762 = vst.msk [vmem:[%s4 + $0x98] sm:$0xf] %vm723, %v697
  %763 = vst.msk [vmem:[%s4 + $0x9c] sm:$0xf] %vm723, %v698
  %764 = vst.msk [vmem:[%s4 + $0xa0] sm:$0xf] %vm723, %v699
  %765 = vst.msk [vmem:[%s4 + $0xa4] sm:$0xf] %vm723, %v700
  %766 = vst.msk [vmem:[%s4 + $0xa8] sm:$0xf] %vm723, %v701
  %767 = vst.msk [vmem:[%s4 + $0xac] sm:$0xf] %vm723, %v702
  %768 = vst.msk [vmem:[%s4 + $0xb0] sm:$0xf] %vm723, %v703
  %769 = vst.msk [vmem:[%s4 + $0xb4] sm:$0xf] %vm723, %v704
  %770 = vst.msk [vmem:[%s4 + $0xb8] sm:$0xf] %vm723, %v705
  %771 = vst.msk [vmem:[%s4 + $0xbc] sm:$0xf] %vm723, %v706
  %772 = vst.msk [vmem:[%s4 + $0xc0] sm:$0xf] %vm723, %v707
  %773 = vst.msk [vmem:[%s4 + $0xc4] sm:$0xf] %vm723, %v708
  %774 = vst.msk [vmem:[%s4 + $0xc8] sm:$0xf] %vm723, %v709
  %775 = vst.msk [vmem:[%s4 + $0xcc] sm:$0xf] %vm723, %v710
  %776 = vst.msk [vmem:[%s4 + $0xd0] sm:$0xf] %vm723, %v711
  %777 = vst.msk [vmem:[%s4 + $0xd4] sm:$0xf] %vm723, %v712
  %778 = vst.msk [vmem:[%s4 + $0xd8] sm:$0xf] %vm723, %v713
  %779 = vst.msk [vmem:[%s4 + $0xdc] sm:$0xf] %vm723, %v714
  %780 = vst.msk [vmem:[%s4 + $0xe0] sm:$0xf] %vm723, %v715
  %781 = vst.msk [vmem:[%s4 + $0xe4] sm:$0xf] %vm723, %v716
  %782 = vst.msk [vmem:[%s4 + $0xe8] sm:$0xf] %vm723, %v717
  %783 = vst.msk [vmem:[%s4 + $0xec] sm:$0xf] %vm723, %v718
  %784 = vst.msk [vmem:[%s4 + $0xf0] sm:$0xf] %vm723, %v719
  %785 = vst.msk [vmem:[%s4 + $0xf4] sm:$0xf] %vm723, %v720
  %786 = vst.msk [vmem:[%s4 + $0xf8] sm:$0xf] %vm723, %v721
  %787 = vst.msk [vmem:[%s4 + $0xfc] sm:$0xf] %vm723, %v722
  %v788 = vld [vmem:[%s5] sm:$0x1]
  %vm789 = vcmask 130048
  %v790 = vsel %vm789, %v500, 0.0
  %v791 = vsel %vm789, %v502, 0.0
  %v792 = vadd.f32 %v790, %v791
  %v793 = vsel %vm789, %v505, 0.0
  %v794 = vadd.f32 %v792, %v793
  %v795 = vsel %vm789, %v507, 0.0
  %v796 = vadd.f32 %v794, %v795
  %v797 = vsel %vm789, %v510, 0.0
  %v798 = vadd.f32 %v796, %v797
  %v799 = vsel %vm789, %v512, 0.0
  %v800 = vadd.f32 %v798, %v799
  %v801 = vsel %vm789, %v515, 0.0
  %v802 = vadd.f32 %v800, %v801
  %v803 = vsel %vm789, %v517, 0.0
  %v804 = vadd.f32 %v802, %v803
  %v805 = vsel %vm789, %v520, 0.0
  %v806 = vadd.f32 %v804, %v805
  %v807 = vsel %vm789, %v522, 0.0
  %v808 = vadd.f32 %v806, %v807
  %v809 = vsel %vm789, %v525, 0.0
  %v810 = vadd.f32 %v808, %v809
  %v811 = vsel %vm789, %v527, 0.0
  %v812 = vadd.f32 %v810, %v811
  %v813 = vsel %vm789, %v530, 0.0
  %v814 = vadd.f32 %v812, %v813
  %v815 = vsel %vm789, %v532, 0.0
  %v816 = vadd.f32 %v814, %v815
  %v817 = vsel %vm789, %v535, 0.0
  %v818 = vadd.f32 %v816, %v817
  %v819 = vsel %vm789, %v537, 0.0
  %v820 = vadd.f32 %v818, %v819
  %v821 = vsel %vm789, %v540, 0.0
  %v822 = vadd.f32 %v820, %v821
  %v823 = vsel %vm789, %v542, 0.0
  %v824 = vadd.f32 %v822, %v823
  %v825 = vsel %vm789, %v545, 0.0
  %v826 = vadd.f32 %v824, %v825
  %v827 = vsel %vm789, %v547, 0.0
  %v828 = vadd.f32 %v826, %v827
  %v829 = vsel %vm789, %v550, 0.0
  %v830 = vadd.f32 %v828, %v829
  %v831 = vsel %vm789, %v552, 0.0
  %v832 = vadd.f32 %v830, %v831
  %v833 = vsel %vm789, %v555, 0.0
  %v834 = vadd.f32 %v832, %v833
  %v835 = vsel %vm789, %v557, 0.0
  %v836 = vadd.f32 %v834, %v835
  %v837 = vsel %vm789, %v560, 0.0
  %v838 = vadd.f32 %v836, %v837
  %v839 = vsel %vm789, %v562, 0.0
  %v840 = vadd.f32 %v838, %v839
  %v841 = vsel %vm789, %v565, 0.0
  %v842 = vadd.f32 %v840, %v841
  %v843 = vsel %vm789, %v567, 0.0
  %v844 = vadd.f32 %v842, %v843
  %v845 = vsel %vm789, %v570, 0.0
  %v846 = vadd.f32 %v844, %v845
  %v847 = vsel %vm789, %v572, 0.0
  %v848 = vadd.f32 %v846, %v847
  %v849 = vsel %vm789, %v575, 0.0
  %v850 = vadd.f32 %v848, %v849
  %v851 = vsel %vm789, %v577, 0.0
  %v852 = vadd.f32 %v850, %v851
  %v853 = vsel %vm789, %v580, 0.0
  %v854 = vadd.f32 %v852, %v853
  %v855 = vsel %vm789, %v582, 0.0
  %v856 = vadd.f32 %v854, %v855
  %v857 = vsel %vm789, %v585, 0.0
  %v858 = vadd.f32 %v856, %v857
  %v859 = vsel %vm789, %v587, 0.0
  %v860 = vadd.f32 %v858, %v859
  %v861 = vsel %vm789, %v590, 0.0
  %v862 = vadd.f32 %v860, %v861
  %v863 = vsel %vm789, %v592, 0.0
  %v864 = vadd.f32 %v862, %v863
  %v865 = vsel %vm789, %v595, 0.0
  %v866 = vadd.f32 %v864, %v865
  %v867 = vsel %vm789, %v597, 0.0
  %v868 = vadd.f32 %v866, %v867
  %v869 = vsel %vm789, %v600, 0.0
  %v870 = vadd.f32 %v868, %v869
  %v871 = vsel %vm789, %v602, 0.0
  %v872 = vadd.f32 %v870, %v871
  %v873 = vsel %vm789, %v605, 0.0
  %v874 = vadd.f32 %v872, %v873
  %v875 = vsel %vm789, %v607, 0.0
  %v876 = vadd.f32 %v874, %v875
  %v877 = vsel %vm789, %v610, 0.0
  %v878 = vadd.f32 %v876, %v877
  %v879 = vsel %vm789, %v612, 0.0
  %v880 = vadd.f32 %v878, %v879
  %v881 = vsel %vm789, %v615, 0.0
  %v882 = vadd.f32 %v880, %v881
  %v883 = vsel %vm789, %v617, 0.0
  %v884 = vadd.f32 %v882, %v883
  %v885 = vsel %vm789, %v620, 0.0
  %v886 = vadd.f32 %v884, %v885
  %v887 = vsel %vm789, %v622, 0.0
  %v888 = vadd.f32 %v886, %v887
  %v889 = vsel %vm789, %v625, 0.0
  %v890 = vadd.f32 %v888, %v889
  %v891 = vsel %vm789, %v627, 0.0
  %v892 = vadd.f32 %v890, %v891
  %v893 = vsel %vm789, %v630, 0.0
  %v894 = vadd.f32 %v892, %v893
  %v895 = vsel %vm789, %v632, 0.0
  %v896 = vadd.f32 %v894, %v895
  %v897 = vsel %vm789, %v635, 0.0
  %v898 = vadd.f32 %v896, %v897
  %v899 = vsel %vm789, %v637, 0.0
  %v900 = vadd.f32 %v898, %v899
  %v901 = vsel %vm789, %v640, 0.0
  %v902 = vadd.f32 %v900, %v901
  %v903 = vsel %vm789, %v642, 0.0
  %v904 = vadd.f32 %v902, %v903
  %v905 = vsel %vm789, %v645, 0.0
  %v906 = vadd.f32 %v904, %v905
  %v907 = vsel %vm789, %v647, 0.0
  %v908 = vadd.f32 %v906, %v907
  %v909 = vsel %vm789, %v650, 0.0
  %v910 = vadd.f32 %v908, %v909
  %v911 = vsel %vm789, %v652, 0.0
  %v912 = vadd.f32 %v910, %v911
  %v913 = vsel %vm789, %v655, 0.0
  %v914 = vadd.f32 %v912, %v913
  %v915 = vsel %vm789, %v657, 0.0
  %v916 = vadd.f32 %v914, %v915
  %v917 = vrot.slane %v916, 4
  %v918 = vadd.f32 %v916, %v917
  %v919 = vrot.slane %v918, 2
  %v920 = vadd.f32 %v918, %v919
  %v921 = vrot.slane %v920, 1
  %v922 = vadd.f32 %v920, %v921
  %v923 = vadd.f32 %v788, %v922
  %vm924 = vcmask 122880
  %925 = vst.msk [vmem:[%s5] sm:$0x1] %vm924, %v923
  %v926 = vld [vmem:[%s6] sm:$0x1]
  %v927 = vmul.f32 %v500, %v500
  %v928 = vmul.f32 %v502, %v502
  %v929 = vmul.f32 %v505, %v505
  %v930 = vmul.f32 %v507, %v507
  %v931 = vmul.f32 %v510, %v510
  %v932 = vmul.f32 %v512, %v512
  %v933 = vmul.f32 %v515, %v515
  %v934 = vmul.f32 %v517, %v517
  %v935 = vmul.f32 %v520, %v520
  %v936 = vmul.f32 %v522, %v522
  %v937 = vmul.f32 %v525, %v525
  %v938 = vmul.f32 %v527, %v527
  %v939 = vmul.f32 %v530, %v530
  %v940 = vmul.f32 %v532, %v532
  %v941 = vmul.f32 %v535, %v535
  %v942 = vmul.f32 %v537, %v537
  %v943 = vmul.f32 %v540, %v540
  %v944 = vmul.f32 %v542, %v542
  %v945 = vmul.f32 %v545, %v545
  %v946 = vmul.f32 %v547, %v547
  %v947 = vmul.f32 %v550, %v550
  %v948 = vmul.f32 %v552, %v552
  %v949 = vmul.f32 %v555, %v555
  %v950 = vmul.f32 %v557, %v557
  %v951 = vmul.f32 %v560, %v560
  %v952 = vmul.f32 %v562, %v562
  %v953 = vmul.f32 %v565, %v565
  %v954 = vmul.f32 %v567, %v567
  %v955 = vmul.f32 %v570, %v570
  %v956 = vmul.f32 %v572, %v572
  %v957 = vmul.f32 %v575, %v575
  %v958 = vmul.f32 %v577, %v577
  %v959 = vmul.f32 %v580, %v580
  %v960 = vmul.f32 %v582, %v582
  %v961 = vmul.f32 %v585, %v585
  %v962 = vmul.f32 %v587, %v587
  %v963 = vmul.f32 %v590, %v590
  %v964 = vmul.f32 %v592, %v592
  %v965 = vmul.f32 %v595, %v595
  %v966 = vmul.f32 %v597, %v597
  %v967 = vmul.f32 %v600, %v600
  %v968 = vmul.f32 %v602, %v602
  %v969 = vmul.f32 %v605, %v605
  %v970 = vmul.f32 %v607, %v607
  %v971 = vmul.f32 %v610, %v610
  %v972 = vmul.f32 %v612, %v612
  %v973 = vmul.f32 %v615, %v615
  %v974 = vmul.f32 %v617, %v617
  %v975 = vmul.f32 %v620, %v620
  %v976 = vmul.f32 %v622, %v622
  %v977 = vmul.f32 %v625, %v625
  %v978 = vmul.f32 %v627, %v627
  %v979 = vmul.f32 %v630, %v630
  %v980 = vmul.f32 %v632, %v632
  %v981 = vmul.f32 %v635, %v635
  %v982 = vmul.f32 %v637, %v637
  %v983 = vmul.f32 %v640, %v640
  %v984 = vmul.f32 %v642, %v642
  %v985 = vmul.f32 %v645, %v645
  %v986 = vmul.f32 %v647, %v647
  %v987 = vmul.f32 %v650, %v650
  %v988 = vmul.f32 %v652, %v652
  %v989 = vmul.f32 %v655, %v655
  %v990 = vmul.f32 %v657, %v657
  %v991 = vsel %vm789, %v927, 0.0
  %v992 = vsel %vm789, %v928, 0.0
  %v993 = vadd.f32 %v991, %v992
  %v994 = vsel %vm789, %v929, 0.0
  %v995 = vadd.f32 %v993, %v994
  %v996 = vsel %vm789, %v930, 0.0
  %v997 = vadd.f32 %v995, %v996
  %v998 = vsel %vm789, %v931, 0.0
  %v999 = vadd.f32 %v997, %v998
  %v1000 = vsel %vm789, %v932, 0.0
  %v1001 = vadd.f32 %v999, %v1000
  %v1002 = vsel %vm789, %v933, 0.0
  %v1003 = vadd.f32 %v1001, %v1002
  %v1004 = vsel %vm789, %v934, 0.0
  %v1005 = vadd.f32 %v1003, %v1004
  %v1006 = vsel %vm789, %v935, 0.0
  %v1007 = vadd.f32 %v1005, %v1006
  %v1008 = vsel %vm789, %v936, 0.0
  %v1009 = vadd.f32 %v1007, %v1008
  %v1010 = vsel %vm789, %v937, 0.0
  %v1011 = vadd.f32 %v1009, %v1010
  %v1012 = vsel %vm789, %v938, 0.0
  %v1013 = vadd.f32 %v1011, %v1012
  %v1014 = vsel %vm789, %v939, 0.0
  %v1015 = vadd.f32 %v1013, %v1014
  %v1016 = vsel %vm789, %v940, 0.0
  %v1017 = vadd.f32 %v1015, %v1016
  %v1018 = vsel %vm789, %v941, 0.0
  %v1019 = vadd.f32 %v1017, %v1018
  %v1020 = vsel %vm789, %v942, 0.0
  %v1021 = vadd.f32 %v1019, %v1020
  %v1022 = vsel %vm789, %v943, 0.0
  %v1023 = vadd.f32 %v1021, %v1022
  %v1024 = vsel %vm789, %v944, 0.0
  %v1025 = vadd.f32 %v1023, %v1024
  %v1026 = vsel %vm789, %v945, 0.0
  %v1027 = vadd.f32 %v1025, %v1026
  %v1028 = vsel %vm789, %v946, 0.0
  %v1029 = vadd.f32 %v1027, %v1028
  %v1030 = vsel %vm789, %v947, 0.0
  %v1031 = vadd.f32 %v1029, %v1030
  %v1032 = vsel %vm789, %v948, 0.0
  %v1033 = vadd.f32 %v1031, %v1032
  %v1034 = vsel %vm789, %v949, 0.0
  %v1035 = vadd.f32 %v1033, %v1034
  %v1036 = vsel %vm789, %v950, 0.0
  %v1037 = vadd.f32 %v1035, %v1036
  %v1038 = vsel %vm789, %v951, 0.0
  %v1039 = vadd.f32 %v1037, %v1038
  %v1040 = vsel %vm789, %v952, 0.0
  %v1041 = vadd.f32 %v1039, %v1040
  %v1042 = vsel %vm789, %v953, 0.0
  %v1043 = vadd.f32 %v1041, %v1042
  %v1044 = vsel %vm789, %v954, 0.0
  %v1045 = vadd.f32 %v1043, %v1044
  %v1046 = vsel %vm789, %v955, 0.0
  %v1047 = vadd.f32 %v1045, %v1046
  %v1048 = vsel %vm789, %v956, 0.0
  %v1049 = vadd.f32 %v1047, %v1048
  %v1050 = vsel %vm789, %v957, 0.0
  %v1051 = vadd.f32 %v1049, %v1050
  %v1052 = vsel %vm789, %v958, 0.0
  %v1053 = vadd.f32 %v1051, %v1052
  %v1054 = vsel %vm789, %v959, 0.0
  %v1055 = vadd.f32 %v1053, %v1054
  %v1056 = vsel %vm789, %v960, 0.0
  %v1057 = vadd.f32 %v1055, %v1056
  %v1058 = vsel %vm789, %v961, 0.0
  %v1059 = vadd.f32 %v1057, %v1058
  %v1060 = vsel %vm789, %v962, 0.0
  %v1061 = vadd.f32 %v1059, %v1060
  %v1062 = vsel %vm789, %v963, 0.0
  %v1063 = vadd.f32 %v1061, %v1062
  %v1064 = vsel %vm789, %v964, 0.0
  %v1065 = vadd.f32 %v1063, %v1064
  %v1066 = vsel %vm789, %v965, 0.0
  %v1067 = vadd.f32 %v1065, %v1066
  %v1068 = vsel %vm789, %v966, 0.0
  %v1069 = vadd.f32 %v1067, %v1068
  %v1070 = vsel %vm789, %v967, 0.0
  %v1071 = vadd.f32 %v1069, %v1070
  %v1072 = vsel %vm789, %v968, 0.0
  %v1073 = vadd.f32 %v1071, %v1072
  %v1074 = vsel %vm789, %v969, 0.0
  %v1075 = vadd.f32 %v1073, %v1074
  %v1076 = vsel %vm789, %v970, 0.0
  %v1077 = vadd.f32 %v1075, %v1076
  %v1078 = vsel %vm789, %v971, 0.0
  %v1079 = vadd.f32 %v1077, %v1078
  %v1080 = vsel %vm789, %v972, 0.0
  %v1081 = vadd.f32 %v1079, %v1080
  %v1082 = vsel %vm789, %v973, 0.0
  %v1083 = vadd.f32 %v1081, %v1082
  %v1084 = vsel %vm789, %v974, 0.0
  %v1085 = vadd.f32 %v1083, %v1084
  %v1086 = vsel %vm789, %v975, 0.0
  %v1087 = vadd.f32 %v1085, %v1086
  %v1088 = vsel %vm789, %v976, 0.0
  %v1089 = vadd.f32 %v1087, %v1088
  %v1090 = vsel %vm789, %v977, 0.0
  %v1091 = vadd.f32 %v1089, %v1090
  %v1092 = vsel %vm789, %v978, 0.0
  %v1093 = vadd.f32 %v1091, %v1092
  %v1094 = vsel %vm789, %v979, 0.0
  %v1095 = vadd.f32 %v1093, %v1094
  %v1096 = vsel %vm789, %v980, 0.0
  %v1097 = vadd.f32 %v1095, %v1096
  %v1098 = vsel %vm789, %v981, 0.0
  %v1099 = vadd.f32 %v1097, %v1098
  %v1100 = vsel %vm789, %v982, 0.0
  %v1101 = vadd.f32 %v1099, %v1100
  %v1102 = vsel %vm789, %v983, 0.0
  %v1103 = vadd.f32 %v1101, %v1102
  %v1104 = vsel %vm789, %v984, 0.0
  %v1105 = vadd.f32 %v1103, %v1104
  %v1106 = vsel %vm789, %v985, 0.0
  %v1107 = vadd.f32 %v1105, %v1106
  %v1108 = vsel %vm789, %v986, 0.0
  %v1109 = vadd.f32 %v1107, %v1108
  %v1110 = vsel %vm789, %v987, 0.0
  %v1111 = vadd.f32 %v1109, %v1110
  %v1112 = vsel %vm789, %v988, 0.0
  %v1113 = vadd.f32 %v1111, %v1112
  %v1114 = vsel %vm789, %v989, 0.0
  %v1115 = vadd.f32 %v1113, %v1114
  %v1116 = vsel %vm789, %v990, 0.0
  %v1117 = vadd.f32 %v1115, %v1116
  %v1118 = vrot.slane %v1117, 4
  %v1119 = vadd.f32 %v1117, %v1118
  %v1120 = vrot.slane %v1119, 2
  %v1121 = vadd.f32 %v1119, %v1120
  %v1122 = vrot.slane %v1121, 1
  %v1123 = vadd.f32 %v1121, %v1122
  %v1124 = vadd.f32 %v926, %v1123
  %1125 = vst.msk [vmem:[%s6] sm:$0x1] %vm924, %v1124
  // Predicated region
  $region22: #{densenet_bottleneck_forward.2} parent=0 // pred_check
    _
  $region23: #{densenet_bottleneck_forward.2} parent=0 // pred_check_branch
    %1127 = sbr.rel (0) target = $region25
  $region24: #{densenet_bottleneck_forward.2} parent=0 // pred_region
    _
  $region25: #{densenet_bottleneck_forward.2} parent=0 // pred_fallthru
    _
  // Predicated region
  $region26: #{densenet_bottleneck_forward.2} parent=0 // pred_check
    _
  $region27: #{densenet_bottleneck_forward.2} parent=0 // pred_check_branch
    %1129 = sbr.rel (0) target = $region29
  $region28: #{densenet_bottleneck_forward.2} parent=0 // pred_region
    _
  $region29: #{densenet_bottleneck_forward.2} parent=0 // pred_fallthru
    _
  // Predicated region
  $region30: #{densenet_bottleneck_forward.2} parent=0 // pred_check
    _
  $region31: #{densenet_bottleneck_forward.2} parent=0 // pred_check_branch
    %1131 = sbr.rel (0) target = $region33
  $region32: #{densenet_bottleneck_forward.2} parent=0 // pred_region
    _
  $region33: #{densenet_bottleneck_forward.2} parent=0 // pred_fallthru
    _
  // Predicated region
  $region34: #{densenet_bottleneck_forward.2} parent=0 // pred_check
    _
  $region35: #{densenet_bottleneck_forward.2} parent=0 // pred_check_branch
    %1133 = sbr.rel (0) target = $region37
  $region36: #{densenet_bottleneck_forward.2} parent=0 // pred_region
    _
  $region37: #{densenet_bottleneck_forward.2} parent=0 // pred_fallthru
    _
  // Predicated region
  $region38: #{densenet_bottleneck_forward.2} parent=0 // pred_check
    _
  $region39: #{densenet_bottleneck_forward.2} parent=0 // pred_check_branch
    %1135 = sbr.rel (0) target = $region41
  $region40: #{densenet_bottleneck_forward.2} parent=0 // pred_region
    _
  $region41: #{densenet_bottleneck_forward.2} parent=0 // pred_fallthru
    _
  // Predicated region
  $region42: #{densenet_bottleneck_forward.2} parent=0 // pred_check
    _
  $region43: #{densenet_bottleneck_forward.2} parent=0 // pred_check_branch
    %1137 = sbr.rel (0) target = $region45
  $region44: #{densenet_bottleneck_forward.2} parent=0 // pred_region
    _
  $region45: #{densenet_bottleneck_forward.2} parent=0 // pred_fallthru
    _

// kernel: densenet_bottleneck_forward.3
$region0: #{densenet_bottleneck_forward.3}
  #allocation0 [shape = 'u32[]', space=smem, size = 0x4, offset = 0x4, fixed_abs, tag = 'smem constant byte address 0x4 - core index']
  #allocation1 [shape = 'u32[72,128]{1,0:T(1,128)}', space=vmem, size = 0x9000, scoped, tag = 'internal scratch']
  %s0 = inlined_call_operand.vmem [shape: bf16[2,256,16], index: 0, kind: input, shape index: {}]
  %s1 = inlined_call_operand.vmem [shape: f32[1,16], index: 1, kind: input, shape index: {}]
  %s2 = inlined_call_operand.vmem [shape: f32[1,16], index: 2, kind: input, shape index: {}]
  %s3 = inlined_call_operand.vmem [shape: bf16[9,16,4], index: 3, kind: input, shape index: {}]
  %s4 = inlined_call_operand.vmem [shape: f32[2,256,4], index: 4, kind: output, shape index: {}]
  %s5 = sld [smem:[#allocation0]]
  $region49: #{densenet_bottleneck_forward.3} parent=0
    _
  %s7 = ssub.s32 1, %s5
  %s8 = scalar_select 0, %s7, %s5
  loop: start=0, step=1, limit=4
  $region2: #{densenet_bottleneck_forward.3} parent=0 // loop_pre_header
    _
  $region3: #{densenet_bottleneck_forward.3} parent=0 // loop_header
    %s10 = sphi 0, %s14
    %p11 = scmp.ge.s32.totalorder %s10, 4
    %s20 = sphi 0, %s22
    %s23 = sphi 0, %s20
    %s24 = sphi 0, %s23
    %s40 = sphi 0, %s24
    %s44 = sphi 0, %s44
    %s46 = sphi 0, %s44
    %s47 = sphi 0, %s46
    %s61 = sphi 0, %s47
    %s65 = sphi 0, %s65
    %s67 = sphi 0, %s65
    %s68 = sphi 0, %s67
    %s82 = sphi 0, %s68
    %s86 = sphi 0, %s86
    %s88 = sphi 0, %s86
    %s89 = sphi 0, %s88
    %s103 = sphi 0, %s89
    %s109 = sphi 0, %s111
    %s112 = sphi 0, %s109
    %s113 = sphi 0, %s112
    %s129 = sphi 0, %s113
  $region4: #{densenet_bottleneck_forward.3} parent=0 // loop_header_branch
    %13 = sbr.rel (%p11) target = $region8
  $region5: #{densenet_bottleneck_forward.3} parent=0 // loop_body
    %s15 = ssub.s32 %s10, 1
    %s16 = ssub.s32 %s10, 2
    %s17 = sadd.s32 %s10, 1
    %s18 = ssub.s32 %s10, %s17
    %p19 = scmp.eq.s32.totalorder %s18, 0
    %s21 = sadd.s32 %s20, 1
    %s22 = scalar_select %p19, %s20, %s21
    %p25 = pneg %p19
    %p26 = scmp.eq.s32.totalorder %s10, 1
    %p27 = por %p25, %p26
    %p28 = scmp.ne.s32.totalorder %s20, %s23
    %p29 = scmp.eq.s32.totalorder %s10, 0
    %p30 = por %p28, %p29
    %p31 = scmp.ne.s32.totalorder %s20, %s23
    %p32 = scmp.eq.s32.totalorder %s15, 1
    %p33 = por %p31, %p32
    %p34 = scmp.ne.s32.totalorder %s23, %s24
    %p35 = scmp.eq.s32.totalorder %s15, 0
    %p36 = por %p34, %p35
    %p37 = scmp.ne.s32.totalorder %s23, %s24
    %p38 = scmp.eq.s32.totalorder %s16, 1
    %p39 = por %p37, %p38
    %p41 = scmp.ne.s32.totalorder %s24, %s40
    %p42 = scmp.eq.s32.totalorder %s16, 0
    %p43 = por %p41, %p42
    %s45 = sadd.s32 %s44, 1
    %p48 = scmp.eq.s32.totalorder %s10, 1
    %p49 = scmp.ne.s32.totalorder %s44, %s46
    %p50 = scmp.eq.s32.totalorder %s10, 0
    %p51 = por %p49, %p50
    %p52 = scmp.ne.s32.totalorder %s44, %s46
    %p53 = scmp.eq.s32.totalorder %s15, 1
    %p54 = por %p52, %p53
    %p55 = scmp.ne.s32.totalorder %s46, %s47
    %p56 = scmp.eq.s32.totalorder %s15, 0
    %p57 = por %p55, %p56
    %p58 = scmp.ne.s32.totalorder %s46, %s47
    %p59 = scmp.eq.s32.totalorder %s16, 1
    %p60 = por %p58, %p59
    %p62 = scmp.ne.s32.totalorder %s47, %s61
    %p63 = scmp.eq.s32.totalorder %s16, 0
    %p64 = por %p62, %p63
    %s66 = sadd.s32 %s65, 1
    %p69 = scmp.eq.s32.totalorder %s10, 1
    %p70 = scmp.ne.s32.totalorder %s65, %s67
    %p71 = scmp.eq.s32.totalorder %s10, 0
    %p72 = por %p70, %p71
    %p73 = scmp.ne.s32.totalorder %s65, %s67
    %p74 = scmp.eq.s32.totalorder %s15, 1
    %p75 = por %p73, %p74
    %p76 = scmp.ne.s32.totalorder %s67, %s68
    %p77 = scmp.eq.s32.totalorder %s15, 0
    %p78 = por %p76, %p77
    %p79 = scmp.ne.s32.totalorder %s67, %s68
    %p80 = scmp.eq.s32.totalorder %s16, 1
    %p81 = por %p79, %p80
    %p83 = scmp.ne.s32.totalorder %s68, %s82
    %p84 = scmp.eq.s32.totalorder %s16, 0
    %p85 = por %p83, %p84
    %s87 = sadd.s32 %s86, 1
    %p90 = scmp.eq.s32.totalorder %s10, 1
    %p91 = scmp.ne.s32.totalorder %s86, %s88
    %p92 = scmp.eq.s32.totalorder %s10, 0
    %p93 = por %p91, %p92
    %p94 = scmp.ne.s32.totalorder %s86, %s88
    %p95 = scmp.eq.s32.totalorder %s15, 1
    %p96 = por %p94, %p95
    %p97 = scmp.ne.s32.totalorder %s88, %s89
    %p98 = scmp.eq.s32.totalorder %s15, 0
    %p99 = por %p97, %p98
    %p100 = scmp.ne.s32.totalorder %s88, %s89
    %p101 = scmp.eq.s32.totalorder %s16, 1
    %p102 = por %p100, %p101
    %p104 = scmp.ne.s32.totalorder %s89, %s103
    %p105 = scmp.eq.s32.totalorder %s16, 0
    %p106 = por %p104, %p105
    %s107 = ssub.s32 %s10, %s17
    %p108 = scmp.eq.s32.totalorder %s107, 0
    %s110 = sadd.s32 %s109, 1
    %s111 = scalar_select %p108, %s109, %s110
    %p114 = pneg %p108
    %p115 = scmp.eq.s32.totalorder %s10, 1
    %p116 = por %p114, %p115
    %p117 = scmp.ne.s32.totalorder %s109, %s112
    %p118 = scmp.eq.s32.totalorder %s10, 0
    %p119 = por %p117, %p118
    %p120 = scmp.ne.s32.totalorder %s109, %s112
    %p121 = scmp.eq.s32.totalorder %s15, 1
    %p122 = por %p120, %p121
    %p123 = scmp.ne.s32.totalorder %s112, %s113
    %p124 = scmp.eq.s32.totalorder %s15, 0
    %p125 = por %p123, %p124
    %p126 = scmp.ne.s32.totalorder %s112, %s113
    %p127 = scmp.eq.s32.totalorder %s16, 1
    %p128 = por %p126, %p127
    %p130 = scmp.ne.s32.totalorder %s113, %s129
    %p131 = scmp.eq.s32.totalorder %s16, 0
    %p132 = por %p130, %p131
    %p133 = scmp.le.s32.totalorder 1, %s10
    %p134 = scmp.lt.s32.totalorder %s10, 3
    %p135 = pnand %p133, %p134
    %p136 = pneg %p135
    // Predicated region
    $region9: #{densenet_bottleneck_forward.3} parent=5 // pred_check
      _
    $region10: #{densenet_bottleneck_forward.3} parent=5 // pred_check_branch
      %138 = sbr.rel (%p135) target = $region12
    $region11: #{densenet_bottleneck_forward.3} parent=5 // pred_region
      %s139 = ssub.s32 %s10, 1
      // Predicated region
      $region13: #{densenet_bottleneck_forward.3} parent=11 // pred_check
        %p140 = pneg %p57
      $region14: #{densenet_bottleneck_forward.3} parent=11 // pred_check_branch
        %142 = sbr.rel (%p140) target = $region16
      $region15: #{densenet_bottleneck_forward.3} parent=11 // pred_region
        _
      $region16: #{densenet_bottleneck_forward.3} parent=11 // pred_fallthru
        _
      // Predicated region
      $region17: #{densenet_bottleneck_forward.3} parent=11 // pred_check
        %p143 = pneg %p78
      $region18: #{densenet_bottleneck_forward.3} parent=11 // pred_check_branch
        %145 = sbr.rel (%p143) target = $region20
      $region19: #{densenet_bottleneck_forward.3} parent=11 // pred_region
        _
      $region20: #{densenet_bottleneck_forward.3} parent=11 // pred_fallthru
        _
      // Predicated region
      $region21: #{densenet_bottleneck_forward.3} parent=11 // pred_check
        %p146 = pneg %p99
      $region22: #{densenet_bottleneck_forward.3} parent=11 // pred_check_branch
        %148 = sbr.rel (%p146) target = $region24
      $region23: #{densenet_bottleneck_forward.3} parent=11 // pred_region
        _
      $region24: #{densenet_bottleneck_forward.3} parent=11 // pred_fallthru
        _
    $region12: #{densenet_bottleneck_forward.3} parent=5 // pred_fallthru
      _
    %p149 = scmp.lt.s32.totalorder %s10, 2
    // Predicated region
    $region25: #{densenet_bottleneck_forward.3} parent=5 // pred_check
      %p150 = pneg %p149
    $region26: #{densenet_bottleneck_forward.3} parent=5 // pred_check_branch
      %152 = sbr.rel (%p150) target = $region28
    $region27: #{densenet_bottleneck_forward.3} parent=5 // pred_region
      // Predicated region
      $region29: #{densenet_bottleneck_forward.3} parent=27 // pred_check
        %p153 = pneg %p30
      $region30: #{densenet_bottleneck_forward.3} parent=27 // pred_check_branch
        %155 = sbr.rel (%p153) target = $region32
      $region31: #{densenet_bottleneck_forward.3} parent=27 // pred_region
        %p156 = scmp.lt.s32.totalorder %s10, 1
        %s157 = scalar_select %p156, %s10, 1
        %s158 = smul.addr %s157, 32
        %s159 = smul.addr %s158, 4
        %s160 = scalar_lea.vmem %s0, %s159
      $region32: #{densenet_bottleneck_forward.3} parent=27 // pred_fallthru
        _
    $region28: #{densenet_bottleneck_forward.3} parent=5 // pred_fallthru
      _
    %p161 = scmp.le.s32.totalorder 1, %s10
    %p162 = scmp.lt.s32.totalorder %s10, 3
    %p163 = pnand %p161, %p162
    %p164 = pneg %p163
    // Predicated region
    $region33: #{densenet_bottleneck_forward.3} parent=5 // pred_check
      _
    $region34: #{densenet_bottleneck_forward.3} parent=5 // pred_check_branch
      %166 = sbr.rel (%p163) target = $region36
    $region35: #{densenet_bottleneck_forward.3} parent=5 // pred_region
      %s167 = ssub.s32 %s10, 1
      %p168 = scmp.lt.s32.totalorder %s15, 1
      %s169 = scalar_select %p168, %s15, 1
      %s170 = smul.addr %s169, 32
      %s171 = smul.addr %s170, 4
      %s172 = scalar_lea.vmem %s0, %s171
      %p173 = pneg %p36
      %p174 = pneg %p33
      %p175 = pneg %p57
      %p176 = pneg %p54
      %p177 = pneg %p78
      %p178 = pneg %p75
      %p179 = pneg %p99
      %p180 = pneg %p96
      %p181 = pneg %p125
      %p182 = pneg %p122
      %p183 = scmp.lt.s32.totalorder %s15, 1
      %s184 = scalar_select %p183, %s15, 1
      %s185 = smul.addr %s184, 32
      %s186 = smul.addr %s185, 8
      %s187 = scalar_lea.vmem %s4, %s186
      %p188 = scmp.lt.s32.totalorder %s15, 1
      %s189 = scalar_select %p188, %s15, 1
      %s190 = smul.addr %s189, 32
      %s191 = smul.addr %s190, 4
      %s192 = scalar_lea.vmem %s0, %s191
      %p193 = scmp.lt.s32.totalorder %s15, 1
      %s194 = scalar_select %p193, %s15, 1
      %s195 = smul.addr %s194, 32
      %s196 = smul.addr %s195, 8
      %s197 = scalar_lea.vmem %s4, %s196
      %v201 = vld [vmem:[%s192] sm:$0xf]
      %v202 = vld [vmem:[%s192 + $0x4] sm:$0xf]
      %v203 = vld [vmem:[%s192 + $0x8] sm:$0xf]
      %v204 = vld [vmem:[%s192 + $0xc] sm:$0xf]
      %v205 = vld [vmem:[%s192 + $0x10] sm:$0xf]
      %v206 = vld [vmem:[%s192 + $0x14] sm:$0xf]
      %v207 = vld [vmem:[%s192 + $0x18] sm:$0xf]
      %v208 = vld [vmem:[%s192 + $0x1c] sm:$0xf]
      %v209 = vld [vmem:[%s192 + $0x20] sm:$0xf]
      %v210 = vld [vmem:[%s192 + $0x24] sm:$0xf]
      %v211 = vld [vmem:[%s192 + $0x28] sm:$0xf]
      %v212 = vld [vmem:[%s192 + $0x2c] sm:$0xf]
      %v213 = vld [vmem:[%s192 + $0x30] sm:$0xf]
      %v214 = vld [vmem:[%s192 + $0x34] sm:$0xf]
      %v215 = vld [vmem:[%s192 + $0x38] sm:$0xf]
      %v216 = vld [vmem:[%s192 + $0x3c] sm:$0xf]
      %v217 = vld [vmem:[%s192 + $0x40] sm:$0xf]
      %v218 = vld [vmem:[%s192 + $0x44] sm:$0xf]
      %v219 = vld [vmem:[%s192 + $0x48] sm:$0xf]
      %v220 = vld [vmem:[%s192 + $0x4c] sm:$0xf]
      %v221 = vld [vmem:[%s192 + $0x50] sm:$0xf]
      %v222 = vld [vmem:[%s192 + $0x54] sm:$0xf]
      %v223 = vld [vmem:[%s192 + $0x58] sm:$0xf]
      %v224 = vld [vmem:[%s192 + $0x5c] sm:$0xf]
      %v225 = vld [vmem:[%s192 + $0x60] sm:$0xf]
      %v226 = vld [vmem:[%s192 + $0x64] sm:$0xf]
      %v227 = vld [vmem:[%s192 + $0x68] sm:$0xf]
      %v228 = vld [vmem:[%s192 + $0x6c] sm:$0xf]
      %v229 = vld [vmem:[%s192 + $0x70] sm:$0xf]
      %v230 = vld [vmem:[%s192 + $0x74] sm:$0xf]
      %v231 = vld [vmem:[%s192 + $0x78] sm:$0xf]
      %v232 = vld [vmem:[%s192 + $0x7c] sm:$0xf]
      %v233 = vunpack.c.l.bf16 %v201
      %v234 = vunpack.c.l.bf16 %v202
      %v235 = vunpack.c.l.bf16 %v203
      %v236 = vunpack.c.l.bf16 %v204
      %v237 = vunpack.c.l.bf16 %v205
      %v238 = vunpack.c.l.bf16 %v206
      %v239 = vunpack.c.l.bf16 %v207
      %v240 = vunpack.c.l.bf16 %v208
      %v241 = vunpack.c.l.bf16 %v209
      %v242 = vunpack.c.l.bf16 %v210
      %v243 = vunpack.c.l.bf16 %v211
      %v244 = vunpack.c.l.bf16 %v212
      %v245 = vunpack.c.l.bf16 %v213
      %v246 = vunpack.c.l.bf16 %v214
      %v247 = vunpack.c.l.bf16 %v215
      %v248 = vunpack.c.l.bf16 %v216
      %v249 = vunpack.c.l.bf16 %v217
      %v250 = vunpack.c.l.bf16 %v218
      %v251 = vunpack.c.l.bf16 %v219
      %v252 = vunpack.c.l.bf16 %v220
      %v253 = vunpack.c.l.bf16 %v221
      %v254 = vunpack.c.l.bf16 %v222
      %v255 = vunpack.c.l.bf16 %v223
      %v256 = vunpack.c.l.bf16 %v224
      %v257 = vunpack.c.l.bf16 %v225
      %v258 = vunpack.c.l.bf16 %v226
      %v259 = vunpack.c.l.bf16 %v227
      %v260 = vunpack.c.l.bf16 %v228
      %v261 = vunpack.c.l.bf16 %v229
      %v262 = vunpack.c.l.bf16 %v230
      %v263 = vunpack.c.l.bf16 %v231
      %v264 = vunpack.c.l.bf16 %v232
      %v265 = vld [vmem:[%s1] sm:$0x1]
      %v267 = vperm.slane %v265, 0
      %v269 = vmul.f32 %v233, %v267
      %v270 = vmul.f32 %v234, %v267
      %v271 = vmul.f32 %v235, %v267
      %v272 = vmul.f32 %v236, %v267
      %v273 = vmul.f32 %v237, %v267
      %v274 = vmul.f32 %v238, %v267
      %v275 = vmul.f32 %v239, %v267
      %v276 = vmul.f32 %v240, %v267
      %v277 = vmul.f32 %v241, %v267
      %v278 = vmul.f32 %v242, %v267
      %v279 = vmul.f32 %v243, %v267
      %v280 = vmul.f32 %v244, %v267
      %v281 = vmul.f32 %v245, %v267
      %v282 = vmul.f32 %v246, %v267
      %v283 = vmul.f32 %v247, %v267
      %v284 = vmul.f32 %v248, %v267
      %v285 = vmul.f32 %v249, %v267
      %v286 = vmul.f32 %v250, %v267
      %v287 = vmul.f32 %v251, %v267
      %v288 = vmul.f32 %v252, %v267
      %v289 = vmul.f32 %v253, %v267
      %v290 = vmul.f32 %v254, %v267
      %v291 = vmul.f32 %v255, %v267
      %v292 = vmul.f32 %v256, %v267
      %v293 = vmul.f32 %v257, %v267
      %v294 = vmul.f32 %v258, %v267
      %v295 = vmul.f32 %v259, %v267
      %v296 = vmul.f32 %v260, %v267
      %v297 = vmul.f32 %v261, %v267
      %v298 = vmul.f32 %v262, %v267
      %v299 = vmul.f32 %v263, %v267
      %v300 = vmul.f32 %v264, %v267
      %v301 = vld [vmem:[%s2] sm:$0x1]
      %v303 = vperm.slane %v301, 0
      %v305 = vadd.f32 %v269, %v303
      %v306 = vadd.f32 %v270, %v303
      %v307 = vadd.f32 %v271, %v303
      %v308 = vadd.f32 %v272, %v303
      %v309 = vadd.f32 %v273, %v303
      %v310 = vadd.f32 %v274, %v303
      %v311 = vadd.f32 %v275, %v303
      %v312 = vadd.f32 %v276, %v303
      %v313 = vadd.f32 %v277, %v303
      %v314 = vadd.f32 %v278, %v303
      %v315 = vadd.f32 %v279, %v303
      %v316 = vadd.f32 %v280, %v303
      %v317 = vadd.f32 %v281, %v303
      %v318 = vadd.f32 %v282, %v303
      %v319 = vadd.f32 %v283, %v303
      %v320 = vadd.f32 %v284, %v303
      %v321 = vadd.f32 %v285, %v303
      %v322 = vadd.f32 %v286, %v303
      %v323 = vadd.f32 %v287, %v303
      %v324 = vadd.f32 %v288, %v303
      %v325 = vadd.f32 %v289, %v303
      %v326 = vadd.f32 %v290, %v303
      %v327 = vadd.f32 %v291, %v303
      %v328 = vadd.f32 %v292, %v303
      %v329 = vadd.f32 %v293, %v303
      %v330 = vadd.f32 %v294, %v303
      %v331 = vadd.f32 %v295, %v303
      %v332 = vadd.f32 %v296, %v303
      %v333 = vadd.f32 %v297, %v303
      %v334 = vadd.f32 %v298, %v303
      %v335 = vadd.f32 %v299, %v303
      %v336 = vadd.f32 %v300, %v303
      %v337 = vmax.f32 %v305, 0.0
      %v338 = vmax.f32 %v306, 0.0
      %v339 = vmax.f32 %v307, 0.0
      %v340 = vmax.f32 %v308, 0.0
      %v341 = vmax.f32 %v309, 0.0
      %v342 = vmax.f32 %v310, 0.0
      %v343 = vmax.f32 %v311, 0.0
      %v344 = vmax.f32 %v312, 0.0
      %v345 = vmax.f32 %v313, 0.0
      %v346 = vmax.f32 %v314, 0.0
      %v347 = vmax.f32 %v315, 0.0
      %v348 = vmax.f32 %v316, 0.0
      %v349 = vmax.f32 %v317, 0.0
      %v350 = vmax.f32 %v318, 0.0
      %v351 = vmax.f32 %v319, 0.0
      %v352 = vmax.f32 %v320, 0.0
      %v353 = vmax.f32 %v321, 0.0
      %v354 = vmax.f32 %v322, 0.0
      %v355 = vmax.f32 %v323, 0.0
      %v356 = vmax.f32 %v324, 0.0
      %v357 = vmax.f32 %v325, 0.0
      %v358 = vmax.f32 %v326, 0.0
      %v359 = vmax.f32 %v327, 0.0
      %v360 = vmax.f32 %v328, 0.0
      %v361 = vmax.f32 %v329, 0.0
      %v362 = vmax.f32 %v330, 0.0
      %v363 = vmax.f32 %v331, 0.0
      %v364 = vmax.f32 %v332, 0.0
      %v365 = vmax.f32 %v333, 0.0
      %v366 = vmax.f32 %v334, 0.0
      %v367 = vmax.f32 %v335, 0.0
      %v368 = vmax.f32 %v336, 0.0
      %v369 = vpack.c.bf16 %v337, %v337
      %v370 = vpack.c.bf16 %v338, %v338
      %v371 = vpack.c.bf16 %v339, %v339
      %v372 = vpack.c.bf16 %v340, %v340
      %v373 = vpack.c.bf16 %v341, %v341
      %v374 = vpack.c.bf16 %v342, %v342
      %v375 = vpack.c.bf16 %v343, %v343
      %v376 = vpack.c.bf16 %v344, %v344
      %v377 = vpack.c.bf16 %v345, %v345
      %v378 = vpack.c.bf16 %v346, %v346
      %v379 = vpack.c.bf16 %v347, %v347
      %v380 = vpack.c.bf16 %v348, %v348
      %v381 = vpack.c.bf16 %v349, %v349
      %v382 = vpack.c.bf16 %v350, %v350
      %v383 = vpack.c.bf16 %v351, %v351
      %v384 = vpack.c.bf16 %v352, %v352
      %v385 = vpack.c.bf16 %v353, %v353
      %v386 = vpack.c.bf16 %v354, %v354
      %v387 = vpack.c.bf16 %v355, %v355
      %v388 = vpack.c.bf16 %v356, %v356
      %v389 = vpack.c.bf16 %v357, %v357
      %v390 = vpack.c.bf16 %v358, %v358
      %v391 = vpack.c.bf16 %v359, %v359
      %v392 = vpack.c.bf16 %v360, %v360
      %v393 = vpack.c.bf16 %v361, %v361
      %v394 = vpack.c.bf16 %v362, %v362
      %v395 = vpack.c.bf16 %v363, %v363
      %v396 = vpack.c.bf16 %v364, %v364
      %v397 = vpack.c.bf16 %v365, %v365
      %v398 = vpack.c.bf16 %v366, %v366
      %v399 = vpack.c.bf16 %v367, %v367
      %v400 = vpack.c.bf16 %v368, %v368
      %v401 = vlaneseq
      %v402 = vshrl.u32 %v401, 7
      %v403 = vadd.s32 %v402, 8
      %v404 = vadd.s32 %v402, 16
      %v405 = vadd.s32 %v402, 24
      %v406 = vadd.s32 %v402, 32
      %v407 = vadd.s32 %v402, 40
      %v408 = vadd.s32 %v402, 48
      %v409 = vadd.s32 %v402, 56
      %v410 = vadd.s32 %v402, 64
      %v411 = vadd.s32 %v402, 72
      %v412 = vadd.s32 %v402, 80
      %v413 = vadd.s32 %v402, 88
      %v414 = vadd.s32 %v402, 96
      %v415 = vadd.s32 %v402, 104
      %v416 = vadd.s32 %v402, 112
      %v417 = vadd.s32 %v402, 120
      %v418 = vadd.s32 %v402, 128
      %v419 = vadd.s32 %v402, 136
      %v420 = vadd.s32 %v402, 144
      %v421 = vadd.s32 %v402, 152
      %v422 = vadd.s32 %v402, 160
      %v423 = vadd.s32 %v402, 168
      %v424 = vadd.s32 %v402, 176
      %v425 = vadd.s32 %v402, 184
      %v426 = vadd.s32 %v402, 192
      %v427 = vadd.s32 %v402, 200
      %v428 = vadd.s32 %v402, 208
      %v429 = vadd.s32 %v402, 216
      %v430 = vadd.s32 %v402, 224
      %v431 = vadd.s32 %v402, 232
      %v432 = vadd.s32 %v402, 240
      %v433 = vadd.s32 %v402, 248
      %vm434 = vcmp.lt.s32.totalorder %v402, 0
      %v435 = vsub.s32 0, %v402
      %v436 = vsel %vm434, %v435, %v402
      %v437 = vshrl.u32 %v436, 4
      %v438 = vand.u32 %v436, 15
      %v439 = vsub.s32 0, %v438
      %v440 = vsel %vm434, %v439, %v438
      %vm441 = vcmp.lt.s32.totalorder %v403, 0
      %v442 = vsub.s32 0, %v403
      %v443 = vsel %vm441, %v442, %v403
      %v444 = vshrl.u32 %v443, 4
      %v445 = vand.u32 %v443, 15
      %v446 = vsub.s32 0, %v445
      %v447 = vsel %vm441, %v446, %v445
      %vm448 = vcmp.lt.s32.totalorder %v404, 0
      %v449 = vsub.s32 0, %v404
      %v450 = vsel %vm448, %v449, %v404
      %v451 = vshrl.u32 %v450, 4
      %v452 = vand.u32 %v450, 15
      %v453 = vsub.s32 0, %v452
      %v454 = vsel %vm448, %v453, %v452
      %vm455 = vcmp.lt.s32.totalorder %v405, 0
      %v456 = vsub.s32 0, %v405
      %v457 = vsel %vm455, %v456, %v405
      %v458 = vshrl.u32 %v457, 4
      %v459 = vand.u32 %v457, 15
      %v460 = vsub.s32 0, %v459
      %v461 = vsel %vm455, %v460, %v459
      %vm462 = vcmp.lt.s32.totalorder %v406, 0
      %v463 = vsub.s32 0, %v406
      %v464 = vsel %vm462, %v463, %v406
      %v465 = vshrl.u32 %v464, 4
      %v466 = vand.u32 %v464, 15
      %v467 = vsub.s32 0, %v466
      %v468 = vsel %vm462, %v467, %v466
      %vm469 = vcmp.lt.s32.totalorder %v407, 0
      %v470 = vsub.s32 0, %v407
      %v471 = vsel %vm469, %v470, %v407
      %v472 = vshrl.u32 %v471, 4
      %v473 = vand.u32 %v471, 15
      %v474 = vsub.s32 0, %v473
      %v475 = vsel %vm469, %v474, %v473
      %vm476 = vcmp.lt.s32.totalorder %v408, 0
      %v477 = vsub.s32 0, %v408
      %v478 = vsel %vm476, %v477, %v408
      %v479 = vshrl.u32 %v478, 4
      %v480 = vand.u32 %v478, 15
      %v481 = vsub.s32 0, %v480
      %v482 = vsel %vm476, %v481, %v480
      %vm483 = vcmp.lt.s32.totalorder %v409, 0
      %v484 = vsub.s32 0, %v409
      %v485 = vsel %vm483, %v484, %v409
      %v486 = vshrl.u32 %v485, 4
      %v487 = vand.u32 %v485, 15
      %v488 = vsub.s32 0, %v487
      %v489 = vsel %vm483, %v488, %v487
      %vm490 = vcmp.lt.s32.totalorder %v410, 0
      %v491 = vsub.s32 0, %v410
      %v492 = vsel %vm490, %v491, %v410
      %v493 = vshrl.u32 %v492, 4
      %v494 = vand.u32 %v492, 15
      %v495 = vsub.s32 0, %v494
      %v496 = vsel %vm490, %v495, %v494
      %vm497 = vcmp.lt.s32.totalorder %v411, 0
      %v498 = vsub.s32 0, %v411
      %v499 = vsel %vm497, %v498, %v411
      %v500 = vshrl.u32 %v499, 4
      %v501 = vand.u32 %v499, 15
      %v502 = vsub.s32 0, %v501
      %v503 = vsel %vm497, %v502, %v501
      %vm504 = vcmp.lt.s32.totalorder %v412, 0
      %v505 = vsub.s32 0, %v412
      %v506 = vsel %vm504, %v505, %v412
      %v507 = vshrl.u32 %v506, 4
      %v508 = vand.u32 %v506, 15
      %v509 = vsub.s32 0, %v508
      %v510 = vsel %vm504, %v509, %v508
      %vm511 = vcmp.lt.s32.totalorder %v413, 0
      %v512 = vsub.s32 0, %v413
      %v513 = vsel %vm511, %v512, %v413
      %v514 = vshrl.u32 %v513, 4
      %v515 = vand.u32 %v513, 15
      %v516 = vsub.s32 0, %v515
      %v517 = vsel %vm511, %v516, %v515
      %vm518 = vcmp.lt.s32.totalorder %v414, 0
      %v519 = vsub.s32 0, %v414
      %v520 = vsel %vm518, %v519, %v414
      %v521 = vshrl.u32 %v520, 4
      %v522 = vand.u32 %v520, 15
      %v523 = vsub.s32 0, %v522
      %v524 = vsel %vm518, %v523, %v522
      %vm525 = vcmp.lt.s32.totalorder %v415, 0
      %v526 = vsub.s32 0, %v415
      %v527 = vsel %vm525, %v526, %v415
      %v528 = vshrl.u32 %v527, 4
      %v529 = vand.u32 %v527, 15
      %v530 = vsub.s32 0, %v529
      %v531 = vsel %vm525, %v530, %v529
      %vm532 = vcmp.lt.s32.totalorder %v416, 0
      %v533 = vsub.s32 0, %v416
      %v534 = vsel %vm532, %v533, %v416
      %v535 = vshrl.u32 %v534, 4
      %v536 = vand.u32 %v534, 15
      %v537 = vsub.s32 0, %v536
      %v538 = vsel %vm532, %v537, %v536
      %vm539 = vcmp.lt.s32.totalorder %v417, 0
      %v540 = vsub.s32 0, %v417
      %v541 = vsel %vm539, %v540, %v417
      %v542 = vshrl.u32 %v541, 4
      %v543 = vand.u32 %v541, 15
      %v544 = vsub.s32 0, %v543
      %v545 = vsel %vm539, %v544, %v543
      %vm546 = vcmp.lt.s32.totalorder %v418, 0
      %v547 = vsub.s32 0, %v418
      %v548 = vsel %vm546, %v547, %v418
      %v549 = vshrl.u32 %v548, 4
      %v550 = vand.u32 %v548, 15
      %v551 = vsub.s32 0, %v550
      %v552 = vsel %vm546, %v551, %v550
      %vm553 = vcmp.lt.s32.totalorder %v419, 0
      %v554 = vsub.s32 0, %v419
      %v555 = vsel %vm553, %v554, %v419
      %v556 = vshrl.u32 %v555, 4
      %v557 = vand.u32 %v555, 15
      %v558 = vsub.s32 0, %v557
      %v559 = vsel %vm553, %v558, %v557
      %vm560 = vcmp.lt.s32.totalorder %v420, 0
      %v561 = vsub.s32 0, %v420
      %v562 = vsel %vm560, %v561, %v420
      %v563 = vshrl.u32 %v562, 4
      %v564 = vand.u32 %v562, 15
      %v565 = vsub.s32 0, %v564
      %v566 = vsel %vm560, %v565, %v564
      %vm567 = vcmp.lt.s32.totalorder %v421, 0
      %v568 = vsub.s32 0, %v421
      %v569 = vsel %vm567, %v568, %v421
      %v570 = vshrl.u32 %v569, 4
      %v571 = vand.u32 %v569, 15
      %v572 = vsub.s32 0, %v571
      %v573 = vsel %vm567, %v572, %v571
      %vm574 = vcmp.lt.s32.totalorder %v422, 0
      %v575 = vsub.s32 0, %v422
      %v576 = vsel %vm574, %v575, %v422
      %v577 = vshrl.u32 %v576, 4
      %v578 = vand.u32 %v576, 15
      %v579 = vsub.s32 0, %v578
      %v580 = vsel %vm574, %v579, %v578
      %vm581 = vcmp.lt.s32.totalorder %v423, 0
      %v582 = vsub.s32 0, %v423
      %v583 = vsel %vm581, %v582, %v423
      %v584 = vshrl.u32 %v583, 4
      %v585 = vand.u32 %v583, 15
      %v586 = vsub.s32 0, %v585
      %v587 = vsel %vm581, %v586, %v585
      %vm588 = vcmp.lt.s32.totalorder %v424, 0
      %v589 = vsub.s32 0, %v424
      %v590 = vsel %vm588, %v589, %v424
      %v591 = vshrl.u32 %v590, 4
      %v592 = vand.u32 %v590, 15
      %v593 = vsub.s32 0, %v592
      %v594 = vsel %vm588, %v593, %v592
      %vm595 = vcmp.lt.s32.totalorder %v425, 0
      %v596 = vsub.s32 0, %v425
      %v597 = vsel %vm595, %v596, %v425
      %v598 = vshrl.u32 %v597, 4
      %v599 = vand.u32 %v597, 15
      %v600 = vsub.s32 0, %v599
      %v601 = vsel %vm595, %v600, %v599
      %vm602 = vcmp.lt.s32.totalorder %v426, 0
      %v603 = vsub.s32 0, %v426
      %v604 = vsel %vm602, %v603, %v426
      %v605 = vshrl.u32 %v604, 4
      %v606 = vand.u32 %v604, 15
      %v607 = vsub.s32 0, %v606
      %v608 = vsel %vm602, %v607, %v606
      %vm609 = vcmp.lt.s32.totalorder %v427, 0
      %v610 = vsub.s32 0, %v427
      %v611 = vsel %vm609, %v610, %v427
      %v612 = vshrl.u32 %v611, 4
      %v613 = vand.u32 %v611, 15
      %v614 = vsub.s32 0, %v613
      %v615 = vsel %vm609, %v614, %v613
      %vm616 = vcmp.lt.s32.totalorder %v428, 0
      %v617 = vsub.s32 0, %v428
      %v618 = vsel %vm616, %v617, %v428
      %v619 = vshrl.u32 %v618, 4
      %v620 = vand.u32 %v618, 15
      %v621 = vsub.s32 0, %v620
      %v622 = vsel %vm616, %v621, %v620
      %vm623 = vcmp.lt.s32.totalorder %v429, 0
      %v624 = vsub.s32 0, %v429
      %v625 = vsel %vm623, %v624, %v429
      %v626 = vshrl.u32 %v625, 4
      %v627 = vand.u32 %v625, 15
      %v628 = vsub.s32 0, %v627
      %v629 = vsel %vm623, %v628, %v627
      %vm630 = vcmp.lt.s32.totalorder %v430, 0
      %v631 = vsub.s32 0, %v430
      %v632 = vsel %vm630, %v631, %v430
      %v633 = vshrl.u32 %v632, 4
      %v634 = vand.u32 %v632, 15
      %v635 = vsub.s32 0, %v634
      %v636 = vsel %vm630, %v635, %v634
      %vm637 = vcmp.lt.s32.totalorder %v431, 0
      %v638 = vsub.s32 0, %v431
      %v639 = vsel %vm637, %v638, %v431
      %v640 = vshrl.u32 %v639, 4
      %v641 = vand.u32 %v639, 15
      %v642 = vsub.s32 0, %v641
      %v643 = vsel %vm637, %v642, %v641
      %vm644 = vcmp.lt.s32.totalorder %v432, 0
      %v645 = vsub.s32 0, %v432
      %v646 = vsel %vm644, %v645, %v432
      %v647 = vshrl.u32 %v646, 4
      %v648 = vand.u32 %v646, 15
      %v649 = vsub.s32 0, %v648
      %v650 = vsel %vm644, %v649, %v648
      %vm651 = vcmp.lt.s32.totalorder %v433, 0
      %v652 = vsub.s32 0, %v433
      %v653 = vsel %vm651, %v652, %v433
      %v654 = vshrl.u32 %v653, 4
      %v655 = vand.u32 %v653, 15
      %v656 = vsub.s32 0, %v655
      %v657 = vsel %vm651, %v656, %v655
      %vm658 = vcmp.ne.s32.totalorder %v440, 0
      %vm659 = vcmp.ne.s32.totalorder %v447, 0
      %vm660 = vcmp.ne.s32.totalorder %v454, 0
      %vm661 = vcmp.ne.s32.totalorder %v461, 0
      %vm662 = vcmp.ne.s32.totalorder %v468, 0
      %vm663 = vcmp.ne.s32.totalorder %v475, 0
      %vm664 = vcmp.ne.s32.totalorder %v482, 0
      %vm665 = vcmp.ne.s32.totalorder %v489, 0
      %vm666 = vcmp.ne.s32.totalorder %v496, 0
      %vm667 = vcmp.ne.s32.totalorder %v503, 0
      %vm668 = vcmp.ne.s32.totalorder %v510, 0
      %vm669 = vcmp.ne.s32.totalorder %v517, 0
      %vm670 = vcmp.ne.s32.totalorder %v524, 0
      %vm671 = vcmp.ne.s32.totalorder %v531, 0
      %vm672 = vcmp.ne.s32.totalorder %v538, 0
      %vm673 = vcmp.ne.s32.totalorder %v545, 0
      %vm674 = vcmp.ne.s32.totalorder %v552, 0
      %vm675 = vcmp.ne.s32.totalorder %v559, 0
      %vm676 = vcmp.ne.s32.totalorder %v566, 0
      %vm677 = vcmp.ne.s32.totalorder %v573, 0
      %vm678 = vcmp.ne.s32.totalorder %v580, 0
      %vm679 = vcmp.ne.s32.totalorder %v587, 0
      %vm680 = vcmp.ne.s32.totalorder %v594, 0
      %vm681 = vcmp.ne.s32.totalorder %v601, 0
      %vm682 = vcmp.ne.s32.totalorder %v608, 0
      %vm683 = vcmp.ne.s32.totalorder %v615, 0
      %vm684 = vcmp.ne.s32.totalorder %v622, 0
      %vm685 = vcmp.ne.s32.totalorder %v629, 0
      %vm686 = vcmp.ne.s32.totalorder %v636, 0
      %vm687 = vcmp.ne.s32.totalorder %v643, 0
      %vm688 = vcmp.ne.s32.totalorder %v650, 0
      %vm689 = vcmp.ne.s32.totalorder %v657, 0
      %vm690 = vcmp.lt.s32.totalorder %v440, 0
      %vm691 = vcmp.lt.s32.totalorder %v447, 0
      %vm692 = vcmp.lt.s32.totalorder %v454, 0
      %vm693 = vcmp.lt.s32.totalorder %v461, 0
      %vm694 = vcmp.lt.s32.totalorder %v468, 0
      %vm695 = vcmp.lt.s32.totalorder %v475, 0
      %vm696 = vcmp.lt.s32.totalorder %v482, 0
      %vm697 = vcmp.lt.s32.totalorder %v489, 0
      %vm698 = vcmp.lt.s32.totalorder %v496, 0
      %vm699 = vcmp.lt.s32.totalorder %v503, 0
      %vm700 = vcmp.lt.s32.totalorder %v510, 0
      %vm701 = vcmp.lt.s32.totalorder %v517, 0
      %vm702 = vcmp.lt.s32.totalorder %v524, 0
      %vm703 = vcmp.lt.s32.totalorder %v531, 0
      %vm704 = vcmp.lt.s32.totalorder %v538, 0
      %vm705 = vcmp.lt.s32.totalorder %v545, 0
      %vm706 = vcmp.lt.s32.totalorder %v552, 0
      %vm707 = vcmp.lt.s32.totalorder %v559, 0
      %vm708 = vcmp.lt.s32.totalorder %v566, 0
      %vm709 = vcmp.lt.s32.totalorder %v573, 0
      %vm710 = vcmp.lt.s32.totalorder %v580, 0
      %vm711 = vcmp.lt.s32.totalorder %v587, 0
      %vm712 = vcmp.lt.s32.totalorder %v594, 0
      %vm713 = vcmp.lt.s32.totalorder %v601, 0
      %vm714 = vcmp.lt.s32.totalorder %v608, 0
      %vm715 = vcmp.lt.s32.totalorder %v615, 0
      %vm716 = vcmp.lt.s32.totalorder %v622, 0
      %vm717 = vcmp.lt.s32.totalorder %v629, 0
      %vm718 = vcmp.lt.s32.totalorder %v636, 0
      %vm719 = vcmp.lt.s32.totalorder %v643, 0
      %vm720 = vcmp.lt.s32.totalorder %v650, 0
      %vm721 = vcmp.lt.s32.totalorder %v657, 0
      %vm722 = vmand %vm690, %vm658
      %vm723 = vmand %vm691, %vm659
      %vm724 = vmand %vm692, %vm660
      %vm725 = vmand %vm693, %vm661
      %vm726 = vmand %vm694, %vm662
      %vm727 = vmand %vm695, %vm663
      %vm728 = vmand %vm696, %vm664
      %vm729 = vmand %vm697, %vm665
      %vm730 = vmand %vm698, %vm666
      %vm731 = vmand %vm699, %vm667
      %vm732 = vmand %vm700, %vm668
      %vm733 = vmand %vm701, %vm669
      %vm734 = vmand %vm702, %vm670
      %vm735 = vmand %vm703, %vm671
      %vm736 = vmand %vm704, %vm672
      %vm737 = vmand %vm705, %vm673
      %vm738 = vmand %vm706, %vm674
      %vm739 = vmand %vm707, %vm675
      %vm740 = vmand %vm708, %vm676
      %vm741 = vmand %vm709, %vm677
      %vm742 = vmand %vm710, %vm678
      %vm743 = vmand %vm711, %vm679
      %vm744 = vmand %vm712, %vm680
      %vm745 = vmand %vm713, %vm681
      %vm746 = vmand %vm714, %vm682
      %vm747 = vmand %vm715, %vm683
      %vm748 = vmand %vm716, %vm684
      %vm749 = vmand %vm717, %vm685
      %vm750 = vmand %vm718, %vm686
      %vm751 = vmand %vm719, %vm687
      %vm752 = vmand %vm720, %vm688
      %vm753 = vmand %vm721, %vm689
      %v754 = vadd.s32 %v440, 16
      %v755 = vadd.s32 %v447, 16
      %v756 = vadd.s32 %v454, 16
      %v757 = vadd.s32 %v461, 16
      %v758 = vadd.s32 %v468, 16
      %v759 = vadd.s32 %v475, 16
      %v760 = vadd.s32 %v482, 16
      %v761 = vadd.s32 %v489, 16
      %v762 = vadd.s32 %v496, 16
      %v763 = vadd.s32 %v503, 16
      %v764 = vadd.s32 %v510, 16
      %v765 = vadd.s32 %v517, 16
      %v766 = vadd.s32 %v524, 16
      %v767 = vadd.s32 %v531, 16
      %v768 = vadd.s32 %v538, 16
      %v769 = vadd.s32 %v545, 16
      %v770 = vadd.s32 %v552, 16
      %v771 = vadd.s32 %v559, 16
      %v772 = vadd.s32 %v566, 16
      %v773 = vadd.s32 %v573, 16
      %v774 = vadd.s32 %v580, 16
      %v775 = vadd.s32 %v587, 16
      %v776 = vadd.s32 %v594, 16
      %v777 = vadd.s32 %v601, 16
      %v778 = vadd.s32 %v608, 16
      %v779 = vadd.s32 %v615, 16
      %v780 = vadd.s32 %v622, 16
      %v781 = vadd.s32 %v629, 16
      %v782 = vadd.s32 %v636, 16
      %v783 = vadd.s32 %v643, 16
      %v784 = vadd.s32 %v650, 16
      %v785 = vadd.s32 %v657, 16
      %v786 = vsel %vm722, %v754, %v440
      %v787 = vsel %vm723, %v755, %v447
      %v788 = vsel %vm724, %v756, %v454
      %v789 = vsel %vm725, %v757, %v461
      %v790 = vsel %vm726, %v758, %v468
      %v791 = vsel %vm727, %v759, %v475
      %v792 = vsel %vm728, %v760, %v482
      %v793 = vsel %vm729, %v761, %v489
      %v794 = vsel %vm730, %v762, %v496
      %v795 = vsel %vm731, %v763, %v503
      %v796 = vsel %vm732, %v764, %v510
      %v797 = vsel %vm733, %v765, %v517
      %v798 = vsel %vm734, %v766, %v524
      %v799 = vsel %vm735, %v767, %v531
      %v800 = vsel %vm736, %v768, %v538
      %v801 = vsel %vm737, %v769, %v545
      %v802 = vsel %vm738, %v770, %v552
      %v803 = vsel %vm739, %v771, %v559
      %v804 = vsel %vm740, %v772, %v566
      %v805 = vsel %vm741, %v773, %v573
      %v806 = vsel %vm742, %v774, %v580
      %v807 = vsel %vm743, %v775, %v587
      %v808 = vsel %vm744, %v776, %v594
      %v809 = vsel %vm745, %v777, %v601
      %v810 = vsel %vm746, %v778, %v608
      %v811 = vsel %vm747, %v779, %v615
      %v812 = vsel %vm748, %v780, %v622
      %v813 = vsel %vm749, %v781, %v629
      %v814 = vsel %vm750, %v782, %v636
      %v815 = vsel %vm751, %v783, %v643
      %v816 = vsel %vm752, %v784, %v650
      %v817 = vsel %vm753, %v785, %v657
      %v848 = vunpack.c.l.b16 %v369
      %v849 = vunpack.c.l.b16 %v370
      %v850 = vunpack.c.l.b16 %v371
      %v851 = vunpack.c.l.b16 %v372
      %v852 = vunpack.c.l.b16 %v373
      %v853 = vunpack.c.l.b16 %v374
      %v854 = vunpack.c.l.b16 %v375
      %v855 = vunpack.c.l.b16 %v376
      %v856 = vunpack.c.l.b16 %v377
      %v857 = vunpack.c.l.b16 %v378
      %v858 = vunpack.c.l.b16 %v379
      %v859 = vunpack.c.l.b16 %v380
      %v860 = vunpack.c.l.b16 %v381
      %v861 = vunpack.c.l.b16 %v382
      %v862 = vunpack.c.l.b16 %v383
      %v863 = vunpack.c.l.b16 %v384
      %v864 = vunpack.c.l.b16 %v385
      %v865 = vunpack.c.l.b16 %v386
      %v866 = vunpack.c.l.b16 %v387
      %v867 = vunpack.c.l.b16 %v388
      %v868 = vunpack.c.l.b16 %v389
      %v869 = vunpack.c.l.b16 %v390
      %v870 = vunpack.c.l.b16 %v391
      %v871 = vunpack.c.l.b16 %v392
      %v872 = vunpack.c.l.b16 %v393
      %v873 = vunpack.c.l.b16 %v394
      %v874 = vunpack.c.l.b16 %v395
      %v875 = vunpack.c.l.b16 %v396
      %v876 = vunpack.c.l.b16 %v397
      %v877 = vunpack.c.l.b16 %v398
      %v878 = vpack.c.b16 %v849, %v848
      %v879 = vpack.c.b16 %v851, %v850
      %v880 = vpack.c.b16 %v853, %v852
      %v881 = vpack.c.b16 %v855, %v854
      %v882 = vpack.c.b16 %v857, %v856
      %v883 = vpack.c.b16 %v859, %v858
      %v884 = vpack.c.b16 %v861, %v860
      %v885 = vpack.c.b16 %v863, %v862
      %v886 = vpack.c.b16 %v865, %v864
      %v887 = vpack.c.b16 %v867, %v866
      %v888 = vpack.c.b16 %v869, %v868
      %v889 = vpack.c.b16 %v871, %v870
      %v890 = vpack.c.b16 %v873, %v872
      %v891 = vpack.c.b16 %v875, %v874
      %v892 = vpack.c.b16 %v877, %v876
      %vm893 = vsmask.f32 256
      %v895 = vshrl.u32 %v878, 16
      %v897 = vrot.slane %v895, 7
      %v898 = vshll.u32 %v878, 16
      %v900 = vor.u32 %v897, %v898
      %v902 = vshrl.u32 %v879, 16
      %v904 = vrot.slane %v902, 7
      %v905 = vshll.u32 %v879, 16
      %v907 = vor.u32 %v904, %v905
      %v908 = vsel %vm893, %v897, %v907
      %v910 = vshrl.u32 %v880, 16
      %v912 = vrot.slane %v910, 7
      %v913 = vshll.u32 %v880, 16
      %v915 = vor.u32 %v912, %v913
      %v916 = vsel %vm893, %v904, %v915
      %v918 = vshrl.u32 %v881, 16
      %v920 = vrot.slane %v918, 7
      %v921 = vshll.u32 %v881, 16
      %v923 = vor.u32 %v920, %v921
      %v924 = vsel %vm893, %v912, %v923
      %v926 = vshrl.u32 %v882, 16
      %v928 = vrot.slane %v926, 7
      %v929 = vshll.u32 %v882, 16
      %v931 = vor.u32 %v928, %v929
      %v932 = vsel %vm893, %v920, %v931
      %v934 = vshrl.u32 %v883, 16
      %v936 = vrot.slane %v934, 7
      %v937 = vshll.u32 %v883, 16
      %v939 = vor.u32 %v936, %v937
      %v940 = vsel %vm893, %v928, %v939
      %v942 = vshrl.u32 %v884, 16
      %v944 = vrot.slane %v942, 7
      %v945 = vshll.u32 %v884, 16
      %v947 = vor.u32 %v944, %v945
      %v948 = vsel %vm893, %v936, %v947
      %v950 = vshrl.u32 %v885, 16
      %v952 = vrot.slane %v950, 7
      %v953 = vshll.u32 %v885, 16
      %v955 = vor.u32 %v952, %v953
      %v956 = vsel %vm893, %v944, %v955
      %v958 = vshrl.u32 %v886, 16
      %v960 = vrot.slane %v958, 7
      %v961 = vshll.u32 %v886, 16
      %v963 = vor.u32 %v960, %v961
      %v964 = vsel %vm893, %v952, %v963
      %v966 = vshrl.u32 %v887, 16
      %v968 = vrot.slane %v966, 7
      %v969 = vshll.u32 %v887, 16
      %v971 = vor.u32 %v968, %v969
      %v972 = vsel %vm893, %v960, %v971
      %v974 = vshrl.u32 %v888, 16
      %v976 = vrot.slane %v974, 7
      %v977 = vshll.u32 %v888, 16
      %v979 = vor.u32 %v976, %v977
      %v980 = vsel %vm893, %v968, %v979
      %v982 = vshrl.u32 %v889, 16
      %v984 = vrot.slane %v982, 7
      %v985 = vshll.u32 %v889, 16
      %v987 = vor.u32 %v984, %v985
      %v988 = vsel %vm893, %v976, %v987
      %v990 = vshrl.u32 %v890, 16
      %v992 = vrot.slane %v990, 7
      %v993 = vshll.u32 %v890, 16
      %v995 = vor.u32 %v992, %v993
      %v996 = vsel %vm893, %v984, %v995
      %v998 = vshrl.u32 %v891, 16
      %v1000 = vrot.slane %v998, 7
      %v1001 = vshll.u32 %v891, 16
      %v1003 = vor.u32 %v1000, %v1001
      %v1004 = vsel %vm893, %v992, %v1003
      %v1006 = vshrl.u32 %v892, 16
      %v1008 = vrot.slane %v1006, 7
      %v1009 = vshll.u32 %v892, 16
      %v1011 = vor.u32 %v1008, %v1009
      %v1012 = vsel %vm893, %v1000, %v1011
      %vm1028 = vcmask 1040384
      %vm1029 = vmand %vm1028, %vm893
      %v1030 = vsel %vm1029, 0, %v900
      %vm1031 = vcmp.ge.s32.totalorder %v786, 1
      %vm1032 = vcmp.ge.s32.totalorder %v787, 1
      %vm1033 = vcmp.ge.s32.totalorder %v788, 1
      %vm1034 = vcmp.ge.s32.totalorder %v789, 1
      %vm1035 = vcmp.ge.s32.totalorder %v790, 1
      %vm1036 = vcmp.ge.s32.totalorder %v791, 1
      %vm1037 = vcmp.ge.s32.totalorder %v792, 1
      %vm1038 = vcmp.ge.s32.totalorder %v793, 1
      %vm1039 = vcmp.ge.s32.totalorder %v794, 1
      %vm1040 = vcmp.ge.s32.totalorder %v795, 1
      %vm1041 = vcmp.ge.s32.totalorder %v796, 1
      %vm1042 = vcmp.ge.s32.totalorder %v797, 1
      %vm1043 = vcmp.ge.s32.totalorder %v798, 1
      %vm1044 = vcmp.ge.s32.totalorder %v799, 1
      %vm1045 = vcmp.ge.s32.totalorder %v800, 1
      %vm1046 = vcmp.ge.s32.totalorder %v801, 1
      %vm1047 = vcmp.ge.s32.totalorder %v802, 1
      %vm1048 = vcmp.ge.s32.totalorder %v803, 1
      %vm1049 = vcmp.ge.s32.totalorder %v804, 1
      %vm1050 = vcmp.ge.s32.totalorder %v805, 1
      %vm1051 = vcmp.ge.s32.totalorder %v806, 1
      %vm1052 = vcmp.ge.s32.totalorder %v807, 1
      %vm1053 = vcmp.ge.s32.totalorder %v808, 1
      %vm1054 = vcmp.ge.s32.totalorder %v809, 1
      %vm1055 = vcmp.ge.s32.totalorder %v810, 1
      %vm1056 = vcmp.ge.s32.totalorder %v811, 1
      %vm1057 = vcmp.ge.s32.totalorder %v812, 1
      %vm1058 = vcmp.ge.s32.totalorder %v813, 1
      %vm1059 = vcmp.ge.s32.totalorder %v814, 1
      %vm1060 = vcmp.ge.s32.totalorder %v815, 1
      %vm1061 = vcmp.ge.s32.totalorder %v816, 1
      %vm1062 = vcmp.ge.s32.totalorder %v817, 1
      %v1063 = vsel %vm1031, 1, 0
      %v1064 = vsel %vm1032, 1, 0
      %v1065 = vsel %vm1033, 1, 0
      %v1066 = vsel %vm1034, 1, 0
      %v1067 = vsel %vm1035, 1, 0
      %v1068 = vsel %vm1036, 1, 0
      %v1069 = vsel %vm1037, 1, 0
      %v1070 = vsel %vm1038, 1, 0
      %v1071 = vsel %vm1039, 1, 0
      %v1072 = vsel %vm1040, 1, 0
      %v1073 = vsel %vm1041, 1, 0
      %v1074 = vsel %vm1042, 1, 0
      %v1075 = vsel %vm1043, 1, 0
      %v1076 = vsel %vm1044, 1, 0
      %v1077 = vsel %vm1045, 1, 0
      %v1078 = vsel %vm1046, 1, 0
      %v1079 = vsel %vm1047, 1, 0
      %v1080 = vsel %vm1048, 1, 0
      %v1081 = vsel %vm1049, 1, 0
      %v1082 = vsel %vm1050, 1, 0
      %v1083 = vsel %vm1051, 1, 0
      %v1084 = vsel %vm1052, 1, 0
      %v1085 = vsel %vm1053, 1, 0
      %v1086 = vsel %vm1054, 1, 0
      %v1087 = vsel %vm1055, 1, 0
      %v1088 = vsel %vm1056, 1, 0
      %v1089 = vsel %vm1057, 1, 0
      %v1090 = vsel %vm1058, 1, 0
      %v1091 = vsel %vm1059, 1, 0
      %v1092 = vsel %vm1060, 1, 0
      %v1093 = vsel %vm1061, 1, 0
      %v1094 = vsel %vm1062, 1, 0
      %vm1095 = vcmp.eq.s32.totalorder %v1063, 1
      %vm1096 = vcmp.eq.s32.totalorder %v1064, 1
      %vm1097 = vcmp.eq.s32.totalorder %v1065, 1
      %vm1098 = vcmp.eq.s32.totalorder %v1066, 1
      %vm1099 = vcmp.eq.s32.totalorder %v1067, 1
      %vm1100 = vcmp.eq.s32.totalorder %v1068, 1
      %vm1101 = vcmp.eq.s32.totalorder %v1069, 1
      %vm1102 = vcmp.eq.s32.totalorder %v1070, 1
      %vm1103 = vcmp.eq.s32.totalorder %v1071, 1
      %vm1104 = vcmp.eq.s32.totalorder %v1072, 1
      %vm1105 = vcmp.eq.s32.totalorder %v1073, 1
      %vm1106 = vcmp.eq.s32.totalorder %v1074, 1
      %vm1107 = vcmp.eq.s32.totalorder %v1075, 1
      %vm1108 = vcmp.eq.s32.totalorder %v1076, 1
      %vm1109 = vcmp.eq.s32.totalorder %v1077, 1
      %vm1110 = vcmp.eq.s32.totalorder %v1078, 1
      %vm1111 = vcmp.eq.s32.totalorder %v1079, 1
      %vm1112 = vcmp.eq.s32.totalorder %v1080, 1
      %vm1113 = vcmp.eq.s32.totalorder %v1081, 1
      %vm1114 = vcmp.eq.s32.totalorder %v1082, 1
      %vm1115 = vcmp.eq.s32.totalorder %v1083, 1
      %vm1116 = vcmp.eq.s32.totalorder %v1084, 1
      %vm1117 = vcmp.eq.s32.totalorder %v1085, 1
      %vm1118 = vcmp.eq.s32.totalorder %v1086, 1
      %vm1119 = vcmp.eq.s32.totalorder %v1087, 1
      %vm1120 = vcmp.eq.s32.totalorder %v1088, 1
      %vm1121 = vcmp.eq.s32.totalorder %v1089, 1
      %vm1122 = vcmp.eq.s32.totalorder %v1090, 1
      %vm1123 = vcmp.eq.s32.totalorder %v1091, 1
      %vm1124 = vcmp.eq.s32.totalorder %v1092, 1
      %vm1125 = vcmp.eq.s32.totalorder %v1093, 1
      %vm1126 = vcmp.eq.s32.totalorder %v1094, 1
      %vm1127 = vmpackc.low %vm1097, %vm1097
      %vm1128 = vmpackc.low %vm1098, %vm1098
      %vm1129 = vmpackc.low %vm1099, %vm1099
      %vm1130 = vmpackc.low %vm1100, %vm1100
      %vm1131 = vmpackc.low %vm1101, %vm1101
      %vm1132 = vmpackc.low %vm1102, %vm1102
      %vm1133 = vmpackc.low %vm1103, %vm1103
      %vm1134 = vmpackc.low %vm1104, %vm1104
      %vm1135 = vmpackc.low %vm1105, %vm1105
      %vm1136 = vmpackc.low %vm1106, %vm1106
      %vm1137 = vmpackc.low %vm1107, %vm1107
      %vm1138 = vmpackc.low %vm1108, %vm1108
      %vm1139 = vmpackc.low %vm1109, %vm1109
      %vm1140 = vmpackc.low %vm1110, %vm1110
      %vm1141 = vmpackc.low %vm1111, %vm1111
      %vm1142 = vmpackc.low %vm1112, %vm1112
      %vm1143 = vmpackc.low %vm1113, %vm1113
      %vm1144 = vmpackc.low %vm1114, %vm1114
      %vm1145 = vmpackc.low %vm1115, %vm1115
      %vm1146 = vmpackc.low %vm1116, %vm1116
      %vm1147 = vmpackc.low %vm1117, %vm1117
      %vm1148 = vmpackc.low %vm1118, %vm1118
      %vm1149 = vmpackc.low %vm1119, %vm1119
      %vm1150 = vmpackc.low %vm1120, %vm1120
      %vm1151 = vmpackc.low %vm1121, %vm1121
      %vm1152 = vmpackc.low %vm1122, %vm1122
      %vm1153 = vmpackc.low %vm1123, %vm1123
      %vm1154 = vmpackc.low %vm1124, %vm1124
      %vm1155 = vmpackc.low %vm1125, %vm1125
      %vm1156 = vmpackc.low %vm1126, %vm1126
      %v1157 = vsel %vm1127, 65537, 0
      %v1158 = vsel %vm1128, 65537, 0
      %v1159 = vsel %vm1129, 65537, 0
      %v1160 = vsel %vm1130, 65537, 0
      %v1161 = vsel %vm1131, 65537, 0
      %v1162 = vsel %vm1132, 65537, 0
      %v1163 = vsel %vm1133, 65537, 0
      %v1164 = vsel %vm1134, 65537, 0
      %v1165 = vsel %vm1135, 65537, 0
      %v1166 = vsel %vm1136, 65537, 0
      %v1167 = vsel %vm1137, 65537, 0
      %v1168 = vsel %vm1138, 65537, 0
      %v1169 = vsel %vm1139, 65537, 0
      %v1170 = vsel %vm1140, 65537, 0
      %v1171 = vsel %vm1141, 65537, 0
      %v1172 = vsel %vm1142, 65537, 0
      %v1173 = vsel %vm1143, 65537, 0
      %v1174 = vsel %vm1144, 65537, 0
      %v1175 = vsel %vm1145, 65537, 0
      %v1176 = vsel %vm1146, 65537, 0
      %v1177 = vsel %vm1147, 65537, 0
      %v1178 = vsel %vm1148, 65537, 0
      %v1179 = vsel %vm1149, 65537, 0
      %v1180 = vsel %vm1150, 65537, 0
      %v1181 = vsel %vm1151, 65537, 0
      %v1182 = vsel %vm1152, 65537, 0
      %v1183 = vsel %vm1153, 65537, 0
      %v1184 = vsel %vm1154, 65537, 0
      %v1185 = vsel %vm1155, 65537, 0
      %v1186 = vsel %vm1156, 65537, 0
      %v1187 = vunpack.c.l.b16 %v1157
      %v1188 = vunpack.c.l.b16 %v1158
      %v1189 = vunpack.c.l.b16 %v1159
      %v1190 = vunpack.c.l.b16 %v1160
      %v1191 = vunpack.c.l.b16 %v1161
      %v1192 = vunpack.c.l.b16 %v1162
      %v1193 = vunpack.c.l.b16 %v1163
      %v1194 = vunpack.c.l.b16 %v1164
      %v1195 = vunpack.c.l.b16 %v1165
      %v1196 = vunpack.c.l.b16 %v1166
      %v1197 = vunpack.c.l.b16 %v1167
      %v1198 = vunpack.c.l.b16 %v1168
      %v1199 = vunpack.c.l.b16 %v1169
      %v1200 = vunpack.c.l.b16 %v1170
      %v1201 = vunpack.c.l.b16 %v1171
      %v1202 = vunpack.c.l.b16 %v1172
      %v1203 = vunpack.c.l.b16 %v1173
      %v1204 = vunpack.c.l.b16 %v1174
      %v1205 = vunpack.c.l.b16 %v1175
      %v1206 = vunpack.c.l.b16 %v1176
      %v1207 = vunpack.c.l.b16 %v1177
      %v1208 = vunpack.c.l.b16 %v1178
      %v1209 = vunpack.c.l.b16 %v1179
      %v1210 = vunpack.c.l.b16 %v1180
      %v1211 = vunpack.c.l.b16 %v1181
      %v1212 = vunpack.c.l.b16 %v1182
      %v1213 = vunpack.c.l.b16 %v1183
      %v1214 = vunpack.c.l.b16 %v1184
      %v1215 = vunpack.c.l.b16 %v1185
      %v1216 = vunpack.c.l.b16 %v1186
      %v1217 = vpack.c.b16 %v1188, %v1187
      %v1218 = vpack.c.b16 %v1190, %v1189
      %v1219 = vpack.c.b16 %v1192, %v1191
      %v1220 = vpack.c.b16 %v1194, %v1193
      %v1221 = vpack.c.b16 %v1196, %v1195
      %v1222 = vpack.c.b16 %v1198, %v1197
      %v1223 = vpack.c.b16 %v1200, %v1199
      %v1224 = vpack.c.b16 %v1202, %v1201
      %v1225 = vpack.c.b16 %v1204, %v1203
      %v1226 = vpack.c.b16 %v1206, %v1205
      %v1227 = vpack.c.b16 %v1208, %v1207
      %v1228 = vpack.c.b16 %v1210, %v1209
      %v1229 = vpack.c.b16 %v1212, %v1211
      %v1230 = vpack.c.b16 %v1214, %v1213
      %v1231 = vpack.c.b16 %v1216, %v1215
      %v1232 = vunpack.c.l.b16 %v1217
      %v1233 = vunpack.c.h.b16 %v1217
      %v1234 = vunpack.c.l.b16 0
      %v1235 = vunpack.c.h.b16 0
      %vm1236 = vcmp.ne.s32.totalorder %v1232, %v1234
      %vm1237 = vcmp.ne.s32.totalorder %v1233, %v1235
      %vm1238 = vmpackc.low %vm1237, %vm1236
      %v1239 = vunpack.c.l.b16 %v1218
      %v1240 = vunpack.c.h.b16 %v1218
      %v1241 = vunpack.c.l.b16 0
      %v1242 = vunpack.c.h.b16 0
      %vm1243 = vcmp.ne.s32.totalorder %v1239, %v1241
      %vm1244 = vcmp.ne.s32.totalorder %v1240, %v1242
      %vm1245 = vmpackc.low %vm1244, %vm1243
      %v1246 = vunpack.c.l.b16 %v1219
      %v1247 = vunpack.c.h.b16 %v1219
      %v1248 = vunpack.c.l.b16 0
      %v1249 = vunpack.c.h.b16 0
      %vm1250 = vcmp.ne.s32.totalorder %v1246, %v1248
      %vm1251 = vcmp.ne.s32.totalorder %v1247, %v1249
      %vm1252 = vmpackc.low %vm1251, %vm1250
      %v1253 = vunpack.c.l.b16 %v1220
      %v1254 = vunpack.c.h.b16 %v1220
      %v1255 = vunpack.c.l.b16 0
      %v1256 = vunpack.c.h.b16 0
      %vm1257 = vcmp.ne.s32.totalorder %v1253, %v1255
      %vm1258 = vcmp.ne.s32.totalorder %v1254, %v1256
      %vm1259 = vmpackc.low %vm1258, %vm1257
      %v1260 = vunpack.c.l.b16 %v1221
      %v1261 = vunpack.c.h.b16 %v1221
      %v1262 = vunpack.c.l.b16 0
      %v1263 = vunpack.c.h.b16 0
      %vm1264 = vcmp.ne.s32.totalorder %v1260, %v1262
      %vm1265 = vcmp.ne.s32.totalorder %v1261, %v1263
      %vm1266 = vmpackc.low %vm1265, %vm1264
      %v1267 = vunpack.c.l.b16 %v1222
      %v1268 = vunpack.c.h.b16 %v1222
      %v1269 = vunpack.c.l.b16 0
      %v1270 = vunpack.c.h.b16 0
      %vm1271 = vcmp.ne.s32.totalorder %v1267, %v1269
      %vm1272 = vcmp.ne.s32.totalorder %v1268, %v1270
      %vm1273 = vmpackc.low %vm1272, %vm1271
      %v1274 = vunpack.c.l.b16 %v1223
      %v1275 = vunpack.c.h.b16 %v1223
      %v1276 = vunpack.c.l.b16 0
      %v1277 = vunpack.c.h.b16 0
      %vm1278 = vcmp.ne.s32.totalorder %v1274, %v1276
      %vm1279 = vcmp.ne.s32.totalorder %v1275, %v1277
      %vm1280 = vmpackc.low %vm1279, %vm1278
      %v1281 = vunpack.c.l.b16 %v1224
      %v1282 = vunpack.c.h.b16 %v1224
      %v1283 = vunpack.c.l.b16 0
      %v1284 = vunpack.c.h.b16 0
      %vm1285 = vcmp.ne.s32.totalorder %v1281, %v1283
      %vm1286 = vcmp.ne.s32.totalorder %v1282, %v1284
      %vm1287 = vmpackc.low %vm1286, %vm1285
      %v1288 = vunpack.c.l.b16 %v1225
      %v1289 = vunpack.c.h.b16 %v1225
      %v1290 = vunpack.c.l.b16 0
      %v1291 = vunpack.c.h.b16 0
      %vm1292 = vcmp.ne.s32.totalorder %v1288, %v1290
      %vm1293 = vcmp.ne.s32.totalorder %v1289, %v1291
      %vm1294 = vmpackc.low %vm1293, %vm1292
      %v1295 = vunpack.c.l.b16 %v1226
      %v1296 = vunpack.c.h.b16 %v1226
      %v1297 = vunpack.c.l.b16 0
      %v1298 = vunpack.c.h.b16 0
      %vm1299 = vcmp.ne.s32.totalorder %v1295, %v1297
      %vm1300 = vcmp.ne.s32.totalorder %v1296, %v1298
      %vm1301 = vmpackc.low %vm1300, %vm1299
      %v1302 = vunpack.c.l.b16 %v1227
      %v1303 = vunpack.c.h.b16 %v1227
      %v1304 = vunpack.c.l.b16 0
      %v1305 = vunpack.c.h.b16 0
      %vm1306 = vcmp.ne.s32.totalorder %v1302, %v1304
      %vm1307 = vcmp.ne.s32.totalorder %v1303, %v1305
      %vm1308 = vmpackc.low %vm1307, %vm1306
      %v1309 = vunpack.c.l.b16 %v1228
      %v1310 = vunpack.c.h.b16 %v1228
      %v1311 = vunpack.c.l.b16 0
      %v1312 = vunpack.c.h.b16 0
      %vm1313 = vcmp.ne.s32.totalorder %v1309, %v1311
      %vm1314 = vcmp.ne.s32.totalorder %v1310, %v1312
      %vm1315 = vmpackc.low %vm1314, %vm1313
      %v1316 = vunpack.c.l.b16 %v1229
      %v1317 = vunpack.c.h.b16 %v1229
      %v1318 = vunpack.c.l.b16 0
      %v1319 = vunpack.c.h.b16 0
      %vm1320 = vcmp.ne.s32.totalorder %v1316, %v1318
      %vm1321 = vcmp.ne.s32.totalorder %v1317, %v1319
      %vm1322 = vmpackc.low %vm1321, %vm1320
      %v1323 = vunpack.c.l.b16 %v1230
      %v1324 = vunpack.c.h.b16 %v1230
      %v1325 = vunpack.c.l.b16 0
      %v1326 = vunpack.c.h.b16 0
      %vm1327 = vcmp.ne.s32.totalorder %v1323, %v1325
      %vm1328 = vcmp.ne.s32.totalorder %v1324, %v1326
      %vm1329 = vmpackc.low %vm1328, %vm1327
      %v1330 = vunpack.c.l.b16 %v1231
      %v1331 = vunpack.c.h.b16 %v1231
      %v1332 = vunpack.c.l.b16 0
      %v1333 = vunpack.c.h.b16 0
      %vm1334 = vcmp.ne.s32.totalorder %v1330, %v1332
      %vm1335 = vcmp.ne.s32.totalorder %v1331, %v1333
      %vm1336 = vmpackc.low %vm1335, %vm1334
      %v1337 = vsel %vm1238, %v1030, 0
      %v1338 = vsel %vm1245, %v908, 0
      %v1339 = vsel %vm1252, %v916, 0
      %v1340 = vsel %vm1259, %v924, 0
      %v1341 = vsel %vm1266, %v932, 0
      %v1342 = vsel %vm1273, %v940, 0
      %v1343 = vsel %vm1280, %v948, 0
      %v1344 = vsel %vm1287, %v956, 0
      %v1345 = vsel %vm1294, %v964, 0
      %v1346 = vsel %vm1301, %v972, 0
      %v1347 = vsel %vm1308, %v980, 0
      %v1348 = vsel %vm1315, %v988, 0
      %v1349 = vsel %vm1322, %v996, 0
      %v1350 = vsel %vm1329, %v1004, 0
      %v1351 = vsel %vm1336, %v1012, 0
      %v1352 = vld [vmem:[%s3] sm:$0xf]
      %v1353 = vld [vmem:[%s3 + $0x4] sm:$0xf]
      %s1354 = scalar_lea.vmem %s3, 8
      %v1355 = vld [vmem:[%s1354] sm:$0xf]
      %v1356 = vld [vmem:[%s1354 + $0x4] sm:$0xf]
      %v1359 = vunpack.c.l.b16 %v1355
      %v1360 = vunpack.c.l.b16 %v1356
      %v1361 = vpack.c.b16 %v1360, %v1359
      %vm1363 = vcmask 130048
      %v1365 = vsel %vm1363, 0, 0
      %v1367 = vsel %vm1363, %v878, 0
      %v1369 = vsel %vm1363, %v879, 0
      %v1371 = vsel %vm1363, %v880, 0
      %v1373 = vsel %vm1363, %v881, 0
      %v1375 = vsel %vm1363, %v882, 0
      %v1377 = vsel %vm1363, %v883, 0
      %v1379 = vsel %vm1363, %v884, 0
      %v1381 = vsel %vm1363, %v885, 0
      %v1383 = vsel %vm1363, %v886, 0
      %v1385 = vsel %vm1363, %v887, 0
      %v1387 = vsel %vm1363, %v888, 0
      %v1389 = vsel %vm1363, %v889, 0
      %v1391 = vsel %vm1363, %v890, 0
      %v1393 = vsel %vm1363, %v891, 0
      %v1395 = vsel %vm1363, %v892, 0
      %1397 = vmatpush.bf16.msra.mxu0 0
      %1398 = vmatpush.bf16.msra.mxu0 0
      %1399 = vmatpush.bf16.msra.mxu0 0
      %1400 = vmatpush.bf16.msra.mxu0 0
      %1401 = vmatpush.bf16.msra.mxu0 0
      %1402 = vmatpush.bf16.msra.mxu0 0
      %1403 = vmatpush.bf16.msra.mxu0 0
      %1404 = vmatpush.bf16.msra.mxu0 %v1361
      %1405 = vmatmul.bf16.gmra.mxu0 %v1365
      %v1406 = vpop.f32.mrf.mxu0
      %v1407 = vadd.f32 0.0, %v1406
      %v1408 = vpop.f32.mrf.mxu0
      %v1409 = vadd.f32 0.0, %v1408
      %1410 = vmatmul.bf16.gmra.mxu0 %v1367
      %v1411 = vpop.f32.mrf.mxu0
      %v1412 = vadd.f32 0.0, %v1411
      %v1413 = vpop.f32.mrf.mxu0
      %v1414 = vadd.f32 0.0, %v1413
      %1415 = vmatmul.bf16.gmra.mxu0 %v1369
      %v1416 = vpop.f32.mrf.mxu0
      %v1417 = vadd.f32 0.0, %v1416
      %v1418 = vpop.f32.mrf.mxu0
      %v1419 = vadd.f32 0.0, %v1418
      %1420 = vmatmul.bf16.gmra.mxu0 %v1371
      %v1421 = vpop.f32.mrf.mxu0
      %v1422 = vadd.f32 0.0, %v1421
      %v1423 = vpop.f32.mrf.mxu0
      %v1424 = vadd.f32 0.0, %v1423
      %1425 = vmatmul.bf16.gmra.mxu0 %v1373
      %v1426 = vpop.f32.mrf.mxu0
      %v1427 = vadd.f32 0.0, %v1426
      %v1428 = vpop.f32.mrf.mxu0
      %v1429 = vadd.f32 0.0, %v1428
      %1430 = vmatmul.bf16.gmra.mxu0 %v1375
      %v1431 = vpop.f32.mrf.mxu0
      %v1432 = vadd.f32 0.0, %v1431
      %v1433 = vpop.f32.mrf.mxu0
      %v1434 = vadd.f32 0.0, %v1433
      %1435 = vmatmul.bf16.gmra.mxu0 %v1377
      %v1436 = vpop.f32.mrf.mxu0
      %v1437 = vadd.f32 0.0, %v1436
      %v1438 = vpop.f32.mrf.mxu0
      %v1439 = vadd.f32 0.0, %v1438
      %1440 = vmatmul.bf16.gmra.mxu0 %v1379
      %v1441 = vpop.f32.mrf.mxu0
      %v1442 = vadd.f32 0.0, %v1441
      %v1443 = vpop.f32.mrf.mxu0
      %v1444 = vadd.f32 0.0, %v1443
      %1445 = vmatmul.bf16.gmra.mxu0 %v1381
      %v1446 = vpop.f32.mrf.mxu0
      %v1447 = vadd.f32 0.0, %v1446
      %v1448 = vpop.f32.mrf.mxu0
      %v1449 = vadd.f32 0.0, %v1448
      %1450 = vmatmul.bf16.gmra.mxu0 %v1383
      %v1451 = vpop.f32.mrf.mxu0
      %v1452 = vadd.f32 0.0, %v1451
      %v1453 = vpop.f32.mrf.mxu0
      %v1454 = vadd.f32 0.0, %v1453
      %1455 = vmatmul.bf16.gmra.mxu0 %v1385
      %v1456 = vpop.f32.mrf.mxu0
      %v1457 = vadd.f32 0.0, %v1456
      %v1458 = vpop.f32.mrf.mxu0
      %v1459 = vadd.f32 0.0, %v1458
      %1460 = vmatmul.bf16.gmra.mxu0 %v1387
      %v1461 = vpop.f32.mrf.mxu0
      %v1462 = vadd.f32 0.0, %v1461
      %v1463 = vpop.f32.mrf.mxu0
      %v1464 = vadd.f32 0.0, %v1463
      %1465 = vmatmul.bf16.gmra.mxu0 %v1389
      %v1466 = vpop.f32.mrf.mxu0
      %v1467 = vadd.f32 0.0, %v1466
      %v1468 = vpop.f32.mrf.mxu0
      %v1469 = vadd.f32 0.0, %v1468
      %1470 = vmatmul.bf16.gmra.mxu0 %v1391
      %v1471 = vpop.f32.mrf.mxu0
      %v1472 = vadd.f32 0.0, %v1471
      %v1473 = vpop.f32.mrf.mxu0
      %v1474 = vadd.f32 0.0, %v1473
      %1475 = vmatmul.bf16.gmra.mxu0 %v1393
      %v1476 = vpop.f32.mrf.mxu0
      %v1477 = vadd.f32 0.0, %v1476
      %v1478 = vpop.f32.mrf.mxu0
      %v1479 = vadd.f32 0.0, %v1478
      %1480 = vmatmul.bf16.gmra.mxu0 %v1395
      %v1481 = vpop.f32.mrf.mxu0
      %v1482 = vadd.f32 0.0, %v1481
      %v1483 = vpop.f32.mrf.mxu0
      %v1484 = vadd.f32 0.0, %v1483
      %1485 = vdwg.mxu0
      %v1488 = vunpack.c.l.b16 %v1352
      %v1489 = vunpack.c.l.b16 %v1353
      %v1490 = vpack.c.b16 %v1489, %v1488
      %v1493 = vsel %vm1363, %v1337, 0
      %v1496 = vsel %vm1363, %v1338, 0
      %v1499 = vsel %vm1363, %v1339, 0
      %v1502 = vsel %vm1363, %v1340, 0
      %v1505 = vsel %vm1363, %v1341, 0
      %v1508 = vsel %vm1363, %v1342, 0
      %v1511 = vsel %vm1363, %v1343, 0
      %v1514 = vsel %vm1363, %v1344, 0
      %v1517 = vsel %vm1363, %v1345, 0
      %v1520 = vsel %vm1363, %v1346, 0
      %v1523 = vsel %vm1363, %v1347, 0
      %v1526 = vsel %vm1363, %v1348, 0
      %v1529 = vsel %vm1363, %v1349, 0
      %v1532 = vsel %vm1363, %v1350, 0
      %v1535 = vsel %vm1363, %v1351, 0
      %1537 = vmatpush.bf16.msra.mxu0 0
      %1538 = vmatpush.bf16.msra.mxu0 0
      %1539 = vmatpush.bf16.msra.mxu0 0
      %1540 = vmatpush.bf16.msra.mxu0 0
      %1541 = vmatpush.bf16.msra.mxu0 0
      %1542 = vmatpush.bf16.msra.mxu0 0
      %1543 = vmatpush.bf16.msra.mxu0 0
      %1544 = vmatpush.bf16.msra.mxu0 %v1490
      %1545 = vmatmul.bf16.gmra.mxu0 %v1365
      %v1546 = vpop.f32.mrf.mxu0
      %v1547 = vadd.f32 %v1407, %v1546
      %v1548 = vpop.f32.mrf.mxu0
      %v1549 = vadd.f32 %v1409, %v1548
      %1550 = vmatmul.bf16.gmra.mxu0 %v1493
      %v1551 = vpop.f32.mrf.mxu0
      %v1552 = vadd.f32 %v1412, %v1551
      %v1553 = vpop.f32.mrf.mxu0
      %v1554 = vadd.f32 %v1414, %v1553
      %1555 = vmatmul.bf16.gmra.mxu0 %v1496
      %v1556 = vpop.f32.mrf.mxu0
      %v1557 = vadd.f32 %v1417, %v1556
      %v1558 = vpop.f32.mrf.mxu0
      %v1559 = vadd.f32 %v1419, %v1558
      %1560 = vmatmul.bf16.gmra.mxu0 %v1499
      %v1561 = vpop.f32.mrf.mxu0
      %v1562 = vadd.f32 %v1422, %v1561
      %v1563 = vpop.f32.mrf.mxu0
      %v1564 = vadd.f32 %v1424, %v1563
      %1565 = vmatmul.bf16.gmra.mxu0 %v1502
      %v1566 = vpop.f32.mrf.mxu0
      %v1567 = vadd.f32 %v1427, %v1566
      %v1568 = vpop.f32.mrf.mxu0
      %v1569 = vadd.f32 %v1429, %v1568
      %1570 = vmatmul.bf16.gmra.mxu0 %v1505
      %v1571 = vpop.f32.mrf.mxu0
      %v1572 = vadd.f32 %v1432, %v1571
      %v1573 = vpop.f32.mrf.mxu0
      %v1574 = vadd.f32 %v1434, %v1573
      %1575 = vmatmul.bf16.gmra.mxu0 %v1508
      %v1576 = vpop.f32.mrf.mxu0
      %v1577 = vadd.f32 %v1437, %v1576
      %v1578 = vpop.f32.mrf.mxu0
      %v1579 = vadd.f32 %v1439, %v1578
      %1580 = vmatmul.bf16.gmra.mxu0 %v1511
      %v1581 = vpop.f32.mrf.mxu0
      %v1582 = vadd.f32 %v1442, %v1581
      %v1583 = vpop.f32.mrf.mxu0
      %v1584 = vadd.f32 %v1444, %v1583
      %1585 = vmatmul.bf16.gmra.mxu0 %v1514
      %v1586 = vpop.f32.mrf.mxu0
      %v1587 = vadd.f32 %v1447, %v1586
      %v1588 = vpop.f32.mrf.mxu0
      %v1589 = vadd.f32 %v1449, %v1588
      %1590 = vmatmul.bf16.gmra.mxu0 %v1517
      %v1591 = vpop.f32.mrf.mxu0
      %v1592 = vadd.f32 %v1452, %v1591
      %v1593 = vpop.f32.mrf.mxu0
      %v1594 = vadd.f32 %v1454, %v1593
      %1595 = vmatmul.bf16.gmra.mxu0 %v1520
      %v1596 = vpop.f32.mrf.mxu0
      %v1597 = vadd.f32 %v1457, %v1596
      %v1598 = vpop.f32.mrf.mxu0
      %v1599 = vadd.f32 %v1459, %v1598
      %1600 = vmatmul.bf16.gmra.mxu0 %v1523
      %v1601 = vpop.f32.mrf.mxu0
      %v1602 = vadd.f32 %v1462, %v1601
      %v1603 = vpop.f32.mrf.mxu0
      %v1604 = vadd.f32 %v1464, %v1603
      %1605 = vmatmul.bf16.gmra.mxu0 %v1526
      %v1606 = vpop.f32.mrf.mxu0
      %v1607 = vadd.f32 %v1467, %v1606
      %v1608 = vpop.f32.mrf.mxu0
      %v1609 = vadd.f32 %v1469, %v1608
      %1610 = vmatmul.bf16.gmra.mxu0 %v1529
      %v1611 = vpop.f32.mrf.mxu0
      %v1612 = vadd.f32 %v1472, %v1611
      %v1613 = vpop.f32.mrf.mxu0
      %v1614 = vadd.f32 %v1474, %v1613
      %1615 = vmatmul.bf16.gmra.mxu0 %v1532
      %v1616 = vpop.f32.mrf.mxu0
      %v1617 = vadd.f32 %v1477, %v1616
      %v1618 = vpop.f32.mrf.mxu0
      %v1619 = vadd.f32 %v1479, %v1618
      %1620 = vmatmul.bf16.gmra.mxu0 %v1535
      %v1621 = vpop.f32.mrf.mxu0
      %v1622 = vadd.f32 %v1482, %v1621
      %v1623 = vpop.f32.mrf.mxu0
      %v1624 = vadd.f32 %v1484, %v1623
      %1625 = vdwg.mxu0
      %v1627 = vunpack.c.l.b16 %v399
      %v1628 = vpack.c.b16 %v1627, %v1627
      %vm1629 = vsmask.f32 7424
      %v1630 = vrot.slane %v898, 1
      %v1631 = vor.u32 %v895, %v1630
      %v1632 = vrot.slane %v905, 1
      %v1633 = vsel %vm1629, %v1631, %v1632
      %v1634 = vor.u32 %v902, %v1632
      %v1635 = vrot.slane %v913, 1
      %v1636 = vsel %vm1629, %v1634, %v1635
      %v1637 = vor.u32 %v910, %v1635
      %v1638 = vrot.slane %v921, 1
      %v1639 = vsel %vm1629, %v1637, %v1638
      %v1640 = vor.u32 %v918, %v1638
      %v1641 = vrot.slane %v929, 1
      %v1642 = vsel %vm1629, %v1640, %v1641
      %v1643 = vor.u32 %v926, %v1641
      %v1644 = vrot.slane %v937, 1
      %v1645 = vsel %vm1629, %v1643, %v1644
      %v1646 = vor.u32 %v934, %v1644
      %v1647 = vrot.slane %v945, 1
      %v1648 = vsel %vm1629, %v1646, %v1647
      %v1649 = vor.u32 %v942, %v1647
      %v1650 = vrot.slane %v953, 1
      %v1651 = vsel %vm1629, %v1649, %v1650
      %v1652 = vor.u32 %v950, %v1650
      %v1653 = vrot.slane %v961, 1
      %v1654 = vsel %vm1629, %v1652, %v1653
      %v1655 = vor.u32 %v958, %v1653
      %v1656 = vrot.slane %v969, 1
      %v1657 = vsel %vm1629, %v1655, %v1656
      %v1658 = vor.u32 %v966, %v1656
      %v1659 = vrot.slane %v977, 1
      %v1660 = vsel %vm1629, %v1658, %v1659
      %v1661 = vor.u32 %v974, %v1659
      %v1662 = vrot.slane %v985, 1
      %v1663 = vsel %vm1629, %v1661, %v1662
      %v1664 = vor.u32 %v982, %v1662
      %v1665 = vrot.slane %v993, 1
      %v1666 = vsel %vm1629, %v1664, %v1665
      %v1667 = vor.u32 %v990, %v1665
      %v1668 = vrot.slane %v1001, 1
      %v1669 = vsel %vm1629, %v1667, %v1668
      %v1670 = vor.u32 %v998, %v1668
      %v1671 = vrot.slane %v1009, 1
      %v1672 = vsel %vm1629, %v1670, %v1671
      %v1673 = vor.u32 %v1006, %v1671
      %v1675 = vshll.u32 %v1628, 16
      %v1677 = vrot.slane %v1675, 1
      %v1678 = vsel %vm1629, %v1673, %v1677
      %vm1695 = vcmask 1047552
      %vm1696 = vmand %vm1695, %vm1629
      %v1697 = vsel %vm1696, 0, %v1630
      %vm1698 = vcmp.lt.s32.totalorder %v786, 15
      %vm1699 = vcmp.lt.s32.totalorder %v787, 15
      %vm1700 = vcmp.lt.s32.totalorder %v788, 15
      %vm1701 = vcmp.lt.s32.totalorder %v789, 15
      %vm1702 = vcmp.lt.s32.totalorder %v790, 15
      %vm1703 = vcmp.lt.s32.totalorder %v791, 15
      %vm1704 = vcmp.lt.s32.totalorder %v792, 15
      %vm1705 = vcmp.lt.s32.totalorder %v793, 15
      %vm1706 = vcmp.lt.s32.totalorder %v794, 15
      %vm1707 = vcmp.lt.s32.totalorder %v795, 15
      %vm1708 = vcmp.lt.s32.totalorder %v796, 15
      %vm1709 = vcmp.lt.s32.totalorder %v797, 15
      %vm1710 = vcmp.lt.s32.totalorder %v798, 15
      %vm1711 = vcmp.lt.s32.totalorder %v799, 15
      %vm1712 = vcmp.lt.s32.totalorder %v800, 15
      %vm1713 = vcmp.lt.s32.totalorder %v801, 15
      %vm1714 = vcmp.lt.s32.totalorder %v802, 15
      %vm1715 = vcmp.lt.s32.totalorder %v803, 15
      %vm1716 = vcmp.lt.s32.totalorder %v804, 15
      %vm1717 = vcmp.lt.s32.totalorder %v805, 15
      %vm1718 = vcmp.lt.s32.totalorder %v806, 15
      %vm1719 = vcmp.lt.s32.totalorder %v807, 15
      %vm1720 = vcmp.lt.s32.totalorder %v808, 15
      %vm1721 = vcmp.lt.s32.totalorder %v809, 15
      %vm1722 = vcmp.lt.s32.totalorder %v810, 15
      %vm1723 = vcmp.lt.s32.totalorder %v811, 15
      %vm1724 = vcmp.lt.s32.totalorder %v812, 15
      %vm1725 = vcmp.lt.s32.totalorder %v813, 15
      %vm1726 = vcmp.lt.s32.totalorder %v814, 15
      %vm1727 = vcmp.lt.s32.totalorder %v815, 15
      %vm1728 = vcmp.lt.s32.totalorder %v816, 15
      %vm1729 = vcmp.lt.s32.totalorder %v817, 15
      %v1730 = vsel %vm1698, 1, 0
      %v1731 = vsel %vm1699, 1, 0
      %v1732 = vsel %vm1700, 1, 0
      %v1733 = vsel %vm1701, 1, 0
      %v1734 = vsel %vm1702, 1, 0
      %v1735 = vsel %vm1703, 1, 0
      %v1736 = vsel %vm1704, 1, 0
      %v1737 = vsel %vm1705, 1, 0
      %v1738 = vsel %vm1706, 1, 0
      %v1739 = vsel %vm1707, 1, 0
      %v1740 = vsel %vm1708, 1, 0
      %v1741 = vsel %vm1709, 1, 0
      %v1742 = vsel %vm1710, 1, 0
      %v1743 = vsel %vm1711, 1, 0
      %v1744 = vsel %vm1712, 1, 0
      %v1745 = vsel %vm1713, 1, 0
      %v1746 = vsel %vm1714, 1, 0
      %v1747 = vsel %vm1715, 1, 0
      %v1748 = vsel %vm1716, 1, 0
      %v1749 = vsel %vm1717, 1, 0
      %v1750 = vsel %vm1718, 1, 0
      %v1751 = vsel %vm1719, 1, 0
      %v1752 = vsel %vm1720, 1, 0
      %v1753 = vsel %vm1721, 1, 0
      %v1754 = vsel %vm1722, 1, 0
      %v1755 = vsel %vm1723, 1, 0
      %v1756 = vsel %vm1724, 1, 0
      %v1757 = vsel %vm1725, 1, 0
      %v1758 = vsel %vm1726, 1, 0
      %v1759 = vsel %vm1727, 1, 0
      %v1760 = vsel %vm1728, 1, 0
      %v1761 = vsel %vm1729, 1, 0
      %vm1762 = vcmp.eq.s32.totalorder %v1730, 1
      %vm1763 = vcmp.eq.s32.totalorder %v1731, 1
      %vm1764 = vcmp.eq.s32.totalorder %v1732, 1
      %vm1765 = vcmp.eq.s32.totalorder %v1733, 1
      %vm1766 = vcmp.eq.s32.totalorder %v1734, 1
      %vm1767 = vcmp.eq.s32.totalorder %v1735, 1
      %vm1768 = vcmp.eq.s32.totalorder %v1736, 1
      %vm1769 = vcmp.eq.s32.totalorder %v1737, 1
      %vm1770 = vcmp.eq.s32.totalorder %v1738, 1
      %vm1771 = vcmp.eq.s32.totalorder %v1739, 1
      %vm1772 = vcmp.eq.s32.totalorder %v1740, 1
      %vm1773 = vcmp.eq.s32.totalorder %v1741, 1
      %vm1774 = vcmp.eq.s32.totalorder %v1742, 1
      %vm1775 = vcmp.eq.s32.totalorder %v1743, 1
      %vm1776 = vcmp.eq.s32.totalorder %v1744, 1
      %vm1777 = vcmp.eq.s32.totalorder %v1745, 1
      %vm1778 = vcmp.eq.s32.totalorder %v1746, 1
      %vm1779 = vcmp.eq.s32.totalorder %v1747, 1
      %vm1780 = vcmp.eq.s32.totalorder %v1748, 1
      %vm1781 = vcmp.eq.s32.totalorder %v1749, 1
      %vm1782 = vcmp.eq.s32.totalorder %v1750, 1
      %vm1783 = vcmp.eq.s32.totalorder %v1751, 1
      %vm1784 = vcmp.eq.s32.totalorder %v1752, 1
      %vm1785 = vcmp.eq.s32.totalorder %v1753, 1
      %vm1786 = vcmp.eq.s32.totalorder %v1754, 1
      %vm1787 = vcmp.eq.s32.totalorder %v1755, 1
      %vm1788 = vcmp.eq.s32.totalorder %v1756, 1
      %vm1789 = vcmp.eq.s32.totalorder %v1757, 1
      %vm1790 = vcmp.eq.s32.totalorder %v1758, 1
      %vm1791 = vcmp.eq.s32.totalorder %v1759, 1
      %vm1792 = vcmp.eq.s32.totalorder %v1760, 1
      %vm1793 = vcmp.eq.s32.totalorder %v1761, 1
      %vm1794 = vmpackc.low %vm1762, %vm1762
      %vm1795 = vmpackc.low %vm1763, %vm1763
      %vm1796 = vmpackc.low %vm1764, %vm1764
      %vm1797 = vmpackc.low %vm1765, %vm1765
      %vm1798 = vmpackc.low %vm1766, %vm1766
      %vm1799 = vmpackc.low %vm1767, %vm1767
      %vm1800 = vmpackc.low %vm1768, %vm1768
      %vm1801 = vmpackc.low %vm1769, %vm1769
      %vm1802 = vmpackc.low %vm1770, %vm1770
      %vm1803 = vmpackc.low %vm1771, %vm1771
      %vm1804 = vmpackc.low %vm1772, %vm1772
      %vm1805 = vmpackc.low %vm1773, %vm1773
      %vm1806 = vmpackc.low %vm1774, %vm1774
      %vm1807 = vmpackc.low %vm1775, %vm1775
      %vm1808 = vmpackc.low %vm1776, %vm1776
      %vm1809 = vmpackc.low %vm1777, %vm1777
      %vm1810 = vmpackc.low %vm1778, %vm1778
      %vm1811 = vmpackc.low %vm1779, %vm1779
      %vm1812 = vmpackc.low %vm1780, %vm1780
      %vm1813 = vmpackc.low %vm1781, %vm1781
      %vm1814 = vmpackc.low %vm1782, %vm1782
      %vm1815 = vmpackc.low %vm1783, %vm1783
      %vm1816 = vmpackc.low %vm1784, %vm1784
      %vm1817 = vmpackc.low %vm1785, %vm1785
      %vm1818 = vmpackc.low %vm1786, %vm1786
      %vm1819 = vmpackc.low %vm1787, %vm1787
      %vm1820 = vmpackc.low %vm1788, %vm1788
      %vm1821 = vmpackc.low %vm1789, %vm1789
      %vm1822 = vmpackc.low %vm1790, %vm1790
      %vm1823 = vmpackc.low %vm1791, %vm1791
      %vm1824 = vmpackc.low %vm1792, %vm1792
      %vm1825 = vmpackc.low %vm1793, %vm1793
      %v1826 = vsel %vm1794, 65537, 0
      %v1827 = vsel %vm1795, 65537, 0
      %v1828 = vsel %vm1796, 65537, 0
      %v1829 = vsel %vm1797, 65537, 0
      %v1830 = vsel %vm1798, 65537, 0
      %v1831 = vsel %vm1799, 65537, 0
      %v1832 = vsel %vm1800, 65537, 0
      %v1833 = vsel %vm1801, 65537, 0
      %v1834 = vsel %vm1802, 65537, 0
      %v1835 = vsel %vm1803, 65537, 0
      %v1836 = vsel %vm1804, 65537, 0
      %v1837 = vsel %vm1805, 65537, 0
      %v1838 = vsel %vm1806, 65537, 0
      %v1839 = vsel %vm1807, 65537, 0
      %v1840 = vsel %vm1808, 65537, 0
      %v1841 = vsel %vm1809, 65537, 0
      %v1842 = vsel %vm1810, 65537, 0
      %v1843 = vsel %vm1811, 65537, 0
      %v1844 = vsel %vm1812, 65537, 0
      %v1845 = vsel %vm1813, 65537, 0
      %v1846 = vsel %vm1814, 65537, 0
      %v1847 = vsel %vm1815, 65537, 0
      %v1848 = vsel %vm1816, 65537, 0
      %v1849 = vsel %vm1817, 65537, 0
      %v1850 = vsel %vm1818, 65537, 0
      %v1851 = vsel %vm1819, 65537, 0
      %v1852 = vsel %vm1820, 65537, 0
      %v1853 = vsel %vm1821, 65537, 0
      %v1854 = vsel %vm1822, 65537, 0
      %v1855 = vsel %vm1823, 65537, 0
      %v1856 = vsel %vm1824, 65537, 0
      %v1857 = vsel %vm1825, 65537, 0
      %v1858 = vunpack.c.l.b16 %v1826
      %v1859 = vunpack.c.l.b16 %v1827
      %v1860 = vunpack.c.l.b16 %v1828
      %v1861 = vunpack.c.l.b16 %v1829
      %v1862 = vunpack.c.l.b16 %v1830
      %v1863 = vunpack.c.l.b16 %v1831
      %v1864 = vunpack.c.l.b16 %v1832
      %v1865 = vunpack.c.l.b16 %v1833
      %v1866 = vunpack.c.l.b16 %v1834
      %v1867 = vunpack.c.l.b16 %v1835
      %v1868 = vunpack.c.l.b16 %v1836
      %v1869 = vunpack.c.l.b16 %v1837
      %v1870 = vunpack.c.l.b16 %v1838
      %v1871 = vunpack.c.l.b16 %v1839
      %v1872 = vunpack.c.l.b16 %v1840
      %v1873 = vunpack.c.l.b16 %v1841
      %v1874 = vunpack.c.l.b16 %v1842
      %v1875 = vunpack.c.l.b16 %v1843
      %v1876 = vunpack.c.l.b16 %v1844
      %v1877 = vunpack.c.l.b16 %v1845
      %v1878 = vunpack.c.l.b16 %v1846
      %v1879 = vunpack.c.l.b16 %v1847
      %v1880 = vunpack.c.l.b16 %v1848
      %v1881 = vunpack.c.l.b16 %v1849
      %v1882 = vunpack.c.l.b16 %v1850
      %v1883 = vunpack.c.l.b16 %v1851
      %v1884 = vunpack.c.l.b16 %v1852
      %v1885 = vunpack.c.l.b16 %v1853
      %v1886 = vunpack.c.l.b16 %v1854
      %v1887 = vunpack.c.l.b16 %v1855
      %v1888 = vunpack.c.l.b16 %v1856
      %v1889 = vunpack.c.l.b16 %v1857
      %v1890 = vpack.c.b16 %v1859, %v1858
      %v1891 = vpack.c.b16 %v1861, %v1860
      %v1892 = vpack.c.b16 %v1863, %v1862
      %v1893 = vpack.c.b16 %v1865, %v1864
      %v1894 = vpack.c.b16 %v1867, %v1866
      %v1895 = vpack.c.b16 %v1869, %v1868
      %v1896 = vpack.c.b16 %v1871, %v1870
      %v1897 = vpack.c.b16 %v1873, %v1872
      %v1898 = vpack.c.b16 %v1875, %v1874
      %v1899 = vpack.c.b16 %v1877, %v1876
      %v1900 = vpack.c.b16 %v1879, %v1878
      %v1901 = vpack.c.b16 %v1881, %v1880
      %v1902 = vpack.c.b16 %v1883, %v1882
      %v1903 = vpack.c.b16 %v1885, %v1884
      %v1904 = vpack.c.b16 %v1887, %v1886
      %v1905 = vpack.c.b16 %v1889, %v1888
      %v1906 = vunpack.c.l.b16 %v1890
      %v1907 = vunpack.c.h.b16 %v1890
      %v1908 = vunpack.c.l.b16 0
      %v1909 = vunpack.c.h.b16 0
      %vm1910 = vcmp.ne.s32.totalorder %v1906, %v1908
      %vm1911 = vcmp.ne.s32.totalorder %v1907, %v1909
      %vm1912 = vmpackc.low %vm1911, %vm1910
      %v1913 = vunpack.c.l.b16 %v1891
      %v1914 = vunpack.c.h.b16 %v1891
      %v1915 = vunpack.c.l.b16 0
      %v1916 = vunpack.c.h.b16 0
      %vm1917 = vcmp.ne.s32.totalorder %v1913, %v1915
      %vm1918 = vcmp.ne.s32.totalorder %v1914, %v1916
      %vm1919 = vmpackc.low %vm1918, %vm1917
      %v1920 = vunpack.c.l.b16 %v1892
      %v1921 = vunpack.c.h.b16 %v1892
      %v1922 = vunpack.c.l.b16 0
      %v1923 = vunpack.c.h.b16 0
      %vm1924 = vcmp.ne.s32.totalorder %v1920, %v1922
      %vm1925 = vcmp.ne.s32.totalorder %v1921, %v1923
      %vm1926 = vmpackc.low %vm1925, %vm1924
      %v1927 = vunpack.c.l.b16 %v1893
      %v1928 = vunpack.c.h.b16 %v1893
      %v1929 = vunpack.c.l.b16 0
      %v1930 = vunpack.c.h.b16 0
      %vm1931 = vcmp.ne.s32.totalorder %v1927, %v1929
      %vm1932 = vcmp.ne.s32.totalorder %v1928, %v1930
      %vm1933 = vmpackc.low %vm1932, %vm1931
      %v1934 = vunpack.c.l.b16 %v1894
      %v1935 = vunpack.c.h.b16 %v1894
      %v1936 = vunpack.c.l.b16 0
      %v1937 = vunpack.c.h.b16 0
      %vm1938 = vcmp.ne.s32.totalorder %v1934, %v1936
      %vm1939 = vcmp.ne.s32.totalorder %v1935, %v1937
      %vm1940 = vmpackc.low %vm1939, %vm1938
      %v1941 = vunpack.c.l.b16 %v1895
      %v1942 = vunpack.c.h.b16 %v1895
      %v1943 = vunpack.c.l.b16 0
      %v1944 = vunpack.c.h.b16 0
      %vm1945 = vcmp.ne.s32.totalorder %v1941, %v1943
      %vm1946 = vcmp.ne.s32.totalorder %v1942, %v1944
      %vm1947 = vmpackc.low %vm1946, %vm1945
      %v1948 = vunpack.c.l.b16 %v1896
      %v1949 = vunpack.c.h.b16 %v1896
      %v1950 = vunpack.c.l.b16 0
      %v1951 = vunpack.c.h.b16 0
      %vm1952 = vcmp.ne.s32.totalorder %v1948, %v1950
      %vm1953 = vcmp.ne.s32.totalorder %v1949, %v1951
      %vm1954 = vmpackc.low %vm1953, %vm1952
      %v1955 = vunpack.c.l.b16 %v1897
      %v1956 = vunpack.c.h.b16 %v1897
      %v1957 = vunpack.c.l.b16 0
      %v1958 = vunpack.c.h.b16 0
      %vm1959 = vcmp.ne.s32.totalorder %v1955, %v1957
      %vm1960 = vcmp.ne.s32.totalorder %v1956, %v1958
      %vm1961 = vmpackc.low %vm1960, %vm1959
      %v1962 = vunpack.c.l.b16 %v1898
      %v1963 = vunpack.c.h.b16 %v1898
      %v1964 = vunpack.c.l.b16 0
      %v1965 = vunpack.c.h.b16 0
      %vm1966 = vcmp.ne.s32.totalorder %v1962, %v1964
      %vm1967 = vcmp.ne.s32.totalorder %v1963, %v1965
      %vm1968 = vmpackc.low %vm1967, %vm1966
      %v1969 = vunpack.c.l.b16 %v1899
      %v1970 = vunpack.c.h.b16 %v1899
      %v1971 = vunpack.c.l.b16 0
      %v1972 = vunpack.c.h.b16 0
      %vm1973 = vcmp.ne.s32.totalorder %v1969, %v1971
      %vm1974 = vcmp.ne.s32.totalorder %v1970, %v1972
      %vm1975 = vmpackc.low %vm1974, %vm1973
      %v1976 = vunpack.c.l.b16 %v1900
      %v1977 = vunpack.c.h.b16 %v1900
      %v1978 = vunpack.c.l.b16 0
      %v1979 = vunpack.c.h.b16 0
      %vm1980 = vcmp.ne.s32.totalorder %v1976, %v1978
      %vm1981 = vcmp.ne.s32.totalorder %v1977, %v1979
      %vm1982 = vmpackc.low %vm1981, %vm1980
      %v1983 = vunpack.c.l.b16 %v1901
      %v1984 = vunpack.c.h.b16 %v1901
      %v1985 = vunpack.c.l.b16 0
      %v1986 = vunpack.c.h.b16 0
      %vm1987 = vcmp.ne.s32.totalorder %v1983, %v1985
      %vm1988 = vcmp.ne.s32.totalorder %v1984, %v1986
      %vm1989 = vmpackc.low %vm1988, %vm1987
      %v1990 = vunpack.c.l.b16 %v1902
      %v1991 = vunpack.c.h.b16 %v1902
      %v1992 = vunpack.c.l.b16 0
      %v1993 = vunpack.c.h.b16 0
      %vm1994 = vcmp.ne.s32.totalorder %v1990, %v1992
      %vm1995 = vcmp.ne.s32.totalorder %v1991, %v1993
      %vm1996 = vmpackc.low %vm1995, %vm1994
      %v1997 = vunpack.c.l.b16 %v1903
      %v1998 = vunpack.c.h.b16 %v1903
      %v1999 = vunpack.c.l.b16 0
      %v2000 = vunpack.c.h.b16 0
      %vm2001 = vcmp.ne.s32.totalorder %v1997, %v1999
      %vm2002 = vcmp.ne.s32.totalorder %v1998, %v2000
      %vm2003 = vmpackc.low %vm2002, %vm2001
      %v2004 = vunpack.c.l.b16 %v1904
      %v2005 = vunpack.c.h.b16 %v1904
      %v2006 = vunpack.c.l.b16 0
      %v2007 = vunpack.c.h.b16 0
      %vm2008 = vcmp.ne.s32.totalorder %v2004, %v2006
      %vm2009 = vcmp.ne.s32.totalorder %v2005, %v2007
      %vm2010 = vmpackc.low %vm2009, %vm2008
      %v2011 = vunpack.c.l.b16 %v1905
      %v2012 = vunpack.c.h.b16 %v1905
      %v2013 = vunpack.c.l.b16 0
      %v2014 = vunpack.c.h.b16 0
      %vm2015 = vcmp.ne.s32.totalorder %v2011, %v2013
      %vm2016 = vcmp.ne.s32.totalorder %v2012, %v2014
      %vm2017 = vmpackc.low %vm2016, %vm2015
      %v2018 = vsel %vm1912, %v1697, 0
      %v2019 = vsel %vm1919, %v1633, 0
      %v2020 = vsel %vm1926, %v1636, 0
      %v2021 = vsel %vm1933, %v1639, 0
      %v2022 = vsel %vm1940, %v1642, 0
      %v2023 = vsel %vm1947, %v1645, 0
      %v2024 = vsel %vm1954, %v1648, 0
      %v2025 = vsel %vm1961, %v1651, 0
      %v2026 = vsel %vm1968, %v1654, 0
      %v2027 = vsel %vm1975, %v1657, 0
      %v2028 = vsel %vm1982, %v1660, 0
      %v2029 = vsel %vm1989, %v1663, 0
      %v2030 = vsel %vm1996, %v1666, 0
      %v2031 = vsel %vm2003, %v1669, 0
      %v2032 = vsel %vm2010, %v1672, 0
      %v2033 = vsel %vm2017, %v1678, 0
      %s2034 = scalar_lea.vmem %s3, 16
      %v2035 = vld [vmem:[%s2034] sm:$0xf]
      %v2036 = vld [vmem:[%s2034 + $0x4] sm:$0xf]
      %v2039 = vunpack.c.l.b16 %v2035
      %v2040 = vunpack.c.l.b16 %v2036
      %v2041 = vpack.c.b16 %v2040, %v2039
      %v2044 = vsel %vm1363, %v2018, 0
      %v2047 = vsel %vm1363, %v2019, 0
      %v2050 = vsel %vm1363, %v2020, 0
      %v2053 = vsel %vm1363, %v2021, 0
      %v2056 = vsel %vm1363, %v2022, 0
      %v2059 = vsel %vm1363, %v2023, 0
      %v2062 = vsel %vm1363, %v2024, 0
      %v2065 = vsel %vm1363, %v2025, 0
      %v2068 = vsel %vm1363, %v2026, 0
      %v2071 = vsel %vm1363, %v2027, 0
      %v2074 = vsel %vm1363, %v2028, 0
      %v2077 = vsel %vm1363, %v2029, 0
      %v2080 = vsel %vm1363, %v2030, 0
      %v2083 = vsel %vm1363, %v2031, 0
      %v2086 = vsel %vm1363, %v2032, 0
      %v2089 = vsel %vm1363, %v2033, 0
      %2091 = vmatpush.bf16.msra.mxu0 0
      %2092 = vmatpush.bf16.msra.mxu0 0
      %2093 = vmatpush.bf16.msra.mxu0 0
      %2094 = vmatpush.bf16.msra.mxu0 0
      %2095 = vmatpush.bf16.msra.mxu0 0
      %2096 = vmatpush.bf16.msra.mxu0 0
      %2097 = vmatpush.bf16.msra.mxu0 0
      %2098 = vmatpush.bf16.msra.mxu0 %v2041
      %2099 = vmatmul.bf16.gmra.mxu0 %v2044
      %v2100 = vpop.f32.mrf.mxu0
      %v2101 = vadd.f32 0.0, %v2100
      %v2102 = vpop.f32.mrf.mxu0
      %v2103 = vadd.f32 0.0, %v2102
      %2104 = vmatmul.bf16.gmra.mxu0 %v2047
      %v2105 = vpop.f32.mrf.mxu0
      %v2106 = vadd.f32 0.0, %v2105
      %v2107 = vpop.f32.mrf.mxu0
      %v2108 = vadd.f32 0.0, %v2107
      %2109 = vmatmul.bf16.gmra.mxu0 %v2050
      %v2110 = vpop.f32.mrf.mxu0
      %v2111 = vadd.f32 0.0, %v2110
      %v2112 = vpop.f32.mrf.mxu0
      %v2113 = vadd.f32 0.0, %v2112
      %2114 = vmatmul.bf16.gmra.mxu0 %v2053
      %v2115 = vpop.f32.mrf.mxu0
      %v2116 = vadd.f32 0.0, %v2115
      %v2117 = vpop.f32.mrf.mxu0
      %v2118 = vadd.f32 0.0, %v2117
      %2119 = vmatmul.bf16.gmra.mxu0 %v2056
      %v2120 = vpop.f32.mrf.mxu0
      %v2121 = vadd.f32 0.0, %v2120
      %v2122 = vpop.f32.mrf.mxu0
      %v2123 = vadd.f32 0.0, %v2122
      %2124 = vmatmul.bf16.gmra.mxu0 %v2059
      %v2125 = vpop.f32.mrf.mxu0
      %v2126 = vadd.f32 0.0, %v2125
      %v2127 = vpop.f32.mrf.mxu0
      %v2128 = vadd.f32 0.0, %v2127
      %2129 = vmatmul.bf16.gmra.mxu0 %v2062
      %v2130 = vpop.f32.mrf.mxu0
      %v2131 = vadd.f32 0.0, %v2130
      %v2132 = vpop.f32.mrf.mxu0
      %v2133 = vadd.f32 0.0, %v2132
      %2134 = vmatmul.bf16.gmra.mxu0 %v2065
      %v2135 = vpop.f32.mrf.mxu0
      %v2136 = vadd.f32 0.0, %v2135
      %v2137 = vpop.f32.mrf.mxu0
      %v2138 = vadd.f32 0.0, %v2137
      %2139 = vmatmul.bf16.gmra.mxu0 %v2068
      %v2140 = vpop.f32.mrf.mxu0
      %v2141 = vadd.f32 0.0, %v2140
      %v2142 = vpop.f32.mrf.mxu0
      %v2143 = vadd.f32 0.0, %v2142
      %2144 = vmatmul.bf16.gmra.mxu0 %v2071
      %v2145 = vpop.f32.mrf.mxu0
      %v2146 = vadd.f32 0.0, %v2145
      %v2147 = vpop.f32.mrf.mxu0
      %v2148 = vadd.f32 0.0, %v2147
      %2149 = vmatmul.bf16.gmra.mxu0 %v2074
      %v2150 = vpop.f32.mrf.mxu0
      %v2151 = vadd.f32 0.0, %v2150
      %v2152 = vpop.f32.mrf.mxu0
      %v2153 = vadd.f32 0.0, %v2152
      %2154 = vmatmul.bf16.gmra.mxu0 %v2077
      %v2155 = vpop.f32.mrf.mxu0
      %v2156 = vadd.f32 0.0, %v2155
      %v2157 = vpop.f32.mrf.mxu0
      %v2158 = vadd.f32 0.0, %v2157
      %2159 = vmatmul.bf16.gmra.mxu0 %v2080
      %v2160 = vpop.f32.mrf.mxu0
      %v2161 = vadd.f32 0.0, %v2160
      %v2162 = vpop.f32.mrf.mxu0
      %v2163 = vadd.f32 0.0, %v2162
      %2164 = vmatmul.bf16.gmra.mxu0 %v2083
      %v2165 = vpop.f32.mrf.mxu0
      %v2166 = vadd.f32 0.0, %v2165
      %v2167 = vpop.f32.mrf.mxu0
      %v2168 = vadd.f32 0.0, %v2167
      %2169 = vmatmul.bf16.gmra.mxu0 %v2086
      %v2170 = vpop.f32.mrf.mxu0
      %v2171 = vadd.f32 0.0, %v2170
      %v2172 = vpop.f32.mrf.mxu0
      %v2173 = vadd.f32 0.0, %v2172
      %2174 = vmatmul.bf16.gmra.mxu0 %v2089
      %v2175 = vpop.f32.mrf.mxu0
      %v2176 = vadd.f32 0.0, %v2175
      %v2177 = vpop.f32.mrf.mxu0
      %v2178 = vadd.f32 0.0, %v2177
      %2179 = vdwg.mxu0
      %v2180 = vadd.f32 %v1547, %v2101
      %v2181 = vadd.f32 %v1549, %v2103
      %v2182 = vadd.f32 %v1552, %v2106
      %v2183 = vadd.f32 %v1554, %v2108
      %v2184 = vadd.f32 %v1557, %v2111
      %v2185 = vadd.f32 %v1559, %v2113
      %v2186 = vadd.f32 %v1562, %v2116
      %v2187 = vadd.f32 %v1564, %v2118
      %v2188 = vadd.f32 %v1567, %v2121
      %v2189 = vadd.f32 %v1569, %v2123
      %v2190 = vadd.f32 %v1572, %v2126
      %v2191 = vadd.f32 %v1574, %v2128
      %v2192 = vadd.f32 %v1577, %v2131
      %v2193 = vadd.f32 %v1579, %v2133
      %v2194 = vadd.f32 %v1582, %v2136
      %v2195 = vadd.f32 %v1584, %v2138
      %v2196 = vadd.f32 %v1587, %v2141
      %v2197 = vadd.f32 %v1589, %v2143
      %v2198 = vadd.f32 %v1592, %v2146
      %v2199 = vadd.f32 %v1594, %v2148
      %v2200 = vadd.f32 %v1597, %v2151
      %v2201 = vadd.f32 %v1599, %v2153
      %v2202 = vadd.f32 %v1602, %v2156
      %v2203 = vadd.f32 %v1604, %v2158
      %v2204 = vadd.f32 %v1607, %v2161
      %v2205 = vadd.f32 %v1609, %v2163
      %v2206 = vadd.f32 %v1612, %v2166
      %v2207 = vadd.f32 %v1614, %v2168
      %v2208 = vadd.f32 %v1617, %v2171
      %v2209 = vadd.f32 %v1619, %v2173
      %v2210 = vadd.f32 %v1622, %v2176
      %v2211 = vadd.f32 %v1624, %v2178
      %v2213 = vunpack.c.l.b16 %v400
      %v2214 = vpack.c.b16 %v2213, %v1627
      %v2216 = vshrl.u32 %v2214, 16
      %v2218 = vrot.slane %v2216, 7
      %v2219 = vshll.u32 %v2214, 16
      %v2221 = vor.u32 %v2218, %v2219
      %v2222 = vsel %vm893, %v1008, %v2221
      %vm2224 = vmpackc.low %vm1095, %vm1095
      %vm2225 = vmpackc.low %vm1096, %vm1096
      %v2226 = vsel %vm2224, 65537, 0
      %v2227 = vsel %vm2225, 65537, 0
      %v2228 = vunpack.c.l.b16 %v2226
      %v2229 = vunpack.c.l.b16 %v2227
      %v2230 = vpack.c.b16 %v2229, %v2228
      %v2231 = vunpack.c.l.b16 %v2230
      %v2232 = vunpack.c.h.b16 %v2230
      %v2233 = vunpack.c.l.b16 0
      %v2234 = vunpack.c.h.b16 0
      %vm2235 = vcmp.ne.s32.totalorder %v2231, %v2233
      %vm2236 = vcmp.ne.s32.totalorder %v2232, %v2234
      %vm2237 = vmpackc.low %vm2236, %vm2235
      %v2238 = vsel %vm2237, %v1030, 0
      %v2239 = vsel %vm1238, %v908, 0
      %v2240 = vsel %vm1245, %v916, 0
      %v2241 = vsel %vm1252, %v924, 0
      %v2242 = vsel %vm1259, %v932, 0
      %v2243 = vsel %vm1266, %v940, 0
      %v2244 = vsel %vm1273, %v948, 0
      %v2245 = vsel %vm1280, %v956, 0
      %v2246 = vsel %vm1287, %v964, 0
      %v2247 = vsel %vm1294, %v972, 0
      %v2248 = vsel %vm1301, %v980, 0
      %v2249 = vsel %vm1308, %v988, 0
      %v2250 = vsel %vm1315, %v996, 0
      %v2251 = vsel %vm1322, %v1004, 0
      %v2252 = vsel %vm1329, %v1012, 0
      %v2253 = vsel %vm1336, %v2222, 0
      %s2254 = scalar_lea.vmem %s3, 24
      %v2255 = vld [vmem:[%s2254] sm:$0xf]
      %v2256 = vld [vmem:[%s2254 + $0x4] sm:$0xf]
      %v2259 = vunpack.c.l.b16 %v2255
      %v2260 = vunpack.c.l.b16 %v2256
      %v2261 = vpack.c.b16 %v2260, %v2259
      %v2264 = vsel %vm1363, %v2238, 0
      %v2267 = vsel %vm1363, %v2239, 0
      %v2270 = vsel %vm1363, %v2240, 0
      %v2273 = vsel %vm1363, %v2241, 0
      %v2276 = vsel %vm1363, %v2242, 0
      %v2279 = vsel %vm1363, %v2243, 0
      %v2282 = vsel %vm1363, %v2244, 0
      %v2285 = vsel %vm1363, %v2245, 0
      %v2288 = vsel %vm1363, %v2246, 0
      %v2291 = vsel %vm1363, %v2247, 0
      %v2294 = vsel %vm1363, %v2248, 0
      %v2297 = vsel %vm1363, %v2249, 0
      %v2300 = vsel %vm1363, %v2250, 0
      %v2303 = vsel %vm1363, %v2251, 0
      %v2306 = vsel %vm1363, %v2252, 0
      %v2309 = vsel %vm1363, %v2253, 0
      %2311 = vmatpush.bf16.msra.mxu0 0
      %2312 = vmatpush.bf16.msra.mxu0 0
      %2313 = vmatpush.bf16.msra.mxu0 0
      %2314 = vmatpush.bf16.msra.mxu0 0
      %2315 = vmatpush.bf16.msra.mxu0 0
      %2316 = vmatpush.bf16.msra.mxu0 0
      %2317 = vmatpush.bf16.msra.mxu0 0
      %2318 = vmatpush.bf16.msra.mxu0 %v2261
      %2319 = vmatmul.bf16.gmra.mxu0 %v2264
      %v2320 = vpop.f32.mrf.mxu0
      %v2321 = vadd.f32 0.0, %v2320
      %v2322 = vpop.f32.mrf.mxu0
      %v2323 = vadd.f32 0.0, %v2322
      %2324 = vmatmul.bf16.gmra.mxu0 %v2267
      %v2325 = vpop.f32.mrf.mxu0
      %v2326 = vadd.f32 0.0, %v2325
      %v2327 = vpop.f32.mrf.mxu0
      %v2328 = vadd.f32 0.0, %v2327
      %2329 = vmatmul.bf16.gmra.mxu0 %v2270
      %v2330 = vpop.f32.mrf.mxu0
      %v2331 = vadd.f32 0.0, %v2330
      %v2332 = vpop.f32.mrf.mxu0
      %v2333 = vadd.f32 0.0, %v2332
      %2334 = vmatmul.bf16.gmra.mxu0 %v2273
      %v2335 = vpop.f32.mrf.mxu0
      %v2336 = vadd.f32 0.0, %v2335
      %v2337 = vpop.f32.mrf.mxu0
      %v2338 = vadd.f32 0.0, %v2337
      %2339 = vmatmul.bf16.gmra.mxu0 %v2276
      %v2340 = vpop.f32.mrf.mxu0
      %v2341 = vadd.f32 0.0, %v2340
      %v2342 = vpop.f32.mrf.mxu0
      %v2343 = vadd.f32 0.0, %v2342
      %2344 = vmatmul.bf16.gmra.mxu0 %v2279
      %v2345 = vpop.f32.mrf.mxu0
      %v2346 = vadd.f32 0.0, %v2345
      %v2347 = vpop.f32.mrf.mxu0
      %v2348 = vadd.f32 0.0, %v2347
      %2349 = vmatmul.bf16.gmra.mxu0 %v2282
      %v2350 = vpop.f32.mrf.mxu0
      %v2351 = vadd.f32 0.0, %v2350
      %v2352 = vpop.f32.mrf.mxu0
      %v2353 = vadd.f32 0.0, %v2352
      %2354 = vmatmul.bf16.gmra.mxu0 %v2285
      %v2355 = vpop.f32.mrf.mxu0
      %v2356 = vadd.f32 0.0, %v2355
      %v2357 = vpop.f32.mrf.mxu0
      %v2358 = vadd.f32 0.0, %v2357
      %2359 = vmatmul.bf16.gmra.mxu0 %v2288
      %v2360 = vpop.f32.mrf.mxu0
      %v2361 = vadd.f32 0.0, %v2360
      %v2362 = vpop.f32.mrf.mxu0
      %v2363 = vadd.f32 0.0, %v2362
      %2364 = vmatmul.bf16.gmra.mxu0 %v2291
      %v2365 = vpop.f32.mrf.mxu0
      %v2366 = vadd.f32 0.0, %v2365
      %v2367 = vpop.f32.mrf.mxu0
      %v2368 = vadd.f32 0.0, %v2367
      %2369 = vmatmul.bf16.gmra.mxu0 %v2294
      %v2370 = vpop.f32.mrf.mxu0
      %v2371 = vadd.f32 0.0, %v2370
      %v2372 = vpop.f32.mrf.mxu0
      %v2373 = vadd.f32 0.0, %v2372
      %2374 = vmatmul.bf16.gmra.mxu0 %v2297
      %v2375 = vpop.f32.mrf.mxu0
      %v2376 = vadd.f32 0.0, %v2375
      %v2377 = vpop.f32.mrf.mxu0
      %v2378 = vadd.f32 0.0, %v2377
      %2379 = vmatmul.bf16.gmra.mxu0 %v2300
      %v2380 = vpop.f32.mrf.mxu0
      %v2381 = vadd.f32 0.0, %v2380
      %v2382 = vpop.f32.mrf.mxu0
      %v2383 = vadd.f32 0.0, %v2382
      %2384 = vmatmul.bf16.gmra.mxu0 %v2303
      %v2385 = vpop.f32.mrf.mxu0
      %v2386 = vadd.f32 0.0, %v2385
      %v2387 = vpop.f32.mrf.mxu0
      %v2388 = vadd.f32 0.0, %v2387
      %2389 = vmatmul.bf16.gmra.mxu0 %v2306
      %v2390 = vpop.f32.mrf.mxu0
      %v2391 = vadd.f32 0.0, %v2390
      %v2392 = vpop.f32.mrf.mxu0
      %v2393 = vadd.f32 0.0, %v2392
      %2394 = vmatmul.bf16.gmra.mxu0 %v2309
      %v2395 = vpop.f32.mrf.mxu0
      %v2396 = vadd.f32 0.0, %v2395
      %v2397 = vpop.f32.mrf.mxu0
      %v2398 = vadd.f32 0.0, %v2397
      %2399 = vdwg.mxu0
      %v2400 = vadd.f32 %v2180, %v2321
      %v2401 = vadd.f32 %v2181, %v2323
      %v2402 = vadd.f32 %v2182, %v2326
      %v2403 = vadd.f32 %v2183, %v2328
      %v2404 = vadd.f32 %v2184, %v2331
      %v2405 = vadd.f32 %v2185, %v2333
      %v2406 = vadd.f32 %v2186, %v2336
      %v2407 = vadd.f32 %v2187, %v2338
      %v2408 = vadd.f32 %v2188, %v2341
      %v2409 = vadd.f32 %v2189, %v2343
      %v2410 = vadd.f32 %v2190, %v2346
      %v2411 = vadd.f32 %v2191, %v2348
      %v2412 = vadd.f32 %v2192, %v2351
      %v2413 = vadd.f32 %v2193, %v2353
      %v2414 = vadd.f32 %v2194, %v2356
      %v2415 = vadd.f32 %v2195, %v2358
      %v2416 = vadd.f32 %v2196, %v2361
      %v2417 = vadd.f32 %v2197, %v2363
      %v2418 = vadd.f32 %v2198, %v2366
      %v2419 = vadd.f32 %v2199, %v2368
      %v2420 = vadd.f32 %v2200, %v2371
      %v2421 = vadd.f32 %v2201, %v2373
      %v2422 = vadd.f32 %v2202, %v2376
      %v2423 = vadd.f32 %v2203, %v2378
      %v2424 = vadd.f32 %v2204, %v2381
      %v2425 = vadd.f32 %v2205, %v2383
      %v2426 = vadd.f32 %v2206, %v2386
      %v2427 = vadd.f32 %v2207, %v2388
      %v2428 = vadd.f32 %v2208, %v2391
      %v2429 = vadd.f32 %v2209, %v2393
      %v2430 = vadd.f32 %v2210, %v2396
      %v2431 = vadd.f32 %v2211, %v2398
      %s2432 = scalar_lea.vmem %s3, 32
      %v2433 = vld [vmem:[%s2432] sm:$0xf]
      %v2434 = vld [vmem:[%s2432 + $0x4] sm:$0xf]
      %v2437 = vunpack.c.l.b16 %v2433
      %v2438 = vunpack.c.l.b16 %v2434
      %v2439 = vpack.c.b16 %v2438, %v2437
      %v2441 = vsel %vm1363, %v2214, 0
      %2443 = vmatpush.bf16.msra.mxu0 0
      %2444 = vmatpush.bf16.msra.mxu0 0
      %2445 = vmatpush.bf16.msra.mxu0 0
      %2446 = vmatpush.bf16.msra.mxu0 0
      %2447 = vmatpush.bf16.msra.mxu0 0
      %2448 = vmatpush.bf16.msra.mxu0 0
      %2449 = vmatpush.bf16.msra.mxu0 0
      %2450 = vmatpush.bf16.msra.mxu0 %v2439
      %2451 = vmatmul.bf16.gmra.mxu0 %v1367
      %v2452 = vpop.f32.mrf.mxu0
      %v2453 = vadd.f32 0.0, %v2452
      %v2454 = vpop.f32.mrf.mxu0
      %v2455 = vadd.f32 0.0, %v2454
      %2456 = vmatmul.bf16.gmra.mxu0 %v1369
      %v2457 = vpop.f32.mrf.mxu0
      %v2458 = vadd.f32 0.0, %v2457
      %v2459 = vpop.f32.mrf.mxu0
      %v2460 = vadd.f32 0.0, %v2459
      %2461 = vmatmul.bf16.gmra.mxu0 %v1371
      %v2462 = vpop.f32.mrf.mxu0
      %v2463 = vadd.f32 0.0, %v2462
      %v2464 = vpop.f32.mrf.mxu0
      %v2465 = vadd.f32 0.0, %v2464
      %2466 = vmatmul.bf16.gmra.mxu0 %v1373
      %v2467 = vpop.f32.mrf.mxu0
      %v2468 = vadd.f32 0.0, %v2467
      %v2469 = vpop.f32.mrf.mxu0
      %v2470 = vadd.f32 0.0, %v2469
      %2471 = vmatmul.bf16.gmra.mxu0 %v1375
      %v2472 = vpop.f32.mrf.mxu0
      %v2473 = vadd.f32 0.0, %v2472
      %v2474 = vpop.f32.mrf.mxu0
      %v2475 = vadd.f32 0.0, %v2474
      %2476 = vmatmul.bf16.gmra.mxu0 %v1377
      %v2477 = vpop.f32.mrf.mxu0
      %v2478 = vadd.f32 0.0, %v2477
      %v2479 = vpop.f32.mrf.mxu0
      %v2480 = vadd.f32 0.0, %v2479
      %2481 = vmatmul.bf16.gmra.mxu0 %v1379
      %v2482 = vpop.f32.mrf.mxu0
      %v2483 = vadd.f32 0.0, %v2482
      %v2484 = vpop.f32.mrf.mxu0
      %v2485 = vadd.f32 0.0, %v2484
      %2486 = vmatmul.bf16.gmra.mxu0 %v1381
      %v2487 = vpop.f32.mrf.mxu0
      %v2488 = vadd.f32 0.0, %v2487
      %v2489 = vpop.f32.mrf.mxu0
      %v2490 = vadd.f32 0.0, %v2489
      %2491 = vmatmul.bf16.gmra.mxu0 %v1383
      %v2492 = vpop.f32.mrf.mxu0
      %v2493 = vadd.f32 0.0, %v2492
      %v2494 = vpop.f32.mrf.mxu0
      %v2495 = vadd.f32 0.0, %v2494
      %2496 = vmatmul.bf16.gmra.mxu0 %v1385
      %v2497 = vpop.f32.mrf.mxu0
      %v2498 = vadd.f32 0.0, %v2497
      %v2499 = vpop.f32.mrf.mxu0
      %v2500 = vadd.f32 0.0, %v2499
      %2501 = vmatmul.bf16.gmra.mxu0 %v1387
      %v2502 = vpop.f32.mrf.mxu0
      %v2503 = vadd.f32 0.0, %v2502
      %v2504 = vpop.f32.mrf.mxu0
      %v2505 = vadd.f32 0.0, %v2504
      %2506 = vmatmul.bf16.gmra.mxu0 %v1389
      %v2507 = vpop.f32.mrf.mxu0
      %v2508 = vadd.f32 0.0, %v2507
      %v2509 = vpop.f32.mrf.mxu0
      %v2510 = vadd.f32 0.0, %v2509
      %2511 = vmatmul.bf16.gmra.mxu0 %v1391
      %v2512 = vpop.f32.mrf.mxu0
      %v2513 = vadd.f32 0.0, %v2512
      %v2514 = vpop.f32.mrf.mxu0
      %v2515 = vadd.f32 0.0, %v2514
      %2516 = vmatmul.bf16.gmra.mxu0 %v1393
      %v2517 = vpop.f32.mrf.mxu0
      %v2518 = vadd.f32 0.0, %v2517
      %v2519 = vpop.f32.mrf.mxu0
      %v2520 = vadd.f32 0.0, %v2519
      %2521 = vmatmul.bf16.gmra.mxu0 %v1395
      %v2522 = vpop.f32.mrf.mxu0
      %v2523 = vadd.f32 0.0, %v2522
      %v2524 = vpop.f32.mrf.mxu0
      %v2525 = vadd.f32 0.0, %v2524
      %2526 = vmatmul.bf16.gmra.mxu0 %v2441
      %v2527 = vpop.f32.mrf.mxu0
      %v2528 = vadd.f32 0.0, %v2527
      %v2529 = vpop.f32.mrf.mxu0
      %v2530 = vadd.f32 0.0, %v2529
      %2531 = vdwg.mxu0
      %v2532 = vadd.f32 %v2400, %v2453
      %v2533 = vadd.f32 %v2401, %v2455
      %v2534 = vadd.f32 %v2402, %v2458
      %v2535 = vadd.f32 %v2403, %v2460
      %v2536 = vadd.f32 %v2404, %v2463
      %v2537 = vadd.f32 %v2405, %v2465
      %v2538 = vadd.f32 %v2406, %v2468
      %v2539 = vadd.f32 %v2407, %v2470
      %v2540 = vadd.f32 %v2408, %v2473
      %v2541 = vadd.f32 %v2409, %v2475
      %v2542 = vadd.f32 %v2410, %v2478
      %v2543 = vadd.f32 %v2411, %v2480
      %v2544 = vadd.f32 %v2412, %v2483
      %v2545 = vadd.f32 %v2413, %v2485
      %v2546 = vadd.f32 %v2414, %v2488
      %v2547 = vadd.f32 %v2415, %v2490
      %v2548 = vadd.f32 %v2416, %v2493
      %v2549 = vadd.f32 %v2417, %v2495
      %v2550 = vadd.f32 %v2418, %v2498
      %v2551 = vadd.f32 %v2419, %v2500
      %v2552 = vadd.f32 %v2420, %v2503
      %v2553 = vadd.f32 %v2421, %v2505
      %v2554 = vadd.f32 %v2422, %v2508
      %v2555 = vadd.f32 %v2423, %v2510
      %v2556 = vadd.f32 %v2424, %v2513
      %v2557 = vadd.f32 %v2425, %v2515
      %v2558 = vadd.f32 %v2426, %v2518
      %v2559 = vadd.f32 %v2427, %v2520
      %v2560 = vadd.f32 %v2428, %v2523
      %v2561 = vadd.f32 %v2429, %v2525
      %v2562 = vadd.f32 %v2430, %v2528
      %v2563 = vadd.f32 %v2431, %v2530
      %v2564 = vrot.slane %v2219, 1
      %v2565 = vsel %vm1629, %v1673, %v2564
      %v2566 = vor.u32 %v2216, %v2564
      %v2569 = vsel %vm1696, %v2566, 0
      %v2570 = vsel %vm1912, %v1633, 0
      %v2571 = vsel %vm1919, %v1636, 0
      %v2572 = vsel %vm1926, %v1639, 0
      %v2573 = vsel %vm1933, %v1642, 0
      %v2574 = vsel %vm1940, %v1645, 0
      %v2575 = vsel %vm1947, %v1648, 0
      %v2576 = vsel %vm1954, %v1651, 0
      %v2577 = vsel %vm1961, %v1654, 0
      %v2578 = vsel %vm1968, %v1657, 0
      %v2579 = vsel %vm1975, %v1660, 0
      %v2580 = vsel %vm1982, %v1663, 0
      %v2581 = vsel %vm1989, %v1666, 0
      %v2582 = vsel %vm1996, %v1669, 0
      %v2583 = vsel %vm2003, %v1672, 0
      %v2584 = vsel %vm2010, %v2565, 0
      %v2585 = vsel %vm2017, %v2569, 0
      %s2586 = scalar_lea.vmem %s3, 40
      %v2587 = vld [vmem:[%s2586] sm:$0xf]
      %v2588 = vld [vmem:[%s2586 + $0x4] sm:$0xf]
      %v2591 = vunpack.c.l.b16 %v2587
      %v2592 = vunpack.c.l.b16 %v2588
      %v2593 = vpack.c.b16 %v2592, %v2591
      %v2596 = vsel %vm1363, %v2570, 0
      %v2599 = vsel %vm1363, %v2571, 0
      %v2602 = vsel %vm1363, %v2572, 0
      %v2605 = vsel %vm1363, %v2573, 0
      %v2608 = vsel %vm1363, %v2574, 0
      %v2611 = vsel %vm1363, %v2575, 0
      %v2614 = vsel %vm1363, %v2576, 0
      %v2617 = vsel %vm1363, %v2577, 0
      %v2620 = vsel %vm1363, %v2578, 0
      %v2623 = vsel %vm1363, %v2579, 0
      %v2626 = vsel %vm1363, %v2580, 0
      %v2629 = vsel %vm1363, %v2581, 0
      %v2632 = vsel %vm1363, %v2582, 0
      %v2635 = vsel %vm1363, %v2583, 0
      %v2638 = vsel %vm1363, %v2584, 0
      %v2641 = vsel %vm1363, %v2585, 0
      %2643 = vmatpush.bf16.msra.mxu0 0
      %2644 = vmatpush.bf16.msra.mxu0 0
      %2645 = vmatpush.bf16.msra.mxu0 0
      %2646 = vmatpush.bf16.msra.mxu0 0
      %2647 = vmatpush.bf16.msra.mxu0 0
      %2648 = vmatpush.bf16.msra.mxu0 0
      %2649 = vmatpush.bf16.msra.mxu0 0
      %2650 = vmatpush.bf16.msra.mxu0 %v2593
      %2651 = vmatmul.bf16.gmra.mxu0 %v2596
      %v2652 = vpop.f32.mrf.mxu0
      %v2653 = vadd.f32 0.0, %v2652
      %v2654 = vpop.f32.mrf.mxu0
      %v2655 = vadd.f32 0.0, %v2654
      %2656 = vmatmul.bf16.gmra.mxu0 %v2599
      %v2657 = vpop.f32.mrf.mxu0
      %v2658 = vadd.f32 0.0, %v2657
      %v2659 = vpop.f32.mrf.mxu0
      %v2660 = vadd.f32 0.0, %v2659
      %2661 = vmatmul.bf16.gmra.mxu0 %v2602
      %v2662 = vpop.f32.mrf.mxu0
      %v2663 = vadd.f32 0.0, %v2662
      %v2664 = vpop.f32.mrf.mxu0
      %v2665 = vadd.f32 0.0, %v2664
      %2666 = vmatmul.bf16.gmra.mxu0 %v2605
      %v2667 = vpop.f32.mrf.mxu0
      %v2668 = vadd.f32 0.0, %v2667
      %v2669 = vpop.f32.mrf.mxu0
      %v2670 = vadd.f32 0.0, %v2669
      %2671 = vmatmul.bf16.gmra.mxu0 %v2608
      %v2672 = vpop.f32.mrf.mxu0
      %v2673 = vadd.f32 0.0, %v2672
      %v2674 = vpop.f32.mrf.mxu0
      %v2675 = vadd.f32 0.0, %v2674
      %2676 = vmatmul.bf16.gmra.mxu0 %v2611
      %v2677 = vpop.f32.mrf.mxu0
      %v2678 = vadd.f32 0.0, %v2677
      %v2679 = vpop.f32.mrf.mxu0
      %v2680 = vadd.f32 0.0, %v2679
      %2681 = vmatmul.bf16.gmra.mxu0 %v2614
      %v2682 = vpop.f32.mrf.mxu0
      %v2683 = vadd.f32 0.0, %v2682
      %v2684 = vpop.f32.mrf.mxu0
      %v2685 = vadd.f32 0.0, %v2684
      %2686 = vmatmul.bf16.gmra.mxu0 %v2617
      %v2687 = vpop.f32.mrf.mxu0
      %v2688 = vadd.f32 0.0, %v2687
      %v2689 = vpop.f32.mrf.mxu0
      %v2690 = vadd.f32 0.0, %v2689
      %2691 = vmatmul.bf16.gmra.mxu0 %v2620
      %v2692 = vpop.f32.mrf.mxu0
      %v2693 = vadd.f32 0.0, %v2692
      %v2694 = vpop.f32.mrf.mxu0
      %v2695 = vadd.f32 0.0, %v2694
      %2696 = vmatmul.bf16.gmra.mxu0 %v2623
      %v2697 = vpop.f32.mrf.mxu0
      %v2698 = vadd.f32 0.0, %v2697
      %v2699 = vpop.f32.mrf.mxu0
      %v2700 = vadd.f32 0.0, %v2699
      %2701 = vmatmul.bf16.gmra.mxu0 %v2626
      %v2702 = vpop.f32.mrf.mxu0
      %v2703 = vadd.f32 0.0, %v2702
      %v2704 = vpop.f32.mrf.mxu0
      %v2705 = vadd.f32 0.0, %v2704
      %2706 = vmatmul.bf16.gmra.mxu0 %v2629
      %v2707 = vpop.f32.mrf.mxu0
      %v2708 = vadd.f32 0.0, %v2707
      %v2709 = vpop.f32.mrf.mxu0
      %v2710 = vadd.f32 0.0, %v2709
      %2711 = vmatmul.bf16.gmra.mxu0 %v2632
      %v2712 = vpop.f32.mrf.mxu0
      %v2713 = vadd.f32 0.0, %v2712
      %v2714 = vpop.f32.mrf.mxu0
      %v2715 = vadd.f32 0.0, %v2714
      %2716 = vmatmul.bf16.gmra.mxu0 %v2635
      %v2717 = vpop.f32.mrf.mxu0
      %v2718 = vadd.f32 0.0, %v2717
      %v2719 = vpop.f32.mrf.mxu0
      %v2720 = vadd.f32 0.0, %v2719
      %2721 = vmatmul.bf16.gmra.mxu0 %v2638
      %v2722 = vpop.f32.mrf.mxu0
      %v2723 = vadd.f32 0.0, %v2722
      %v2724 = vpop.f32.mrf.mxu0
      %v2725 = vadd.f32 0.0, %v2724
      %2726 = vmatmul.bf16.gmra.mxu0 %v2641
      %v2727 = vpop.f32.mrf.mxu0
      %v2728 = vadd.f32 0.0, %v2727
      %v2729 = vpop.f32.mrf.mxu0
      %v2730 = vadd.f32 0.0, %v2729
      %2731 = vdwg.mxu0
      %v2732 = vadd.f32 %v2532, %v2653
      %v2733 = vadd.f32 %v2533, %v2655
      %v2734 = vadd.f32 %v2534, %v2658
      %v2735 = vadd.f32 %v2535, %v2660
      %v2736 = vadd.f32 %v2536, %v2663
      %v2737 = vadd.f32 %v2537, %v2665
      %v2738 = vadd.f32 %v2538, %v2668
      %v2739 = vadd.f32 %v2539, %v2670
      %v2740 = vadd.f32 %v2540, %v2673
      %v2741 = vadd.f32 %v2541, %v2675
      %v2742 = vadd.f32 %v2542, %v2678
      %v2743 = vadd.f32 %v2543, %v2680
      %v2744 = vadd.f32 %v2544, %v2683
      %v2745 = vadd.f32 %v2545, %v2685
      %v2746 = vadd.f32 %v2546, %v2688
      %v2747 = vadd.f32 %v2547, %v2690
      %v2748 = vadd.f32 %v2548, %v2693
      %v2749 = vadd.f32 %v2549, %v2695
      %v2750 = vadd.f32 %v2550, %v2698
      %v2751 = vadd.f32 %v2551, %v2700
      %v2752 = vadd.f32 %v2552, %v2703
      %v2753 = vadd.f32 %v2553, %v2705
      %v2754 = vadd.f32 %v2554, %v2708
      %v2755 = vadd.f32 %v2555, %v2710
      %v2756 = vadd.f32 %v2556, %v2713
      %v2757 = vadd.f32 %v2557, %v2715
      %v2758 = vadd.f32 %v2558, %v2718
      %v2759 = vadd.f32 %v2559, %v2720
      %v2760 = vadd.f32 %v2560, %v2723
      %v2761 = vadd.f32 %v2561, %v2725
      %v2762 = vadd.f32 %v2562, %v2728
      %v2763 = vadd.f32 %v2563, %v2730
      %v2764 = vpack.c.b16 %v850, %v849
      %v2765 = vpack.c.b16 %v852, %v851
      %v2766 = vpack.c.b16 %v854, %v853
      %v2767 = vpack.c.b16 %v856, %v855
      %v2768 = vpack.c.b16 %v858, %v857
      %v2769 = vpack.c.b16 %v860, %v859
      %v2770 = vpack.c.b16 %v862, %v861
      %v2771 = vpack.c.b16 %v864, %v863
      %v2772 = vpack.c.b16 %v866, %v865
      %v2773 = vpack.c.b16 %v868, %v867
      %v2774 = vpack.c.b16 %v870, %v869
      %v2775 = vpack.c.b16 %v872, %v871
      %v2776 = vpack.c.b16 %v874, %v873
      %v2777 = vpack.c.b16 %v876, %v875
      %v2778 = vpack.c.b16 %v1627, %v877
      %v2779 = vpack.c.b16 %v2213, %v2213
      %vm2780 = vsmask.f32 4352
      %v2782 = vshrl.u32 %v2764, 16
      %v2784 = vrot.slane %v2782, 3
      %v2785 = vshll.u32 %v2764, 16
      %v2787 = vrot.slane %v2785, 4
      %v2788 = vor.u32 %v2784, %v2787
      %v2790 = vshrl.u32 %v2765, 16
      %v2792 = vrot.slane %v2790, 3
      %v2793 = vshll.u32 %v2765, 16
      %v2795 = vrot.slane %v2793, 4
      %v2796 = vor.u32 %v2792, %v2795
      %v2797 = vsel %vm2780, %v2788, %v2796
      %v2799 = vshrl.u32 %v2766, 16
      %v2801 = vrot.slane %v2799, 3
      %v2802 = vshll.u32 %v2766, 16
      %v2804 = vrot.slane %v2802, 4
      %v2805 = vor.u32 %v2801, %v2804
      %v2806 = vsel %vm2780, %v2796, %v2805
      %v2808 = vshrl.u32 %v2767, 16
      %v2810 = vrot.slane %v2808, 3
      %v2811 = vshll.u32 %v2767, 16
      %v2813 = vrot.slane %v2811, 4
      %v2814 = vor.u32 %v2810, %v2813
      %v2815 = vsel %vm2780, %v2805, %v2814
      %v2817 = vshrl.u32 %v2768, 16
      %v2819 = vrot.slane %v2817, 3
      %v2820 = vshll.u32 %v2768, 16
      %v2822 = vrot.slane %v2820, 4
      %v2823 = vor.u32 %v2819, %v2822
      %v2824 = vsel %vm2780, %v2814, %v2823
      %v2826 = vshrl.u32 %v2769, 16
      %v2828 = vrot.slane %v2826, 3
      %v2829 = vshll.u32 %v2769, 16
      %v2831 = vrot.slane %v2829, 4
      %v2832 = vor.u32 %v2828, %v2831
      %v2833 = vsel %vm2780, %v2823, %v2832
      %v2835 = vshrl.u32 %v2770, 16
      %v2837 = vrot.slane %v2835, 3
      %v2838 = vshll.u32 %v2770, 16
      %v2840 = vrot.slane %v2838, 4
      %v2841 = vor.u32 %v2837, %v2840
      %v2842 = vsel %vm2780, %v2832, %v2841
      %v2844 = vshrl.u32 %v2771, 16
      %v2846 = vrot.slane %v2844, 3
      %v2847 = vshll.u32 %v2771, 16
      %v2849 = vrot.slane %v2847, 4
      %v2850 = vor.u32 %v2846, %v2849
      %v2851 = vsel %vm2780, %v2841, %v2850
      %v2853 = vshrl.u32 %v2772, 16
      %v2855 = vrot.slane %v2853, 3
      %v2856 = vshll.u32 %v2772, 16
      %v2858 = vrot.slane %v2856, 4
      %v2859 = vor.u32 %v2855, %v2858
      %v2860 = vsel %vm2780, %v2850, %v2859
      %v2862 = vshrl.u32 %v2773, 16
      %v2864 = vrot.slane %v2862, 3
      %v2865 = vshll.u32 %v2773, 16
      %v2867 = vrot.slane %v2865, 4
      %v2868 = vor.u32 %v2864, %v2867
      %v2869 = vsel %vm2780, %v2859, %v2868
      %v2871 = vshrl.u32 %v2774, 16
      %v2873 = vrot.slane %v2871, 3
      %v2874 = vshll.u32 %v2774, 16
      %v2876 = vrot.slane %v2874, 4
      %v2877 = vor.u32 %v2873, %v2876
      %v2878 = vsel %vm2780, %v2868, %v2877
      %v2880 = vshrl.u32 %v2775, 16
      %v2882 = vrot.slane %v2880, 3
      %v2883 = vshll.u32 %v2775, 16
      %v2885 = vrot.slane %v2883, 4
      %v2886 = vor.u32 %v2882, %v2885
      %v2887 = vsel %vm2780, %v2877, %v2886
      %v2889 = vshrl.u32 %v2776, 16
      %v2891 = vrot.slane %v2889, 3
      %v2892 = vshll.u32 %v2776, 16
      %v2894 = vrot.slane %v2892, 4
      %v2895 = vor.u32 %v2891, %v2894
      %v2896 = vsel %vm2780, %v2886, %v2895
      %v2898 = vshrl.u32 %v2777, 16
      %v2900 = vrot.slane %v2898, 3
      %v2901 = vshll.u32 %v2777, 16
      %v2903 = vrot.slane %v2901, 4
      %v2904 = vor.u32 %v2900, %v2903
      %v2905 = vsel %vm2780, %v2895, %v2904
      %v2907 = vshrl.u32 %v2778, 16
      %v2909 = vrot.slane %v2907, 3
      %v2910 = vshll.u32 %v2778, 16
      %v2912 = vrot.slane %v2910, 4
      %v2913 = vor.u32 %v2909, %v2912
      %v2914 = vsel %vm2780, %v2904, %v2913
      %v2916 = vshrl.u32 %v2779, 16
      %v2918 = vrot.slane %v2916, 3
      %v2919 = vshll.u32 %v2779, 16
      %v2921 = vrot.slane %v2919, 4
      %v2922 = vor.u32 %v2918, %v2921
      %v2923 = vsel %vm2780, %v2913, %v2922
      %v2940 = vsel %vm1029, %v2918, 0
      %v2941 = vsel %vm2237, %v2797, 0
      %v2942 = vsel %vm1238, %v2806, 0
      %v2943 = vsel %vm1245, %v2815, 0
      %v2944 = vsel %vm1252, %v2824, 0
      %v2945 = vsel %vm1259, %v2833, 0
      %v2946 = vsel %vm1266, %v2842, 0
      %v2947 = vsel %vm1273, %v2851, 0
      %v2948 = vsel %vm1280, %v2860, 0
      %v2949 = vsel %vm1287, %v2869, 0
      %v2950 = vsel %vm1294, %v2878, 0
      %v2951 = vsel %vm1301, %v2887, 0
      %v2952 = vsel %vm1308, %v2896, 0
      %v2953 = vsel %vm1315, %v2905, 0
      %v2954 = vsel %vm1322, %v2914, 0
      %v2955 = vsel %vm1329, %v2923, 0
      %v2956 = vsel %vm1336, %v2940, 0
      %s2957 = scalar_lea.vmem %s3, 48
      %v2958 = vld [vmem:[%s2957] sm:$0xf]
      %v2959 = vld [vmem:[%s2957 + $0x4] sm:$0xf]
      %v2962 = vunpack.c.l.b16 %v2958
      %v2963 = vunpack.c.l.b16 %v2959
      %v2964 = vpack.c.b16 %v2963, %v2962
      %v2967 = vsel %vm1363, %v2941, 0
      %v2970 = vsel %vm1363, %v2942, 0
      %v2973 = vsel %vm1363, %v2943, 0
      %v2976 = vsel %vm1363, %v2944, 0
      %v2979 = vsel %vm1363, %v2945, 0
      %v2982 = vsel %vm1363, %v2946, 0
      %v2985 = vsel %vm1363, %v2947, 0
      %v2988 = vsel %vm1363, %v2948, 0
      %v2991 = vsel %vm1363, %v2949, 0
      %v2994 = vsel %vm1363, %v2950, 0
      %v2997 = vsel %vm1363, %v2951, 0
      %v3000 = vsel %vm1363, %v2952, 0
      %v3003 = vsel %vm1363, %v2953, 0
      %v3006 = vsel %vm1363, %v2954, 0
      %v3009 = vsel %vm1363, %v2955, 0
      %v3012 = vsel %vm1363, %v2956, 0
      %3014 = vmatpush.bf16.msra.mxu0 0
      %3015 = vmatpush.bf16.msra.mxu0 0
      %3016 = vmatpush.bf16.msra.mxu0 0
      %3017 = vmatpush.bf16.msra.mxu0 0
      %3018 = vmatpush.bf16.msra.mxu0 0
      %3019 = vmatpush.bf16.msra.mxu0 0
      %3020 = vmatpush.bf16.msra.mxu0 0
      %3021 = vmatpush.bf16.msra.mxu0 %v2964
      %3022 = vmatmul.bf16.gmra.mxu0 %v2967
      %v3023 = vpop.f32.mrf.mxu0
      %v3024 = vadd.f32 0.0, %v3023
      %v3025 = vpop.f32.mrf.mxu0
      %v3026 = vadd.f32 0.0, %v3025
      %3027 = vmatmul.bf16.gmra.mxu0 %v2970
      %v3028 = vpop.f32.mrf.mxu0
      %v3029 = vadd.f32 0.0, %v3028
      %v3030 = vpop.f32.mrf.mxu0
      %v3031 = vadd.f32 0.0, %v3030
      %3032 = vmatmul.bf16.gmra.mxu0 %v2973
      %v3033 = vpop.f32.mrf.mxu0
      %v3034 = vadd.f32 0.0, %v3033
      %v3035 = vpop.f32.mrf.mxu0
      %v3036 = vadd.f32 0.0, %v3035
      %3037 = vmatmul.bf16.gmra.mxu0 %v2976
      %v3038 = vpop.f32.mrf.mxu0
      %v3039 = vadd.f32 0.0, %v3038
      %v3040 = vpop.f32.mrf.mxu0
      %v3041 = vadd.f32 0.0, %v3040
      %3042 = vmatmul.bf16.gmra.mxu0 %v2979
      %v3043 = vpop.f32.mrf.mxu0
      %v3044 = vadd.f32 0.0, %v3043
      %v3045 = vpop.f32.mrf.mxu0
      %v3046 = vadd.f32 0.0, %v3045
      %3047 = vmatmul.bf16.gmra.mxu0 %v2982
      %v3048 = vpop.f32.mrf.mxu0
      %v3049 = vadd.f32 0.0, %v3048
      %v3050 = vpop.f32.mrf.mxu0
      %v3051 = vadd.f32 0.0, %v3050
      %3052 = vmatmul.bf16.gmra.mxu0 %v2985
      %v3053 = vpop.f32.mrf.mxu0
      %v3054 = vadd.f32 0.0, %v3053
      %v3055 = vpop.f32.mrf.mxu0
      %v3056 = vadd.f32 0.0, %v3055
      %3057 = vmatmul.bf16.gmra.mxu0 %v2988
      %v3058 = vpop.f32.mrf.mxu0
      %v3059 = vadd.f32 0.0, %v3058
      %v3060 = vpop.f32.mrf.mxu0
      %v3061 = vadd.f32 0.0, %v3060
      %3062 = vmatmul.bf16.gmra.mxu0 %v2991
      %v3063 = vpop.f32.mrf.mxu0
      %v3064 = vadd.f32 0.0, %v3063
      %v3065 = vpop.f32.mrf.mxu0
      %v3066 = vadd.f32 0.0, %v3065
      %3067 = vmatmul.bf16.gmra.mxu0 %v2994
      %v3068 = vpop.f32.mrf.mxu0
      %v3069 = vadd.f32 0.0, %v3068
      %v3070 = vpop.f32.mrf.mxu0
      %v3071 = vadd.f32 0.0, %v3070
      %3072 = vmatmul.bf16.gmra.mxu0 %v2997
      %v3073 = vpop.f32.mrf.mxu0
      %v3074 = vadd.f32 0.0, %v3073
      %v3075 = vpop.f32.mrf.mxu0
      %v3076 = vadd.f32 0.0, %v3075
      %3077 = vmatmul.bf16.gmra.mxu0 %v3000
      %v3078 = vpop.f32.mrf.mxu0
      %v3079 = vadd.f32 0.0, %v3078
      %v3080 = vpop.f32.mrf.mxu0
      %v3081 = vadd.f32 0.0, %v3080
      %3082 = vmatmul.bf16.gmra.mxu0 %v3003
      %v3083 = vpop.f32.mrf.mxu0
      %v3084 = vadd.f32 0.0, %v3083
      %v3085 = vpop.f32.mrf.mxu0
      %v3086 = vadd.f32 0.0, %v3085
      %3087 = vmatmul.bf16.gmra.mxu0 %v3006
      %v3088 = vpop.f32.mrf.mxu0
      %v3089 = vadd.f32 0.0, %v3088
      %v3090 = vpop.f32.mrf.mxu0
      %v3091 = vadd.f32 0.0, %v3090
      %3092 = vmatmul.bf16.gmra.mxu0 %v3009
      %v3093 = vpop.f32.mrf.mxu0
      %v3094 = vadd.f32 0.0, %v3093
      %v3095 = vpop.f32.mrf.mxu0
      %v3096 = vadd.f32 0.0, %v3095
      %3097 = vmatmul.bf16.gmra.mxu0 %v3012
      %v3098 = vpop.f32.mrf.mxu0
      %v3099 = vadd.f32 0.0, %v3098
      %v3100 = vpop.f32.mrf.mxu0
      %v3101 = vadd.f32 0.0, %v3100
      %3102 = vdwg.mxu0
      %v3103 = vadd.f32 %v2732, %v3024
      %v3104 = vadd.f32 %v2733, %v3026
      %v3105 = vadd.f32 %v2734, %v3029
      %v3106 = vadd.f32 %v2735, %v3031
      %v3107 = vadd.f32 %v2736, %v3034
      %v3108 = vadd.f32 %v2737, %v3036
      %v3109 = vadd.f32 %v2738, %v3039
      %v3110 = vadd.f32 %v2739, %v3041
      %v3111 = vadd.f32 %v2740, %v3044
      %v3112 = vadd.f32 %v2741, %v3046
      %v3113 = vadd.f32 %v2742, %v3049
      %v3114 = vadd.f32 %v2743, %v3051
      %v3115 = vadd.f32 %v2744, %v3054
      %v3116 = vadd.f32 %v2745, %v3056
      %v3117 = vadd.f32 %v2746, %v3059
      %v3118 = vadd.f32 %v2747, %v3061
      %v3119 = vadd.f32 %v2748, %v3064
      %v3120 = vadd.f32 %v2749, %v3066
      %v3121 = vadd.f32 %v2750, %v3069
      %v3122 = vadd.f32 %v2751, %v3071
      %v3123 = vadd.f32 %v2752, %v3074
      %v3124 = vadd.f32 %v2753, %v3076
      %v3125 = vadd.f32 %v2754, %v3079
      %v3126 = vadd.f32 %v2755, %v3081
      %v3127 = vadd.f32 %v2756, %v3084
      %v3128 = vadd.f32 %v2757, %v3086
      %v3129 = vadd.f32 %v2758, %v3089
      %v3130 = vadd.f32 %v2759, %v3091
      %v3131 = vadd.f32 %v2760, %v3094
      %v3132 = vadd.f32 %v2761, %v3096
      %v3133 = vadd.f32 %v2762, %v3099
      %v3134 = vadd.f32 %v2763, %v3101
      %s3135 = scalar_lea.vmem %s3, 56
      %v3136 = vld [vmem:[%s3135] sm:$0xf]
      %v3137 = vld [vmem:[%s3135 + $0x4] sm:$0xf]
      %v3140 = vunpack.c.l.b16 %v3136
      %v3141 = vunpack.c.l.b16 %v3137
      %v3142 = vpack.c.b16 %v3141, %v3140
      %3144 = vmatpush.bf16.msra.mxu0 0
      %3145 = vmatpush.bf16.msra.mxu0 0
      %3146 = vmatpush.bf16.msra.mxu0 0
      %3147 = vmatpush.bf16.msra.mxu0 0
      %3148 = vmatpush.bf16.msra.mxu0 0
      %3149 = vmatpush.bf16.msra.mxu0 0
      %3150 = vmatpush.bf16.msra.mxu0 0
      %3151 = vmatpush.bf16.msra.mxu0 %v3142
      %3152 = vmatmul.bf16.gmra.mxu0 %v1369
      %v3153 = vpop.f32.mrf.mxu0
      %v3154 = vadd.f32 0.0, %v3153
      %v3155 = vpop.f32.mrf.mxu0
      %v3156 = vadd.f32 0.0, %v3155
      %3157 = vmatmul.bf16.gmra.mxu0 %v1371
      %v3158 = vpop.f32.mrf.mxu0
      %v3159 = vadd.f32 0.0, %v3158
      %v3160 = vpop.f32.mrf.mxu0
      %v3161 = vadd.f32 0.0, %v3160
      %3162 = vmatmul.bf16.gmra.mxu0 %v1373
      %v3163 = vpop.f32.mrf.mxu0
      %v3164 = vadd.f32 0.0, %v3163
      %v3165 = vpop.f32.mrf.mxu0
      %v3166 = vadd.f32 0.0, %v3165
      %3167 = vmatmul.bf16.gmra.mxu0 %v1375
      %v3168 = vpop.f32.mrf.mxu0
      %v3169 = vadd.f32 0.0, %v3168
      %v3170 = vpop.f32.mrf.mxu0
      %v3171 = vadd.f32 0.0, %v3170
      %3172 = vmatmul.bf16.gmra.mxu0 %v1377
      %v3173 = vpop.f32.mrf.mxu0
      %v3174 = vadd.f32 0.0, %v3173
      %v3175 = vpop.f32.mrf.mxu0
      %v3176 = vadd.f32 0.0, %v3175
      %3177 = vmatmul.bf16.gmra.mxu0 %v1379
      %v3178 = vpop.f32.mrf.mxu0
      %v3179 = vadd.f32 0.0, %v3178
      %v3180 = vpop.f32.mrf.mxu0
      %v3181 = vadd.f32 0.0, %v3180
      %3182 = vmatmul.bf16.gmra.mxu0 %v1381
      %v3183 = vpop.f32.mrf.mxu0
      %v3184 = vadd.f32 0.0, %v3183
      %v3185 = vpop.f32.mrf.mxu0
      %v3186 = vadd.f32 0.0, %v3185
      %3187 = vmatmul.bf16.gmra.mxu0 %v1383
      %v3188 = vpop.f32.mrf.mxu0
      %v3189 = vadd.f32 0.0, %v3188
      %v3190 = vpop.f32.mrf.mxu0
      %v3191 = vadd.f32 0.0, %v3190
      %3192 = vmatmul.bf16.gmra.mxu0 %v1385
      %v3193 = vpop.f32.mrf.mxu0
      %v3194 = vadd.f32 0.0, %v3193
      %v3195 = vpop.f32.mrf.mxu0
      %v3196 = vadd.f32 0.0, %v3195
      %3197 = vmatmul.bf16.gmra.mxu0 %v1387
      %v3198 = vpop.f32.mrf.mxu0
      %v3199 = vadd.f32 0.0, %v3198
      %v3200 = vpop.f32.mrf.mxu0
      %v3201 = vadd.f32 0.0, %v3200
      %3202 = vmatmul.bf16.gmra.mxu0 %v1389
      %v3203 = vpop.f32.mrf.mxu0
      %v3204 = vadd.f32 0.0, %v3203
      %v3205 = vpop.f32.mrf.mxu0
      %v3206 = vadd.f32 0.0, %v3205
      %3207 = vmatmul.bf16.gmra.mxu0 %v1391
      %v3208 = vpop.f32.mrf.mxu0
      %v3209 = vadd.f32 0.0, %v3208
      %v3210 = vpop.f32.mrf.mxu0
      %v3211 = vadd.f32 0.0, %v3210
      %3212 = vmatmul.bf16.gmra.mxu0 %v1393
      %v3213 = vpop.f32.mrf.mxu0
      %v3214 = vadd.f32 0.0, %v3213
      %v3215 = vpop.f32.mrf.mxu0
      %v3216 = vadd.f32 0.0, %v3215
      %3217 = vmatmul.bf16.gmra.mxu0 %v1395
      %v3218 = vpop.f32.mrf.mxu0
      %v3219 = vadd.f32 0.0, %v3218
      %v3220 = vpop.f32.mrf.mxu0
      %v3221 = vadd.f32 0.0, %v3220
      %3222 = vmatmul.bf16.gmra.mxu0 %v2441
      %v3223 = vpop.f32.mrf.mxu0
      %v3224 = vadd.f32 0.0, %v3223
      %v3225 = vpop.f32.mrf.mxu0
      %v3226 = vadd.f32 0.0, %v3225
      %3227 = vmatmul.bf16.gmra.mxu0 %v1365
      %v3228 = vpop.f32.mrf.mxu0
      %v3229 = vadd.f32 0.0, %v3228
      %v3230 = vpop.f32.mrf.mxu0
      %v3231 = vadd.f32 0.0, %v3230
      %3232 = vdwg.mxu0
      %v3233 = vadd.f32 %v3103, %v3154
      %v3234 = vadd.f32 %v3104, %v3156
      %v3235 = vadd.f32 %v3105, %v3159
      %v3236 = vadd.f32 %v3106, %v3161
      %v3237 = vadd.f32 %v3107, %v3164
      %v3238 = vadd.f32 %v3108, %v3166
      %v3239 = vadd.f32 %v3109, %v3169
      %v3240 = vadd.f32 %v3110, %v3171
      %v3241 = vadd.f32 %v3111, %v3174
      %v3242 = vadd.f32 %v3112, %v3176
      %v3243 = vadd.f32 %v3113, %v3179
      %v3244 = vadd.f32 %v3114, %v3181
      %v3245 = vadd.f32 %v3115, %v3184
      %v3246 = vadd.f32 %v3116, %v3186
      %v3247 = vadd.f32 %v3117, %v3189
      %v3248 = vadd.f32 %v3118, %v3191
      %v3249 = vadd.f32 %v3119, %v3194
      %v3250 = vadd.f32 %v3120, %v3196
      %v3251 = vadd.f32 %v3121, %v3199
      %v3252 = vadd.f32 %v3122, %v3201
      %v3253 = vadd.f32 %v3123, %v3204
      %v3254 = vadd.f32 %v3124, %v3206
      %v3255 = vadd.f32 %v3125, %v3209
      %v3256 = vadd.f32 %v3126, %v3211
      %v3257 = vadd.f32 %v3127, %v3214
      %v3258 = vadd.f32 %v3128, %v3216
      %v3259 = vadd.f32 %v3129, %v3219
      %v3260 = vadd.f32 %v3130, %v3221
      %v3261 = vadd.f32 %v3131, %v3224
      %v3262 = vadd.f32 %v3132, %v3226
      %v3263 = vadd.f32 %v3133, %v3229
      %v3264 = vadd.f32 %v3134, %v3231
      %v3265 = vsel %vm1912, %v1636, 0
      %v3266 = vsel %vm1919, %v1639, 0
      %v3267 = vsel %vm1926, %v1642, 0
      %v3268 = vsel %vm1933, %v1645, 0
      %v3269 = vsel %vm1940, %v1648, 0
      %v3270 = vsel %vm1947, %v1651, 0
      %v3271 = vsel %vm1954, %v1654, 0
      %v3272 = vsel %vm1961, %v1657, 0
      %v3273 = vsel %vm1968, %v1660, 0
      %v3274 = vsel %vm1975, %v1663, 0
      %v3275 = vsel %vm1982, %v1666, 0
      %v3276 = vsel %vm1989, %v1669, 0
      %v3277 = vsel %vm1996, %v1672, 0
      %v3278 = vsel %vm2003, %v2565, 0
      %v3279 = vsel %vm2010, %v2569, 0
      %s3280 = scalar_lea.vmem %s3, 64
      %v3281 = vld [vmem:[%s3280] sm:$0xf]
      %v3282 = vld [vmem:[%s3280 + $0x4] sm:$0xf]
      %v3285 = vunpack.c.l.b16 %v3281
      %v3286 = vunpack.c.l.b16 %v3282
      %v3287 = vpack.c.b16 %v3286, %v3285
      %v3290 = vsel %vm1363, %v3265, 0
      %v3293 = vsel %vm1363, %v3266, 0
      %v3296 = vsel %vm1363, %v3267, 0
      %v3299 = vsel %vm1363, %v3268, 0
      %v3302 = vsel %vm1363, %v3269, 0
      %v3305 = vsel %vm1363, %v3270, 0
      %v3308 = vsel %vm1363, %v3271, 0
      %v3311 = vsel %vm1363, %v3272, 0
      %v3314 = vsel %vm1363, %v3273, 0
      %v3317 = vsel %vm1363, %v3274, 0
      %v3320 = vsel %vm1363, %v3275, 0
      %v3323 = vsel %vm1363, %v3276, 0
      %v3326 = vsel %vm1363, %v3277, 0
      %v3329 = vsel %vm1363, %v3278, 0
      %v3332 = vsel %vm1363, %v3279, 0
      %3334 = vmatpush.bf16.msra.mxu0 0
      %3335 = vmatpush.bf16.msra.mxu0 0
      %3336 = vmatpush.bf16.msra.mxu0 0
      %3337 = vmatpush.bf16.msra.mxu0 0
      %3338 = vmatpush.bf16.msra.mxu0 0
      %3339 = vmatpush.bf16.msra.mxu0 0
      %3340 = vmatpush.bf16.msra.mxu0 0
      %3341 = vmatpush.bf16.msra.mxu0 %v3287
      %3342 = vmatmul.bf16.gmra.mxu0 %v3290
      %v3343 = vpop.f32.mrf.mxu0
      %v3344 = vadd.f32 0.0, %v3343
      %v3345 = vpop.f32.mrf.mxu0
      %v3346 = vadd.f32 0.0, %v3345
      %3347 = vmatmul.bf16.gmra.mxu0 %v3293
      %v3348 = vpop.f32.mrf.mxu0
      %v3349 = vadd.f32 0.0, %v3348
      %v3350 = vpop.f32.mrf.mxu0
      %v3351 = vadd.f32 0.0, %v3350
      %3352 = vmatmul.bf16.gmra.mxu0 %v3296
      %v3353 = vpop.f32.mrf.mxu0
      %v3354 = vadd.f32 0.0, %v3353
      %v3355 = vpop.f32.mrf.mxu0
      %v3356 = vadd.f32 0.0, %v3355
      %3357 = vmatmul.bf16.gmra.mxu0 %v3299
      %v3358 = vpop.f32.mrf.mxu0
      %v3359 = vadd.f32 0.0, %v3358
      %v3360 = vpop.f32.mrf.mxu0
      %v3361 = vadd.f32 0.0, %v3360
      %3362 = vmatmul.bf16.gmra.mxu0 %v3302
      %v3363 = vpop.f32.mrf.mxu0
      %v3364 = vadd.f32 0.0, %v3363
      %v3365 = vpop.f32.mrf.mxu0
      %v3366 = vadd.f32 0.0, %v3365
      %3367 = vmatmul.bf16.gmra.mxu0 %v3305
      %v3368 = vpop.f32.mrf.mxu0
      %v3369 = vadd.f32 0.0, %v3368
      %v3370 = vpop.f32.mrf.mxu0
      %v3371 = vadd.f32 0.0, %v3370
      %3372 = vmatmul.bf16.gmra.mxu0 %v3308
      %v3373 = vpop.f32.mrf.mxu0
      %v3374 = vadd.f32 0.0, %v3373
      %v3375 = vpop.f32.mrf.mxu0
      %v3376 = vadd.f32 0.0, %v3375
      %3377 = vmatmul.bf16.gmra.mxu0 %v3311
      %v3378 = vpop.f32.mrf.mxu0
      %v3379 = vadd.f32 0.0, %v3378
      %v3380 = vpop.f32.mrf.mxu0
      %v3381 = vadd.f32 0.0, %v3380
      %3382 = vmatmul.bf16.gmra.mxu0 %v3314
      %v3383 = vpop.f32.mrf.mxu0
      %v3384 = vadd.f32 0.0, %v3383
      %v3385 = vpop.f32.mrf.mxu0
      %v3386 = vadd.f32 0.0, %v3385
      %3387 = vmatmul.bf16.gmra.mxu0 %v3317
      %v3388 = vpop.f32.mrf.mxu0
      %v3389 = vadd.f32 0.0, %v3388
      %v3390 = vpop.f32.mrf.mxu0
      %v3391 = vadd.f32 0.0, %v3390
      %3392 = vmatmul.bf16.gmra.mxu0 %v3320
      %v3393 = vpop.f32.mrf.mxu0
      %v3394 = vadd.f32 0.0, %v3393
      %v3395 = vpop.f32.mrf.mxu0
      %v3396 = vadd.f32 0.0, %v3395
      %3397 = vmatmul.bf16.gmra.mxu0 %v3323
      %v3398 = vpop.f32.mrf.mxu0
      %v3399 = vadd.f32 0.0, %v3398
      %v3400 = vpop.f32.mrf.mxu0
      %v3401 = vadd.f32 0.0, %v3400
      %3402 = vmatmul.bf16.gmra.mxu0 %v3326
      %v3403 = vpop.f32.mrf.mxu0
      %v3404 = vadd.f32 0.0, %v3403
      %v3405 = vpop.f32.mrf.mxu0
      %v3406 = vadd.f32 0.0, %v3405
      %3407 = vmatmul.bf16.gmra.mxu0 %v3329
      %v3408 = vpop.f32.mrf.mxu0
      %v3409 = vadd.f32 0.0, %v3408
      %v3410 = vpop.f32.mrf.mxu0
      %v3411 = vadd.f32 0.0, %v3410
      %3412 = vmatmul.bf16.gmra.mxu0 %v3332
      %v3413 = vpop.f32.mrf.mxu0
      %v3414 = vadd.f32 0.0, %v3413
      %v3415 = vpop.f32.mrf.mxu0
      %v3416 = vadd.f32 0.0, %v3415
      %3417 = vmatmul.bf16.gmra.mxu0 %v1365
      %v3418 = vpop.f32.mrf.mxu0
      %v3419 = vadd.f32 0.0, %v3418
      %v3420 = vpop.f32.mrf.mxu0
      %v3421 = vadd.f32 0.0, %v3420
      %3422 = vdwg.mxu0
      %v3423 = vadd.f32 %v3233, %v3344
      %v3424 = vadd.f32 %v3234, %v3346
      %v3425 = vadd.f32 %v3235, %v3349
      %v3426 = vadd.f32 %v3236, %v3351
      %v3427 = vadd.f32 %v3237, %v3354
      %v3428 = vadd.f32 %v3238, %v3356
      %v3429 = vadd.f32 %v3239, %v3359
      %v3430 = vadd.f32 %v3240, %v3361
      %v3431 = vadd.f32 %v3241, %v3364
      %v3432 = vadd.f32 %v3242, %v3366
      %v3433 = vadd.f32 %v3243, %v3369
      %v3434 = vadd.f32 %v3244, %v3371
      %v3435 = vadd.f32 %v3245, %v3374
      %v3436 = vadd.f32 %v3246, %v3376
      %v3437 = vadd.f32 %v3247, %v3379
      %v3438 = vadd.f32 %v3248, %v3381
      %v3439 = vadd.f32 %v3249, %v3384
      %v3440 = vadd.f32 %v3250, %v3386
      %v3441 = vadd.f32 %v3251, %v3389
      %v3442 = vadd.f32 %v3252, %v3391
      %v3443 = vadd.f32 %v3253, %v3394
      %v3444 = vadd.f32 %v3254, %v3396
      %v3445 = vadd.f32 %v3255, %v3399
      %v3446 = vadd.f32 %v3256, %v3401
      %v3447 = vadd.f32 %v3257, %v3404
      %v3448 = vadd.f32 %v3258, %v3406
      %v3449 = vadd.f32 %v3259, %v3409
      %v3450 = vadd.f32 %v3260, %v3411
      %v3451 = vadd.f32 %v3261, %v3414
      %v3452 = vadd.f32 %v3262, %v3416
      %v3453 = vadd.f32 %v3263, %v3419
      %v3454 = vadd.f32 %v3264, %v3421
      %vm3455 = vcmask 31744
      %3456 = vst.msk [vmem:[%s197] sm:$0xff] %vm3455, %v3423
      %3457 = vst.msk [vmem:[%s197 + $0x8] sm:$0xff] %vm3455, %v3424
      %3458 = vst.msk [vmem:[%s197 + $0x10] sm:$0xff] %vm3455, %v3425
      %3459 = vst.msk [vmem:[%s197 + $0x18] sm:$0xff] %vm3455, %v3426
      %3460 = vst.msk [vmem:[%s197 + $0x20] sm:$0xff] %vm3455, %v3427
      %3461 = vst.msk [vmem:[%s197 + $0x28] sm:$0xff] %vm3455, %v3428
      %3462 = vst.msk [vmem:[%s197 + $0x30] sm:$0xff] %vm3455, %v3429
      %3463 = vst.msk [vmem:[%s197 + $0x38] sm:$0xff] %vm3455, %v3430
      %3464 = vst.msk [vmem:[%s197 + $0x40] sm:$0xff] %vm3455, %v3431
      %3465 = vst.msk [vmem:[%s197 + $0x48] sm:$0xff] %vm3455, %v3432
      %3466 = vst.msk [vmem:[%s197 + $0x50] sm:$0xff] %vm3455, %v3433
      %3467 = vst.msk [vmem:[%s197 + $0x58] sm:$0xff] %vm3455, %v3434
      %3468 = vst.msk [vmem:[%s197 + $0x60] sm:$0xff] %vm3455, %v3435
      %3469 = vst.msk [vmem:[%s197 + $0x68] sm:$0xff] %vm3455, %v3436
      %3470 = vst.msk [vmem:[%s197 + $0x70] sm:$0xff] %vm3455, %v3437
      %3471 = vst.msk [vmem:[%s197 + $0x78] sm:$0xff] %vm3455, %v3438
      %3472 = vst.msk [vmem:[%s197 + $0x80] sm:$0xff] %vm3455, %v3439
      %3473 = vst.msk [vmem:[%s197 + $0x88] sm:$0xff] %vm3455, %v3440
      %3474 = vst.msk [vmem:[%s197 + $0x90] sm:$0xff] %vm3455, %v3441
      %3475 = vst.msk [vmem:[%s197 + $0x98] sm:$0xff] %vm3455, %v3442
      %3476 = vst.msk [vmem:[%s197 + $0xa0] sm:$0xff] %vm3455, %v3443
      %3477 = vst.msk [vmem:[%s197 + $0xa8] sm:$0xff] %vm3455, %v3444
      %3478 = vst.msk [vmem:[%s197 + $0xb0] sm:$0xff] %vm3455, %v3445
      %3479 = vst.msk [vmem:[%s197 + $0xb8] sm:$0xff] %vm3455, %v3446
      %3480 = vst.msk [vmem:[%s197 + $0xc0] sm:$0xff] %vm3455, %v3447
      %3481 = vst.msk [vmem:[%s197 + $0xc8] sm:$0xff] %vm3455, %v3448
      %3482 = vst.msk [vmem:[%s197 + $0xd0] sm:$0xff] %vm3455, %v3449
      %3483 = vst.msk [vmem:[%s197 + $0xd8] sm:$0xff] %vm3455, %v3450
      %3484 = vst.msk [vmem:[%s197 + $0xe0] sm:$0xff] %vm3455, %v3451
      %3485 = vst.msk [vmem:[%s197 + $0xe8] sm:$0xff] %vm3455, %v3452
      %3486 = vst.msk [vmem:[%s197 + $0xf0] sm:$0xff] %vm3455, %v3453
      %3487 = vst.msk [vmem:[%s197 + $0xf8] sm:$0xff] %vm3455, %v3454
      %p3488 = scmp.lt.s32.totalorder %s15, 1
      %s3489 = scalar_select %p3488, %s15, 1
      %s3490 = smul.addr %s3489, 32
      %s3491 = smul.addr %s3490, 8
      %s3492 = scalar_lea.vmem %s4, %s3491
      // Predicated region
      $region37: #{densenet_bottleneck_forward.3} parent=35 // pred_check
        %p3493 = pneg %p122
      $region38: #{densenet_bottleneck_forward.3} parent=35 // pred_check_branch
        %3495 = sbr.rel (%p3493) target = $region40
      $region39: #{densenet_bottleneck_forward.3} parent=35 // pred_region
        _
      $region40: #{densenet_bottleneck_forward.3} parent=35 // pred_fallthru
        _
    $region36: #{densenet_bottleneck_forward.3} parent=5 // pred_fallthru
      _
    %p3496 = scmp.le.s32.totalorder 2, %s10
    // Predicated region
    $region41: #{densenet_bottleneck_forward.3} parent=5 // pred_check
      %p3497 = pneg %p3496
    $region42: #{densenet_bottleneck_forward.3} parent=5 // pred_check_branch
      %3499 = sbr.rel (%p3497) target = $region44
    $region43: #{densenet_bottleneck_forward.3} parent=5 // pred_region
      %s3500 = ssub.s32 %s10, 2
      // Predicated region
      $region45: #{densenet_bottleneck_forward.3} parent=43 // pred_check
        %p3501 = pneg %p128
      $region46: #{densenet_bottleneck_forward.3} parent=43 // pred_check_branch
        %3503 = sbr.rel (%p3501) target = $region48
      $region47: #{densenet_bottleneck_forward.3} parent=43 // pred_region
        %p3504 = scmp.lt.s32.totalorder %s16, 1
        %s3505 = scalar_select %p3504, %s16, 1
        %s3506 = smul.addr %s3505, 32
        %s3507 = smul.addr %s3506, 8
        %s3508 = scalar_lea.vmem %s4, %s3507
      $region48: #{densenet_bottleneck_forward.3} parent=43 // pred_fallthru
        _
    $region44: #{densenet_bottleneck_forward.3} parent=5 // pred_fallthru
      _
  $region6: #{densenet_bottleneck_forward.3} parent=0 // loop_footer
    %s14 = sadd.s32 1, %s10
  $region7: #{densenet_bottleneck_forward.3} parent=0 // loop_footer_branch
    %9 = sbr.rel target = $region3
  $region8: #{densenet_bottleneck_forward.3} parent=0 // loop_exit
    _

</llo_original>
